<compile_context>
chip_gen: v6e
topology: v6e:2x2x1
jax: 0.10.0
libtpu: 0.0.40
codegen_flags: <defaults>
</compile_context>

<pallas_src>
import jax
import jax.numpy as jnp
from jax.experimental import pallas as pl
from jax.experimental.pallas import tpu as pltpu


# ---------------------------------------------------------------------------
# Pallas kernel: one grid step == one branch (query or supp), all rows at once
# ---------------------------------------------------------------------------
def _fused_kernel(x_ref, w1_ref, b1_ref, wc_ref, cb_ref, w2_ref, b2_ref, o_ref):
    # x_ref : (1, N, L*D*F)          bf16, lane-dense
    # w1_ref: (1, L*D*F,  L*D*Fd)    bf16  block-diagonal linear_*1
    # wc_ref: (1, L*D*Fd, C*D*Fd)    bf16  unrolled (im2col/Toeplitz) 3x3 conv
    # w2_ref: (1, C*D*Fd, C*D*F)     bf16  block-diagonal linear_*2
    # b*_ref: (1, 1, ...)            f32   biases
    # o_ref : (1, N, C*D*F)          f32, lane-dense
    x = x_ref[0]
    h1 = jnp.dot(x, w1_ref[0], preferred_element_type=jnp.float32) + b1_ref[0]
    h1 = h1.astype(x.dtype)
    cv = jnp.dot(h1, wc_ref[0], preferred_element_type=jnp.float32) + cb_ref[0]
    cv = cv.astype(x.dtype)
    y = jnp.dot(cv, w2_ref[0], preferred_element_type=jnp.float32) + b2_ref[0]
    o_ref[0] = y.astype(o_ref.dtype)


def _fused_branches(x_both, w1f, b1f, wcf, cbf, w2f, b2f):
    """x_both: (2, N, L*D*F) -> (2, N, C*D*F). Grid over the two branches."""
    nb, n_rows, in_f = x_both.shape
    k1 = w1f.shape[2]
    k2 = wcf.shape[2]
    out_f = w2f.shape[2]
    return pl.pallas_call(
        _fused_kernel,
        out_shape=jax.ShapeDtypeStruct((nb, n_rows, out_f), jnp.float32),
        grid_spec=pltpu.PrefetchScalarGridSpec(
            num_scalar_prefetch=0,
            grid=(nb,),
            in_specs=[
                pl.BlockSpec((1, n_rows, in_f), lambda b: (b, 0, 0)),
                pl.BlockSpec((1, in_f, k1), lambda b: (b, 0, 0)),
                pl.BlockSpec((1, 1, k1), lambda b: (b, 0, 0)),
                pl.BlockSpec((1, k1, k2), lambda b: (b, 0, 0)),
                pl.BlockSpec((1, 1, k2), lambda b: (b, 0, 0)),
                pl.BlockSpec((1, k2, out_f), lambda b: (b, 0, 0)),
                pl.BlockSpec((1, 1, out_f), lambda b: (b, 0, 0)),
            ],
            out_specs=pl.BlockSpec((1, n_rows, out_f), lambda b: (b, 0, 0)),
        ),
        compiler_params=pltpu.CompilerParams(dimension_semantics=("parallel",)),
    )(x_both, w1f, b1f, wcf, cbf, w2f, b2f)


# ---------------------------------------------------------------------------
# Host-side weight unrolling (pure weight algebra, done once per call)
# ---------------------------------------------------------------------------
def _unrolled_branch_operands(p, L, D):
    """Unroll (linear1, 3x3 conv, linear2) into three dense matmul operands."""
    w1, b1 = p["w1"], p["b1"]          # (F, Fd), (Fd,)
    wc, cb = p["cw4"], p["cb"]         # (C, L, 3, 3), (C,)
    w2, b2 = p["w2"], p["b2"]          # (Fd, F), (F,)
    F, Fd = w1.shape
    C = wc.shape[0]

    # linear_*1 applied independently per (l, d): block-diagonal (L*D*F, L*D*Fd)
    w1f = jnp.kron(jnp.eye(L * D, dtype=w1.dtype), w1)
    b1f = jnp.tile(b1, L * D)

    # 3x3 Conv2d over the (D, Fd) plane, channels L -> C, stride 1, padding 1:
    # unrolled im2col / Toeplitz matrix of shape (L*D*Fd, C*D*Fd).
    r = jnp.arange(L * D * Fd)
    rl, rd, rk = r // (D * Fd), (r // Fd) % D, r % Fd      # input  (l, d, k)
    c = jnp.arange(C * D * Fd)
    cc, cd, ck = c // (D * Fd), (c // Fd) % D, c % Fd      # output (co, d', k')
    kh = 1 + rd[:, None] - cd[None, :]
    kw = 1 + rk[:, None] - ck[None, :]
    valid = (kh >= 0) & (kh < 3) & (kw >= 0) & (kw < 3)
    gathered = wc[cc[None, :], rl[:, None], jnp.clip(kh, 0, 2), jnp.clip(kw, 0, 2)]
    wcf = jnp.where(valid, gathered, 0.0)
    cbf = jnp.repeat(cb, D * Fd)

    # linear_*2 applied independently per (co, d): block-diagonal (C*D*Fd, C*D*F)
    w2f = jnp.kron(jnp.eye(C * D, dtype=w2.dtype), w2)
    b2f = jnp.tile(b2, C * D)
    return w1f, b1f, wcf, cbf, w2f, b2f


# ---------------------------------------------------------------------------
# Full Conv4d forward (glue reshapes in plain JAX, hot path in Pallas)
# ---------------------------------------------------------------------------
def conv4d_forward(x, params):
    B, L, D, Hq, Wq, Hs, Ws = x.shape
    F = Hq * Wq
    assert Hs * Ws == F, "module shares a single feat_size for both branches"
    C = params["q"]["cw4"].shape[0]

    # query rows (B Hs Ws), supp rows (B Hq Wq); lanes = (L, D, feat) flattened.
    xq = jnp.transpose(x, (0, 5, 6, 1, 2, 3, 4)).reshape(B * Hs * Ws, L * D * F)
    xs = jnp.transpose(x, (0, 3, 4, 1, 2, 5, 6)).reshape(B * Hq * Wq, L * D * F)
    x_both = jnp.stack([xq, xs], axis=0).astype(jnp.bfloat16)      # (2, N, L*D*F)

    op_q = _unrolled_branch_operands(params["q"], L, D)
    op_s = _unrolled_branch_operands(params["s"], L, D)

    def _stack(i, dtype, add_row=False):
        a = jnp.stack([op_q[i], op_s[i]], axis=0).astype(dtype)
        return a[:, None, :] if add_row else a

    w1f = _stack(0, jnp.bfloat16)
    b1f = _stack(1, jnp.float32, add_row=True)
    wcf = _stack(2, jnp.bfloat16)
    cbf = _stack(3, jnp.float32, add_row=True)
    w2f = _stack(4, jnp.bfloat16)
    b2f = _stack(5, jnp.float32, add_row=True)

    y = _fused_branches(x_both, w1f, b1f, wcf, cbf, w2f, b2f)      # (2, N, C*D*F)

    yq = y[0].reshape(B, Hs, Ws, C, D, Hq, Wq).transpose(0, 3, 4, 5, 6, 1, 2)
    ys = y[1].reshape(B, Hq, Wq, C, D, Hs, Ws).transpose(0, 3, 4, 1, 2, 5, 6)
    return yq + ys


# ---------------------------------------------------------------------------
# Deterministic parameter init (synthetic; no checkpoint)
# ---------------------------------------------------------------------------
def init_params(key, L, C_out, feat_size, feat_dim):
    ks = jax.random.split(key, 12)

    def nrm(k, shape, scale=0.1):
        w = (scale * jax.random.normal(k, shape)).astype(jnp.float32)
        # round to bf16-representable values so the bf16 kernel and the f32
        # reference consume numerically identical weights
        return w.astype(jnp.bfloat16).astype(jnp.float32)

    params = {}
    for i, branch in enumerate(("q", "s")):
        o = 6 * i
        params[branch] = dict(
            w1=nrm(ks[o + 0], (feat_size, feat_dim)),   # linear_*1 weight^T
            b1=nrm(ks[o + 1], (feat_dim,)),
            cw4=nrm(ks[o + 2], (C_out, L, 3, 3)),       # Conv2d weight (OIHW)
            cb=nrm(ks[o + 3], (C_out,)),
            w2=nrm(ks[o + 4], (feat_dim, feat_size)),   # linear_*2 weight^T
            b2=nrm(ks[o + 5], (feat_size,)),
        )
    return params


# ---------------------------------------------------------------------------
# Pure-JAX reference (for correctness check only)
# ---------------------------------------------------------------------------
def _ref_branch(xr, p):
    h1 = jnp.einsum("nldf,fk->nldk", xr, p["w1"]) + p["b1"]
    out = jax.lax.conv_general_dilated(
        h1, p["cw4"], window_strides=(1, 1), padding=((1, 1), (1, 1)),
        dimension_numbers=("NCHW", "OIHW", "NCHW"),
    ) + p["cb"][None, :, None, None]
    return jnp.einsum("ncdk,kf->ncdf", out, p["w2"]) + p["b2"]


def conv4d_reference(x, params):
    B, L, D, Hq, Wq, Hs, Ws = x.shape
    xq = jnp.transpose(x, (0, 5, 6, 1, 2, 3, 4)).reshape(B * Hs * Ws, L, D, Hq * Wq)
    yq = _ref_branch(xq, params["q"])
    C = yq.shape[1]
    yq = yq.reshape(B, Hs, Ws, C, D, Hq, Wq).transpose(0, 3, 4, 5, 6, 1, 2)
    xs = jnp.transpose(x, (0, 3, 4, 1, 2, 5, 6)).reshape(B * Hq * Wq, L, D, Hs * Ws)
    ys = _ref_branch(xs, params["s"])
    ys = ys.reshape(B, Hq, Wq, C, D, Hs, Ws).transpose(0, 3, 4, 1, 2, 5, 6)
    return yq + ys


# ---------------------------------------------------------------------------
if __name__ == "__main__":
    # Module config: in_channels=L=4, out_channels=4, kernel_size=(3,3,3,3),
    # stride=(1,1,1,1), padding=(1,1,1,1), feat_size=H_q*W_q=H_s*W_s=16,
    # feat_dim=32, bias=True, no transposed convs / pooling.
    B, L, D = 2, 4, 2
    Hq = Wq = Hs = Ws = 4
    C_out = 4
    feat_size = Hq * Wq   # 16
    feat_dim = 32

    key = jax.random.PRNGKey(0)
    kx, kp = jax.random.split(key)
    x = jax.random.normal(kx, (B, L, D, Hq, Wq, Hs, Ws), dtype=jnp.float32)
    x = x.astype(jnp.bfloat16).astype(jnp.float32)   # bf16-representable inputs
    params = init_params(kp, L, C_out, feat_size, feat_dim)

    out = jax.block_until_ready(jax.jit(conv4d_forward)(x, params))
    ref = jax.block_until_ready(conv4d_reference(x, params))

    assert out.shape == (B, C_out, D, Hq, Wq, Hs, Ws), out.shape
    if not jnp.allclose(out, ref, rtol=2e-2, atol=2e-2):
        max_err = float(jnp.max(jnp.abs(out - ref)))
        raise AssertionError(f"Pallas kernel mismatch vs reference, max abs err={max_err}")
    print("KERNEL_OK")
</pallas_src>

<mosaic_0001>
module attributes {stable_mosaic.version = 11 : i64} {
  func.func @_fused_kernel(%arg0: i32, %arg1: memref<1x32x128xbf16, #tpu.memory_space<vmem>>, %arg2: memref<1x128x256xbf16, #tpu.memory_space<vmem>>, %arg3: memref<1x1x256xf32, #tpu.memory_space<vmem>>, %arg4: memref<1x256x256xbf16, #tpu.memory_space<vmem>>, %arg5: memref<1x1x256xf32, #tpu.memory_space<vmem>>, %arg6: memref<1x256x128xbf16, #tpu.memory_space<vmem>>, %arg7: memref<1x1x128xf32, #tpu.memory_space<vmem>>, %arg8: memref<1x32x128xf32, #tpu.memory_space<vmem>>) attributes {dimension_semantics = [#tpu.dimension_semantics<parallel>], iteration_bounds = array<i64: 2>, scalar_prefetch = 0 : i64, scratch_operands = 0 : i64, tpu.core_type = #tpu.core_type<tc>, window_params = [{transform_indices = @transform_0, window_bounds = array<i64: 1, 32, 128>}, {transform_indices = @transform_1, window_bounds = array<i64: 1, 128, 256>}, {transform_indices = @transform_2, window_bounds = array<i64: 1, 1, 256>}, {transform_indices = @transform_3, window_bounds = array<i64: 1, 256, 256>}, {transform_indices = @transform_4, window_bounds = array<i64: 1, 1, 256>}, {transform_indices = @transform_5, window_bounds = array<i64: 1, 256, 128>}, {transform_indices = @transform_6, window_bounds = array<i64: 1, 1, 128>}, {transform_indices = @transform_7, window_bounds = array<i64: 1, 32, 128>}]} {
    %c0 = arith.constant 0 : index
    %c0_0 = arith.constant 0 : index
    %c0_1 = arith.constant 0 : index
    %0 = vector.load %arg1[%c0, %c0_0, %c0_1] : memref<1x32x128xbf16, #tpu.memory_space<vmem>>, vector<1x32x128xbf16>
    %1 = vector.shape_cast %0 : vector<1x32x128xbf16> to vector<32x128xbf16>
    %c0_2 = arith.constant 0 : index
    %c0_3 = arith.constant 0 : index
    %c0_4 = arith.constant 0 : index
    %2 = vector.load %arg2[%c0_2, %c0_3, %c0_4] : memref<1x128x256xbf16, #tpu.memory_space<vmem>>, vector<1x128x256xbf16>
    %3 = vector.shape_cast %2 : vector<1x128x256xbf16> to vector<128x256xbf16>
    %cst = arith.constant dense<0.000000e+00> : vector<32x256xf32>
    %4 = tpu.matmul %1, %3, %cst {dimension_numbers = #tpu.dot_dimension_numbers<[1], [0], [0], [1], [0, 0, 1, 1], [], []>} : vector<32x128xbf16>, vector<128x256xbf16>, vector<32x256xf32> -> vector<32x256xf32>
    %c0_5 = arith.constant 0 : index
    %c0_6 = arith.constant 0 : index
    %c0_7 = arith.constant 0 : index
    %5 = vector.load %arg3[%c0_5, %c0_6, %c0_7] : memref<1x1x256xf32, #tpu.memory_space<vmem>>, vector<1x1x256xf32>
    %6 = vector.shape_cast %5 : vector<1x1x256xf32> to vector<1x256xf32>
    %7 = vector.broadcast %6 : vector<1x256xf32> to vector<32x256xf32>
    %8 = arith.addf %4, %7 : vector<32x256xf32>
    %9 = arith.truncf %8 : vector<32x256xf32> to vector<32x256xbf16>
    %c0_8 = arith.constant 0 : index
    %c0_9 = arith.constant 0 : index
    %c0_10 = arith.constant 0 : index
    %10 = vector.load %arg4[%c0_8, %c0_9, %c0_10] : memref<1x256x256xbf16, #tpu.memory_space<vmem>>, vector<1x256x256xbf16>
    %11 = vector.shape_cast %10 : vector<1x256x256xbf16> to vector<256x256xbf16>
    %cst_11 = arith.constant dense<0.000000e+00> : vector<32x256xf32>
    %12 = tpu.matmul %9, %11, %cst_11 {dimension_numbers = #tpu.dot_dimension_numbers<[1], [0], [0], [1], [0, 0, 1, 1], [], []>} : vector<32x256xbf16>, vector<256x256xbf16>, vector<32x256xf32> -> vector<32x256xf32>
    %c0_12 = arith.constant 0 : index
    %c0_13 = arith.constant 0 : index
    %c0_14 = arith.constant 0 : index
    %13 = vector.load %arg5[%c0_12, %c0_13, %c0_14] : memref<1x1x256xf32, #tpu.memory_space<vmem>>, vector<1x1x256xf32>
    %14 = vector.shape_cast %13 : vector<1x1x256xf32> to vector<1x256xf32>
    %15 = vector.broadcast %14 : vector<1x256xf32> to vector<32x256xf32>
    %16 = arith.addf %12, %15 : vector<32x256xf32>
    %17 = arith.truncf %16 : vector<32x256xf32> to vector<32x256xbf16>
    %c0_15 = arith.constant 0 : index
    %c0_16 = arith.constant 0 : index
    %c0_17 = arith.constant 0 : index
    %18 = vector.load %arg6[%c0_15, %c0_16, %c0_17] : memref<1x256x128xbf16, #tpu.memory_space<vmem>>, vector<1x256x128xbf16>
    %19 = vector.shape_cast %18 : vector<1x256x128xbf16> to vector<256x128xbf16>
    %cst_18 = arith.constant dense<0.000000e+00> : vector<32x128xf32>
    %20 = tpu.matmul %17, %19, %cst_18 {dimension_numbers = #tpu.dot_dimension_numbers<[1], [0], [0], [1], [0, 0, 1, 1], [], []>} : vector<32x256xbf16>, vector<256x128xbf16>, vector<32x128xf32> -> vector<32x128xf32>
    %c0_19 = arith.constant 0 : index
    %c0_20 = arith.constant 0 : index
    %c0_21 = arith.constant 0 : index
    %21 = vector.load %arg7[%c0_19, %c0_20, %c0_21] : memref<1x1x128xf32, #tpu.memory_space<vmem>>, vector<1x1x128xf32>
    %22 = vector.shape_cast %21 : vector<1x1x128xf32> to vector<1x128xf32>
    %23 = vector.broadcast %22 : vector<1x128xf32> to vector<32x128xf32>
    %24 = arith.addf %20, %23 : vector<32x128xf32>
    %c0_22 = arith.constant 0 : index
    %c0_23 = arith.constant 0 : index
    %c0_24 = arith.constant 0 : index
    %25 = vector.load %arg8[%c0_22, %c0_23, %c0_24] : memref<1x32x128xf32, #tpu.memory_space<vmem>>, vector<1x32x128xf32>
    %26 = vector.shape_cast %25 : vector<1x32x128xf32> to vector<32x128xf32>
    %27 = vector.shape_cast %24 : vector<32x128xf32> to vector<1x32x128xf32>
    tpu.vector_store %arg8[%c0_22, %c0_23, %c0_24], %27 {strides = array<i32>} : memref<1x32x128xf32, #tpu.memory_space<vmem>>, vector<1x32x128xf32>,
    return
  }
  func.func @transform_0(%arg0: i32) -> (i32, i32, i32) {
    %c0_i32 = arith.constant 0 : i32
    %c0_i32_0 = arith.constant 0 : i32
    %c0_i32_1 = arith.constant 0 : i32
    return %arg0, %c0_i32, %c0_i32_0 : i32, i32, i32
  }
  func.func @transform_1(%arg0: i32) -> (i32, i32, i32) {
    %c0_i32 = arith.constant 0 : i32
    %c0_i32_0 = arith.constant 0 : i32
    %c0_i32_1 = arith.constant 0 : i32
    return %arg0, %c0_i32, %c0_i32_0 : i32, i32, i32
  }
  func.func @transform_2(%arg0: i32) -> (i32, i32, i32) {
    %c0_i32 = arith.constant 0 : i32
    %c0_i32_0 = arith.constant 0 : i32
    %c0_i32_1 = arith.constant 0 : i32
    return %arg0, %c0_i32, %c0_i32_0 : i32, i32, i32
  }
  func.func @transform_3(%arg0: i32) -> (i32, i32, i32) {
    %c0_i32 = arith.constant 0 : i32
    %c0_i32_0 = arith.constant 0 : i32
    %c0_i32_1 = arith.constant 0 : i32
    return %arg0, %c0_i32, %c0_i32_0 : i32, i32, i32
  }
  func.func @transform_4(%arg0: i32) -> (i32, i32, i32) {
    %c0_i32 = arith.constant 0 : i32
    %c0_i32_0 = arith.constant 0 : i32
    %c0_i32_1 = arith.constant 0 : i32
    return %arg0, %c0_i32, %c0_i32_0 : i32, i32, i32
  }
  func.func @transform_5(%arg0: i32) -> (i32, i32, i32) {
    %c0_i32 = arith.constant 0 : i32
    %c0_i32_0 = arith.constant 0 : i32
    %c0_i32_1 = arith.constant 0 : i32
    return %arg0, %c0_i32, %c0_i32_0 : i32, i32, i32
  }
  func.func @transform_6(%arg0: i32) -> (i32, i32, i32) {
    %c0_i32 = arith.constant 0 : i32
    %c0_i32_0 = arith.constant 0 : i32
    %c0_i32_1 = arith.constant 0 : i32
    return %arg0, %c0_i32, %c0_i32_0 : i32, i32, i32
  }
  func.func @transform_7(%arg0: i32) -> (i32, i32, i32) {
    %c0_i32 = arith.constant 0 : i32
    %c0_i32_0 = arith.constant 0 : i32
    %c0_i32_1 = arith.constant 0 : i32
    return %arg0, %c0_i32, %c0_i32_0 : i32, i32, i32
  }
}

</mosaic_0001>

<llo_original>
// kernel: tile.31
$region0: #{tile.31}
  #allocation0 [shape = 's32[1]{0}', space=sflag, size = 0x4, scoped, tag = 'scoped memory for tile.31']
  %s0 = inlined_call_operand.vmem [shape: f32[32], index: 0, kind: input, shape index: {}]
  %s1 = inlined_call_operand.vmem [shape: f32[8,32], index: 1, kind: output, shape index: {}]
  // Predicated region
  $region2: #{tile.31} parent=0 // pred_check
    _
  $region3: #{tile.31} parent=0 // pred_check_branch
    %3 = sbr.rel (0) target = $region5
  $region4: #{tile.31} parent=0 // pred_region
    _
  $region5: #{tile.31} parent=0 // pred_fallthru
    _
  %v4 = vld [vmem:[%s0] ss:$0 sm:$0xff]
  %5 = vst [vmem:[%s1] sm:$0xff] %v4

// kernel: tile.37
$region0: #{tile.37}
  %s0 = inlined_call_operand.vmem [shape: f32[8,32], index: 0, kind: input, shape index: {}]
  %s1 = inlined_call_operand.vmem [shape: f32[1,256], index: 1, kind: output, shape index: {}]
  $region1: #{tile.37} parent=0
    #allocation0 [shape = 'u8[8192]{0}', space=vmem, size = 0x2000, scoped, tag = 'scoped mem for output reshape']
    %s2 = smov 3
    %v3 = vld [vmem:[%s0] ss:$4 sm:%s2]
    %vm4 = vcmask 261120
    %5 = vst.msk [vmem:[#allocation0] ss:$8 sm:$0x3] %vm4, %v3
    %s6 = scalar_lea.vmem %s0, 3
    %s7 = smov 3
    %v8 = vld [vmem:[%s6] ss:$4 sm:%s7]
    %9 = vrot.lane.b32.xlu0 %v8, 96
    %v10 = vpop.permute.xlu0 %9
    %vm11 = vcmask 1048320
    %12 = vst.msk [vmem:[#allocation0] ss:$8 sm:$0x3] %vm11, %v10
    %s13 = scalar_lea.vmem %s0, 2
    %s14 = smov 3
    %v15 = vld [vmem:[%s13] ss:$4 sm:%s14]
    %16 = vrot.lane.b32.xlu0 %v15, 64
    %v17 = vpop.permute.xlu0 %16
    %vm18 = vcmask 785920
    %19 = vst.msk [vmem:[#allocation0] ss:$8 sm:$0x3] %vm18, %v17
    %s20 = scalar_lea.vmem %s0, 1
    %s21 = smov 3
    %v22 = vld [vmem:[%s20] ss:$4 sm:%s21]
    %23 = vrot.lane.b32.xlu0 %v22, 32
    %v24 = vpop.permute.xlu0 %23
    %vm25 = vcmask 523520
    %26 = vst.msk [vmem:[#allocation0] ss:$8 sm:$0x3] %vm25, %v24
    %s28 = sshll.u32 1, 1
    %s29 = ssub.s32 %s28, 1
    %v31 = vld [vmem:[#allocation0] sm:%s29]
    %s32 = sshll.u32 1, 1
    %s33 = ssub.s32 %s32, 1
    %34 = vst [vmem:[%s1] sm:%s33] %v31
    %s35 = scalar_lea.vmem [#allocation0], 8
    %v36 = vld [vmem:[%s35] sm:%s29]
    %s37 = sshll.u32 1, 1
    %s38 = ssub.s32 %s37, 1
    %s39 = scalar_lea.vmem %s1, 1
    %40 = vst [vmem:[%s39] sm:%s38] %v36

// kernel: tile.35
$region0: #{tile.35}
  #allocation0 [shape = 's32[1]{0}', space=sflag, size = 0x4, scoped, tag = 'scoped memory for tile.35']
  %s0 = inlined_call_operand.vmem [shape: f32[16], index: 0, kind: input, shape index: {}]
  %s1 = inlined_call_operand.vmem [shape: f32[8,16], index: 1, kind: output, shape index: {}]
  // Predicated region
  $region2: #{tile.35} parent=0 // pred_check
    _
  $region3: #{tile.35} parent=0 // pred_check_branch
    %3 = sbr.rel (0) target = $region5
  $region4: #{tile.35} parent=0 // pred_region
    _
  $region5: #{tile.35} parent=0 // pred_fallthru
    _
  %v4 = vld [vmem:[%s0] ss:$0 sm:$0xff]
  %5 = vst [vmem:[%s1] sm:$0xff] %v4

// kernel: tile.39
$region0: #{tile.39}
  %s0 = inlined_call_operand.vmem [shape: f32[8,16], index: 0, kind: input, shape index: {}]
  %s1 = inlined_call_operand.vmem [shape: f32[1,128], index: 1, kind: output, shape index: {}]
  $region1: #{tile.39} parent=0
    #allocation0 [shape = 'u8[4096]{0}', space=vmem, size = 0x1000, scoped, tag = 'scoped mem for output reshape']
    %v2 = vld [vmem:[%s0] sm:$0x1]
    %vm3 = vcmask 130048
    %4 = vst.msk [vmem:[#allocation0] sm:$0x1] %vm3, %v2
    %s5 = scalar_lea.vmem %s0, 7
    %v6 = vld [vmem:[%s5] sm:$0x1]
    %7 = vrot.lane.b32.xlu0 %v6, 112
    %v8 = vpop.permute.xlu0 %7
    %vm9 = vcmask 1048448
    %10 = vst.msk [vmem:[#allocation0] sm:$0x1] %vm9, %v8
    %s11 = scalar_lea.vmem %s0, 6
    %v12 = vld [vmem:[%s11] sm:$0x1]
    %13 = vrot.lane.b32.xlu0 %v12, 96
    %v14 = vpop.permute.xlu0 %13
    %vm15 = vcmask 917248
    %16 = vst.msk [vmem:[#allocation0] sm:$0x1] %vm15, %v14
    %s17 = scalar_lea.vmem %s0, 5
    %v18 = vld [vmem:[%s17] sm:$0x1]
    %19 = vrot.lane.b32.xlu0 %v18, 80
    %v20 = vpop.permute.xlu0 %19
    %vm21 = vcmask 786048
    %22 = vst.msk [vmem:[#allocation0] sm:$0x1] %vm21, %v20
    %s23 = scalar_lea.vmem %s0, 4
    %v24 = vld [vmem:[%s23] sm:$0x1]
    %25 = vrot.lane.b32.xlu0 %v24, 64
    %v26 = vpop.permute.xlu0 %25
    %vm27 = vcmask 654848
    %28 = vst.msk [vmem:[#allocation0] sm:$0x1] %vm27, %v26
    %s29 = scalar_lea.vmem %s0, 3
    %v30 = vld [vmem:[%s29] sm:$0x1]
    %31 = vrot.lane.b32.xlu0 %v30, 48
    %v32 = vpop.permute.xlu0 %31
    %vm33 = vcmask 523648
    %34 = vst.msk [vmem:[#allocation0] sm:$0x1] %vm33, %v32
    %s35 = scalar_lea.vmem %s0, 2
    %v36 = vld [vmem:[%s35] sm:$0x1]
    %37 = vrot.lane.b32.xlu0 %v36, 32
    %v38 = vpop.permute.xlu0 %37
    %vm39 = vcmask 392448
    %40 = vst.msk [vmem:[#allocation0] sm:$0x1] %vm39, %v38
    %s41 = scalar_lea.vmem %s0, 1
    %v42 = vld [vmem:[%s41] sm:$0x1]
    %43 = vrot.lane.b32.xlu0 %v42, 16
    %v44 = vpop.permute.xlu0 %43
    %vm45 = vcmask 261248
    %46 = vst.msk [vmem:[#allocation0] sm:$0x1] %vm45, %v44
    %s48 = sshll.u32 1, 1
    %s49 = ssub.s32 %s48, 1
    %v51 = vld [vmem:[#allocation0] sm:%s49]
    %s52 = sshll.u32 1, 1
    %s53 = ssub.s32 %s52, 1
    %54 = vst [vmem:[%s1] sm:%s53] %v51

// kernel: squeeze.2
$region0: #{squeeze.2}
  %s0 = inlined_call_operand.vmem [shape: f32[1,32,128], index: 0, kind: input, shape index: {}]
  %s1 = inlined_call_operand.vmem [shape: f32[2,4,4,4,2,4,4], index: 1, kind: output, shape index: {}]
  $region1: #{squeeze.2} parent=0
    #allocation0 [shape = 'u8[1048576]{0}', space=vmem, size = 0x100000, scoped, tag = 'scoped mem for output reshape']
    %v2 = vld [vmem:[%s0] sm:$0xff]
    %vm3 = vcmask 31744
    %4 = vst.msk [vmem:[#allocation0] sm:$0x1] %vm3, %v2
    %s5 = scalar_lea.vmem [#allocation0], 63
    %6 = vst.msk [vmem:[%s5] sm:$0x2] %vm3, %v2
    %s7 = scalar_lea.vmem [#allocation0], 126
    %8 = vst.msk [vmem:[%s7] sm:$0x4] %vm3, %v2
    %s9 = scalar_lea.vmem [#allocation0], 189
    %10 = vst.msk [vmem:[%s9] sm:$0x8] %vm3, %v2
    %s11 = scalar_lea.vmem [#allocation0], 252
    %12 = vst.msk [vmem:[%s11] sm:$0x10] %vm3, %v2
    %s13 = scalar_lea.vmem [#allocation0], 315
    %14 = vst.msk [vmem:[%s13] sm:$0x20] %vm3, %v2
    %s15 = scalar_lea.vmem [#allocation0], 378
    %16 = vst.msk [vmem:[%s15] sm:$0x40] %vm3, %v2
    %s17 = scalar_lea.vmem [#allocation0], 441
    %18 = vst.msk [vmem:[%s17] sm:$0x80] %vm3, %v2
    %s19 = scalar_lea.vmem %s0, 8
    %v20 = vld [vmem:[%s19] sm:$0xff]
    %vm21 = vcmask 31744
    %s22 = scalar_lea.vmem [#allocation0], 512
    %23 = vst.msk [vmem:[%s22] sm:$0x1] %vm21, %v20
    %s24 = scalar_lea.vmem [#allocation0], 575
    %25 = vst.msk [vmem:[%s24] sm:$0x2] %vm21, %v20
    %s26 = scalar_lea.vmem [#allocation0], 638
    %27 = vst.msk [vmem:[%s26] sm:$0x4] %vm21, %v20
    %s28 = scalar_lea.vmem [#allocation0], 701
    %29 = vst.msk [vmem:[%s28] sm:$0x8] %vm21, %v20
    %s30 = scalar_lea.vmem [#allocation0], 764
    %31 = vst.msk [vmem:[%s30] sm:$0x10] %vm21, %v20
    %s32 = scalar_lea.vmem [#allocation0], 827
    %33 = vst.msk [vmem:[%s32] sm:$0x20] %vm21, %v20
    %s34 = scalar_lea.vmem [#allocation0], 890
    %35 = vst.msk [vmem:[%s34] sm:$0x40] %vm21, %v20
    %s36 = scalar_lea.vmem [#allocation0], 953
    %37 = vst.msk [vmem:[%s36] sm:$0x80] %vm21, %v20
    %s38 = scalar_lea.vmem %s0, 16
    %v39 = vld [vmem:[%s38] sm:$0xff]
    %vm40 = vcmask 31744
    %s41 = scalar_lea.vmem [#allocation0], 1024
    %42 = vst.msk [vmem:[%s41] sm:$0x1] %vm40, %v39
    %s43 = scalar_lea.vmem [#allocation0], 1087
    %44 = vst.msk [vmem:[%s43] sm:$0x2] %vm40, %v39
    %s45 = scalar_lea.vmem [#allocation0], 1150
    %46 = vst.msk [vmem:[%s45] sm:$0x4] %vm40, %v39
    %s47 = scalar_lea.vmem [#allocation0], 1213
    %48 = vst.msk [vmem:[%s47] sm:$0x8] %vm40, %v39
    %s49 = scalar_lea.vmem [#allocation0], 1276
    %50 = vst.msk [vmem:[%s49] sm:$0x10] %vm40, %v39
    %s51 = scalar_lea.vmem [#allocation0], 1339
    %52 = vst.msk [vmem:[%s51] sm:$0x20] %vm40, %v39
    %s53 = scalar_lea.vmem [#allocation0], 1402
    %54 = vst.msk [vmem:[%s53] sm:$0x40] %vm40, %v39
    %s55 = scalar_lea.vmem [#allocation0], 1465
    %56 = vst.msk [vmem:[%s55] sm:$0x80] %vm40, %v39
    %s57 = scalar_lea.vmem %s0, 24
    %v58 = vld [vmem:[%s57] sm:$0xff]
    %vm59 = vcmask 31744
    %s60 = scalar_lea.vmem [#allocation0], 1536
    %61 = vst.msk [vmem:[%s60] sm:$0x1] %vm59, %v58
    %s62 = scalar_lea.vmem [#allocation0], 1599
    %63 = vst.msk [vmem:[%s62] sm:$0x2] %vm59, %v58
    %s64 = scalar_lea.vmem [#allocation0], 1662
    %65 = vst.msk [vmem:[%s64] sm:$0x4] %vm59, %v58
    %s66 = scalar_lea.vmem [#allocation0], 1725
    %67 = vst.msk [vmem:[%s66] sm:$0x8] %vm59, %v58
    %s68 = scalar_lea.vmem [#allocation0], 1788
    %69 = vst.msk [vmem:[%s68] sm:$0x10] %vm59, %v58
    %s70 = scalar_lea.vmem [#allocation0], 1851
    %71 = vst.msk [vmem:[%s70] sm:$0x20] %vm59, %v58
    %s72 = scalar_lea.vmem [#allocation0], 1914
    %73 = vst.msk [vmem:[%s72] sm:$0x40] %vm59, %v58
    %s74 = scalar_lea.vmem [#allocation0], 1977
    %75 = vst.msk [vmem:[%s74] sm:$0x80] %vm59, %v58
    %v76 = vld [vmem:[%s0] sm:$0xff]
    %77 = vrot.lane.b32.xlu0 %v76, 124
    %v78 = vpop.permute.xlu0 %77
    %vm79 = vcmask 31744
    %s80 = scalar_lea.vmem [#allocation0], 1
    %81 = vst.msk [vmem:[%s80] sm:$0x1] %vm79, %v78
    %s82 = scalar_lea.vmem [#allocation0], 64
    %83 = vst.msk [vmem:[%s82] sm:$0x2] %vm79, %v78
    %s84 = scalar_lea.vmem [#allocation0], 127
    %85 = vst.msk [vmem:[%s84] sm:$0x4] %vm79, %v78
    %s86 = scalar_lea.vmem [#allocation0], 190
    %87 = vst.msk [vmem:[%s86] sm:$0x8] %vm79, %v78
    %s88 = scalar_lea.vmem [#allocation0], 253
    %89 = vst.msk [vmem:[%s88] sm:$0x10] %vm79, %v78
    %s90 = scalar_lea.vmem [#allocation0], 316
    %91 = vst.msk [vmem:[%s90] sm:$0x20] %vm79, %v78
    %s92 = scalar_lea.vmem [#allocation0], 379
    %93 = vst.msk [vmem:[%s92] sm:$0x40] %vm79, %v78
    %s94 = scalar_lea.vmem [#allocation0], 442
    %95 = vst.msk [vmem:[%s94] sm:$0x80] %vm79, %v78
    %s96 = scalar_lea.vmem %s0, 8
    %v97 = vld [vmem:[%s96] sm:$0xff]
    %98 = vrot.lane.b32.xlu0 %v97, 124
    %v99 = vpop.permute.xlu0 %98
    %vm100 = vcmask 31744
    %s101 = scalar_lea.vmem [#allocation0], 513
    %102 = vst.msk [vmem:[%s101] sm:$0x1] %vm100, %v99
    %s103 = scalar_lea.vmem [#allocation0], 576
    %104 = vst.msk [vmem:[%s103] sm:$0x2] %vm100, %v99
    %s105 = scalar_lea.vmem [#allocation0], 639
    %106 = vst.msk [vmem:[%s105] sm:$0x4] %vm100, %v99
    %s107 = scalar_lea.vmem [#allocation0], 702
    %108 = vst.msk [vmem:[%s107] sm:$0x8] %vm100, %v99
    %s109 = scalar_lea.vmem [#allocation0], 765
    %110 = vst.msk [vmem:[%s109] sm:$0x10] %vm100, %v99
    %s111 = scalar_lea.vmem [#allocation0], 828
    %112 = vst.msk [vmem:[%s111] sm:$0x20] %vm100, %v99
    %s113 = scalar_lea.vmem [#allocation0], 891
    %114 = vst.msk [vmem:[%s113] sm:$0x40] %vm100, %v99
    %s115 = scalar_lea.vmem [#allocation0], 954
    %116 = vst.msk [vmem:[%s115] sm:$0x80] %vm100, %v99
    %s117 = scalar_lea.vmem %s0, 16
    %v118 = vld [vmem:[%s117] sm:$0xff]
    %119 = vrot.lane.b32.xlu0 %v118, 124
    %v120 = vpop.permute.xlu0 %119
    %vm121 = vcmask 31744
    %s122 = scalar_lea.vmem [#allocation0], 1025
    %123 = vst.msk [vmem:[%s122] sm:$0x1] %vm121, %v120
    %s124 = scalar_lea.vmem [#allocation0], 1088
    %125 = vst.msk [vmem:[%s124] sm:$0x2] %vm121, %v120
    %s126 = scalar_lea.vmem [#allocation0], 1151
    %127 = vst.msk [vmem:[%s126] sm:$0x4] %vm121, %v120
    %s128 = scalar_lea.vmem [#allocation0], 1214
    %129 = vst.msk [vmem:[%s128] sm:$0x8] %vm121, %v120
    %s130 = scalar_lea.vmem [#allocation0], 1277
    %131 = vst.msk [vmem:[%s130] sm:$0x10] %vm121, %v120
    %s132 = scalar_lea.vmem [#allocation0], 1340
    %133 = vst.msk [vmem:[%s132] sm:$0x20] %vm121, %v120
    %s134 = scalar_lea.vmem [#allocation0], 1403
    %135 = vst.msk [vmem:[%s134] sm:$0x40] %vm121, %v120
    %s136 = scalar_lea.vmem [#allocation0], 1466
    %137 = vst.msk [vmem:[%s136] sm:$0x80] %vm121, %v120
    %s138 = scalar_lea.vmem %s0, 24
    %v139 = vld [vmem:[%s138] sm:$0xff]
    %140 = vrot.lane.b32.xlu0 %v139, 124
    %v141 = vpop.permute.xlu0 %140
    %vm142 = vcmask 31744
    %s143 = scalar_lea.vmem [#allocation0], 1537
    %144 = vst.msk [vmem:[%s143] sm:$0x1] %vm142, %v141
    %s145 = scalar_lea.vmem [#allocation0], 1600
    %146 = vst.msk [vmem:[%s145] sm:$0x2] %vm142, %v141
    %s147 = scalar_lea.vmem [#allocation0], 1663
    %148 = vst.msk [vmem:[%s147] sm:$0x4] %vm142, %v141
    %s149 = scalar_lea.vmem [#allocation0], 1726
    %150 = vst.msk [vmem:[%s149] sm:$0x8] %vm142, %v141
    %s151 = scalar_lea.vmem [#allocation0], 1789
    %152 = vst.msk [vmem:[%s151] sm:$0x10] %vm142, %v141
    %s153 = scalar_lea.vmem [#allocation0], 1852
    %154 = vst.msk [vmem:[%s153] sm:$0x20] %vm142, %v141
    %s155 = scalar_lea.vmem [#allocation0], 1915
    %156 = vst.msk [vmem:[%s155] sm:$0x40] %vm142, %v141
    %s157 = scalar_lea.vmem [#allocation0], 1978
    %158 = vst.msk [vmem:[%s157] sm:$0x80] %vm142, %v141
    %v159 = vld [vmem:[%s0] sm:$0xff]
    %160 = vrot.lane.b32.xlu0 %v159, 120
    %v161 = vpop.permute.xlu0 %160
    %vm162 = vcmask 31744
    %s163 = scalar_lea.vmem [#allocation0], 2
    %164 = vst.msk [vmem:[%s163] sm:$0x1] %vm162, %v161
    %s165 = scalar_lea.vmem [#allocation0], 65
    %166 = vst.msk [vmem:[%s165] sm:$0x2] %vm162, %v161
    %s167 = scalar_lea.vmem [#allocation0], 128
    %168 = vst.msk [vmem:[%s167] sm:$0x4] %vm162, %v161
    %s169 = scalar_lea.vmem [#allocation0], 191
    %170 = vst.msk [vmem:[%s169] sm:$0x8] %vm162, %v161
    %s171 = scalar_lea.vmem [#allocation0], 254
    %172 = vst.msk [vmem:[%s171] sm:$0x10] %vm162, %v161
    %s173 = scalar_lea.vmem [#allocation0], 317
    %174 = vst.msk [vmem:[%s173] sm:$0x20] %vm162, %v161
    %s175 = scalar_lea.vmem [#allocation0], 380
    %176 = vst.msk [vmem:[%s175] sm:$0x40] %vm162, %v161
    %s177 = scalar_lea.vmem [#allocation0], 443
    %178 = vst.msk [vmem:[%s177] sm:$0x80] %vm162, %v161
    %s179 = scalar_lea.vmem %s0, 8
    %v180 = vld [vmem:[%s179] sm:$0xff]
    %181 = vrot.lane.b32.xlu0 %v180, 120
    %v182 = vpop.permute.xlu0 %181
    %vm183 = vcmask 31744
    %s184 = scalar_lea.vmem [#allocation0], 514
    %185 = vst.msk [vmem:[%s184] sm:$0x1] %vm183, %v182
    %s186 = scalar_lea.vmem [#allocation0], 577
    %187 = vst.msk [vmem:[%s186] sm:$0x2] %vm183, %v182
    %s188 = scalar_lea.vmem [#allocation0], 640
    %189 = vst.msk [vmem:[%s188] sm:$0x4] %vm183, %v182
    %s190 = scalar_lea.vmem [#allocation0], 703
    %191 = vst.msk [vmem:[%s190] sm:$0x8] %vm183, %v182
    %s192 = scalar_lea.vmem [#allocation0], 766
    %193 = vst.msk [vmem:[%s192] sm:$0x10] %vm183, %v182
    %s194 = scalar_lea.vmem [#allocation0], 829
    %195 = vst.msk [vmem:[%s194] sm:$0x20] %vm183, %v182
    %s196 = scalar_lea.vmem [#allocation0], 892
    %197 = vst.msk [vmem:[%s196] sm:$0x40] %vm183, %v182
    %s198 = scalar_lea.vmem [#allocation0], 955
    %199 = vst.msk [vmem:[%s198] sm:$0x80] %vm183, %v182
    %s200 = scalar_lea.vmem %s0, 16
    %v201 = vld [vmem:[%s200] sm:$0xff]
    %202 = vrot.lane.b32.xlu0 %v201, 120
    %v203 = vpop.permute.xlu0 %202
    %vm204 = vcmask 31744
    %s205 = scalar_lea.vmem [#allocation0], 1026
    %206 = vst.msk [vmem:[%s205] sm:$0x1] %vm204, %v203
    %s207 = scalar_lea.vmem [#allocation0], 1089
    %208 = vst.msk [vmem:[%s207] sm:$0x2] %vm204, %v203
    %s209 = scalar_lea.vmem [#allocation0], 1152
    %210 = vst.msk [vmem:[%s209] sm:$0x4] %vm204, %v203
    %s211 = scalar_lea.vmem [#allocation0], 1215
    %212 = vst.msk [vmem:[%s211] sm:$0x8] %vm204, %v203
    %s213 = scalar_lea.vmem [#allocation0], 1278
    %214 = vst.msk [vmem:[%s213] sm:$0x10] %vm204, %v203
    %s215 = scalar_lea.vmem [#allocation0], 1341
    %216 = vst.msk [vmem:[%s215] sm:$0x20] %vm204, %v203
    %s217 = scalar_lea.vmem [#allocation0], 1404
    %218 = vst.msk [vmem:[%s217] sm:$0x40] %vm204, %v203
    %s219 = scalar_lea.vmem [#allocation0], 1467
    %220 = vst.msk [vmem:[%s219] sm:$0x80] %vm204, %v203
    %s221 = scalar_lea.vmem %s0, 24
    %v222 = vld [vmem:[%s221] sm:$0xff]
    %223 = vrot.lane.b32.xlu0 %v222, 120
    %v224 = vpop.permute.xlu0 %223
    %vm225 = vcmask 31744
    %s226 = scalar_lea.vmem [#allocation0], 1538
    %227 = vst.msk [vmem:[%s226] sm:$0x1] %vm225, %v224
    %s228 = scalar_lea.vmem [#allocation0], 1601
    %229 = vst.msk [vmem:[%s228] sm:$0x2] %vm225, %v224
    %s230 = scalar_lea.vmem [#allocation0], 1664
    %231 = vst.msk [vmem:[%s230] sm:$0x4] %vm225, %v224
    %s232 = scalar_lea.vmem [#allocation0], 1727
    %233 = vst.msk [vmem:[%s232] sm:$0x8] %vm225, %v224
    %s234 = scalar_lea.vmem [#allocation0], 1790
    %235 = vst.msk [vmem:[%s234] sm:$0x10] %vm225, %v224
    %s236 = scalar_lea.vmem [#allocation0], 1853
    %237 = vst.msk [vmem:[%s236] sm:$0x20] %vm225, %v224
    %s238 = scalar_lea.vmem [#allocation0], 1916
    %239 = vst.msk [vmem:[%s238] sm:$0x40] %vm225, %v224
    %s240 = scalar_lea.vmem [#allocation0], 1979
    %241 = vst.msk [vmem:[%s240] sm:$0x80] %vm225, %v224
    %v242 = vld [vmem:[%s0] sm:$0xff]
    %243 = vrot.lane.b32.xlu0 %v242, 116
    %v244 = vpop.permute.xlu0 %243
    %vm245 = vcmask 31744
    %s246 = scalar_lea.vmem [#allocation0], 3
    %247 = vst.msk [vmem:[%s246] sm:$0x1] %vm245, %v244
    %s248 = scalar_lea.vmem [#allocation0], 66
    %249 = vst.msk [vmem:[%s248] sm:$0x2] %vm245, %v244
    %s250 = scalar_lea.vmem [#allocation0], 129
    %251 = vst.msk [vmem:[%s250] sm:$0x4] %vm245, %v244
    %s252 = scalar_lea.vmem [#allocation0], 192
    %253 = vst.msk [vmem:[%s252] sm:$0x8] %vm245, %v244
    %s254 = scalar_lea.vmem [#allocation0], 255
    %255 = vst.msk [vmem:[%s254] sm:$0x10] %vm245, %v244
    %s256 = scalar_lea.vmem [#allocation0], 318
    %257 = vst.msk [vmem:[%s256] sm:$0x20] %vm245, %v244
    %s258 = scalar_lea.vmem [#allocation0], 381
    %259 = vst.msk [vmem:[%s258] sm:$0x40] %vm245, %v244
    %s260 = scalar_lea.vmem [#allocation0], 444
    %261 = vst.msk [vmem:[%s260] sm:$0x80] %vm245, %v244
    %s262 = scalar_lea.vmem %s0, 8
    %v263 = vld [vmem:[%s262] sm:$0xff]
    %264 = vrot.lane.b32.xlu0 %v263, 116
    %v265 = vpop.permute.xlu0 %264
    %vm266 = vcmask 31744
    %s267 = scalar_lea.vmem [#allocation0], 515
    %268 = vst.msk [vmem:[%s267] sm:$0x1] %vm266, %v265
    %s269 = scalar_lea.vmem [#allocation0], 578
    %270 = vst.msk [vmem:[%s269] sm:$0x2] %vm266, %v265
    %s271 = scalar_lea.vmem [#allocation0], 641
    %272 = vst.msk [vmem:[%s271] sm:$0x4] %vm266, %v265
    %s273 = scalar_lea.vmem [#allocation0], 704
    %274 = vst.msk [vmem:[%s273] sm:$0x8] %vm266, %v265
    %s275 = scalar_lea.vmem [#allocation0], 767
    %276 = vst.msk [vmem:[%s275] sm:$0x10] %vm266, %v265
    %s277 = scalar_lea.vmem [#allocation0], 830
    %278 = vst.msk [vmem:[%s277] sm:$0x20] %vm266, %v265
    %s279 = scalar_lea.vmem [#allocation0], 893
    %280 = vst.msk [vmem:[%s279] sm:$0x40] %vm266, %v265
    %s281 = scalar_lea.vmem [#allocation0], 956
    %282 = vst.msk [vmem:[%s281] sm:$0x80] %vm266, %v265
    %s283 = scalar_lea.vmem %s0, 16
    %v284 = vld [vmem:[%s283] sm:$0xff]
    %285 = vrot.lane.b32.xlu0 %v284, 116
    %v286 = vpop.permute.xlu0 %285
    %vm287 = vcmask 31744
    %s288 = scalar_lea.vmem [#allocation0], 1027
    %289 = vst.msk [vmem:[%s288] sm:$0x1] %vm287, %v286
    %s290 = scalar_lea.vmem [#allocation0], 1090
    %291 = vst.msk [vmem:[%s290] sm:$0x2] %vm287, %v286
    %s292 = scalar_lea.vmem [#allocation0], 1153
    %293 = vst.msk [vmem:[%s292] sm:$0x4] %vm287, %v286
    %s294 = scalar_lea.vmem [#allocation0], 1216
    %295 = vst.msk [vmem:[%s294] sm:$0x8] %vm287, %v286
    %s296 = scalar_lea.vmem [#allocation0], 1279
    %297 = vst.msk [vmem:[%s296] sm:$0x10] %vm287, %v286
    %s298 = scalar_lea.vmem [#allocation0], 1342
    %299 = vst.msk [vmem:[%s298] sm:$0x20] %vm287, %v286
    %s300 = scalar_lea.vmem [#allocation0], 1405
    %301 = vst.msk [vmem:[%s300] sm:$0x40] %vm287, %v286
    %s302 = scalar_lea.vmem [#allocation0], 1468
    %303 = vst.msk [vmem:[%s302] sm:$0x80] %vm287, %v286
    %s304 = scalar_lea.vmem %s0, 24
    %v305 = vld [vmem:[%s304] sm:$0xff]
    %306 = vrot.lane.b32.xlu0 %v305, 116
    %v307 = vpop.permute.xlu0 %306
    %vm308 = vcmask 31744
    %s309 = scalar_lea.vmem [#allocation0], 1539
    %310 = vst.msk [vmem:[%s309] sm:$0x1] %vm308, %v307
    %s311 = scalar_lea.vmem [#allocation0], 1602
    %312 = vst.msk [vmem:[%s311] sm:$0x2] %vm308, %v307
    %s313 = scalar_lea.vmem [#allocation0], 1665
    %314 = vst.msk [vmem:[%s313] sm:$0x4] %vm308, %v307
    %s315 = scalar_lea.vmem [#allocation0], 1728
    %316 = vst.msk [vmem:[%s315] sm:$0x8] %vm308, %v307
    %s317 = scalar_lea.vmem [#allocation0], 1791
    %318 = vst.msk [vmem:[%s317] sm:$0x10] %vm308, %v307
    %s319 = scalar_lea.vmem [#allocation0], 1854
    %320 = vst.msk [vmem:[%s319] sm:$0x20] %vm308, %v307
    %s321 = scalar_lea.vmem [#allocation0], 1917
    %322 = vst.msk [vmem:[%s321] sm:$0x40] %vm308, %v307
    %s323 = scalar_lea.vmem [#allocation0], 1980
    %324 = vst.msk [vmem:[%s323] sm:$0x80] %vm308, %v307
    %v325 = vld [vmem:[%s0] sm:$0xff]
    %326 = vrot.lane.b32.xlu0 %v325, 112
    %v327 = vpop.permute.xlu0 %326
    %vm328 = vcmask 31744
    %s329 = scalar_lea.vmem [#allocation0], 8
    %330 = vst.msk [vmem:[%s329] sm:$0x1] %vm328, %v327
    %s331 = scalar_lea.vmem [#allocation0], 71
    %332 = vst.msk [vmem:[%s331] sm:$0x2] %vm328, %v327
    %s333 = scalar_lea.vmem [#allocation0], 134
    %334 = vst.msk [vmem:[%s333] sm:$0x4] %vm328, %v327
    %s335 = scalar_lea.vmem [#allocation0], 197
    %336 = vst.msk [vmem:[%s335] sm:$0x8] %vm328, %v327
    %s337 = scalar_lea.vmem [#allocation0], 260
    %338 = vst.msk [vmem:[%s337] sm:$0x10] %vm328, %v327
    %s339 = scalar_lea.vmem [#allocation0], 323
    %340 = vst.msk [vmem:[%s339] sm:$0x20] %vm328, %v327
    %s341 = scalar_lea.vmem [#allocation0], 386
    %342 = vst.msk [vmem:[%s341] sm:$0x40] %vm328, %v327
    %s343 = scalar_lea.vmem [#allocation0], 449
    %344 = vst.msk [vmem:[%s343] sm:$0x80] %vm328, %v327
    %s345 = scalar_lea.vmem %s0, 8
    %v346 = vld [vmem:[%s345] sm:$0xff]
    %347 = vrot.lane.b32.xlu0 %v346, 112
    %v348 = vpop.permute.xlu0 %347
    %vm349 = vcmask 31744
    %s350 = scalar_lea.vmem [#allocation0], 520
    %351 = vst.msk [vmem:[%s350] sm:$0x1] %vm349, %v348
    %s352 = scalar_lea.vmem [#allocation0], 583
    %353 = vst.msk [vmem:[%s352] sm:$0x2] %vm349, %v348
    %s354 = scalar_lea.vmem [#allocation0], 646
    %355 = vst.msk [vmem:[%s354] sm:$0x4] %vm349, %v348
    %s356 = scalar_lea.vmem [#allocation0], 709
    %357 = vst.msk [vmem:[%s356] sm:$0x8] %vm349, %v348
    %s358 = scalar_lea.vmem [#allocation0], 772
    %359 = vst.msk [vmem:[%s358] sm:$0x10] %vm349, %v348
    %s360 = scalar_lea.vmem [#allocation0], 835
    %361 = vst.msk [vmem:[%s360] sm:$0x20] %vm349, %v348
    %s362 = scalar_lea.vmem [#allocation0], 898
    %363 = vst.msk [vmem:[%s362] sm:$0x40] %vm349, %v348
    %s364 = scalar_lea.vmem [#allocation0], 961
    %365 = vst.msk [vmem:[%s364] sm:$0x80] %vm349, %v348
    %s366 = scalar_lea.vmem %s0, 16
    %v367 = vld [vmem:[%s366] sm:$0xff]
    %368 = vrot.lane.b32.xlu0 %v367, 112
    %v369 = vpop.permute.xlu0 %368
    %vm370 = vcmask 31744
    %s371 = scalar_lea.vmem [#allocation0], 1032
    %372 = vst.msk [vmem:[%s371] sm:$0x1] %vm370, %v369
    %s373 = scalar_lea.vmem [#allocation0], 1095
    %374 = vst.msk [vmem:[%s373] sm:$0x2] %vm370, %v369
    %s375 = scalar_lea.vmem [#allocation0], 1158
    %376 = vst.msk [vmem:[%s375] sm:$0x4] %vm370, %v369
    %s377 = scalar_lea.vmem [#allocation0], 1221
    %378 = vst.msk [vmem:[%s377] sm:$0x8] %vm370, %v369
    %s379 = scalar_lea.vmem [#allocation0], 1284
    %380 = vst.msk [vmem:[%s379] sm:$0x10] %vm370, %v369
    %s381 = scalar_lea.vmem [#allocation0], 1347
    %382 = vst.msk [vmem:[%s381] sm:$0x20] %vm370, %v369
    %s383 = scalar_lea.vmem [#allocation0], 1410
    %384 = vst.msk [vmem:[%s383] sm:$0x40] %vm370, %v369
    %s385 = scalar_lea.vmem [#allocation0], 1473
    %386 = vst.msk [vmem:[%s385] sm:$0x80] %vm370, %v369
    %s387 = scalar_lea.vmem %s0, 24
    %v388 = vld [vmem:[%s387] sm:$0xff]
    %389 = vrot.lane.b32.xlu0 %v388, 112
    %v390 = vpop.permute.xlu0 %389
    %vm391 = vcmask 31744
    %s392 = scalar_lea.vmem [#allocation0], 1544
    %393 = vst.msk [vmem:[%s392] sm:$0x1] %vm391, %v390
    %s394 = scalar_lea.vmem [#allocation0], 1607
    %395 = vst.msk [vmem:[%s394] sm:$0x2] %vm391, %v390
    %s396 = scalar_lea.vmem [#allocation0], 1670
    %397 = vst.msk [vmem:[%s396] sm:$0x4] %vm391, %v390
    %s398 = scalar_lea.vmem [#allocation0], 1733
    %399 = vst.msk [vmem:[%s398] sm:$0x8] %vm391, %v390
    %s400 = scalar_lea.vmem [#allocation0], 1796
    %401 = vst.msk [vmem:[%s400] sm:$0x10] %vm391, %v390
    %s402 = scalar_lea.vmem [#allocation0], 1859
    %403 = vst.msk [vmem:[%s402] sm:$0x20] %vm391, %v390
    %s404 = scalar_lea.vmem [#allocation0], 1922
    %405 = vst.msk [vmem:[%s404] sm:$0x40] %vm391, %v390
    %s406 = scalar_lea.vmem [#allocation0], 1985
    %407 = vst.msk [vmem:[%s406] sm:$0x80] %vm391, %v390
    %v408 = vld [vmem:[%s0] sm:$0xff]
    %409 = vrot.lane.b32.xlu0 %v408, 108
    %v410 = vpop.permute.xlu0 %409
    %vm411 = vcmask 31744
    %s412 = scalar_lea.vmem [#allocation0], 9
    %413 = vst.msk [vmem:[%s412] sm:$0x1] %vm411, %v410
    %s414 = scalar_lea.vmem [#allocation0], 72
    %415 = vst.msk [vmem:[%s414] sm:$0x2] %vm411, %v410
    %s416 = scalar_lea.vmem [#allocation0], 135
    %417 = vst.msk [vmem:[%s416] sm:$0x4] %vm411, %v410
    %s418 = scalar_lea.vmem [#allocation0], 198
    %419 = vst.msk [vmem:[%s418] sm:$0x8] %vm411, %v410
    %s420 = scalar_lea.vmem [#allocation0], 261
    %421 = vst.msk [vmem:[%s420] sm:$0x10] %vm411, %v410
    %s422 = scalar_lea.vmem [#allocation0], 324
    %423 = vst.msk [vmem:[%s422] sm:$0x20] %vm411, %v410
    %s424 = scalar_lea.vmem [#allocation0], 387
    %425 = vst.msk [vmem:[%s424] sm:$0x40] %vm411, %v410
    %s426 = scalar_lea.vmem [#allocation0], 450
    %427 = vst.msk [vmem:[%s426] sm:$0x80] %vm411, %v410
    %s428 = scalar_lea.vmem %s0, 8
    %v429 = vld [vmem:[%s428] sm:$0xff]
    %430 = vrot.lane.b32.xlu0 %v429, 108
    %v431 = vpop.permute.xlu0 %430
    %vm432 = vcmask 31744
    %s433 = scalar_lea.vmem [#allocation0], 521
    %434 = vst.msk [vmem:[%s433] sm:$0x1] %vm432, %v431
    %s435 = scalar_lea.vmem [#allocation0], 584
    %436 = vst.msk [vmem:[%s435] sm:$0x2] %vm432, %v431
    %s437 = scalar_lea.vmem [#allocation0], 647
    %438 = vst.msk [vmem:[%s437] sm:$0x4] %vm432, %v431
    %s439 = scalar_lea.vmem [#allocation0], 710
    %440 = vst.msk [vmem:[%s439] sm:$0x8] %vm432, %v431
    %s441 = scalar_lea.vmem [#allocation0], 773
    %442 = vst.msk [vmem:[%s441] sm:$0x10] %vm432, %v431
    %s443 = scalar_lea.vmem [#allocation0], 836
    %444 = vst.msk [vmem:[%s443] sm:$0x20] %vm432, %v431
    %s445 = scalar_lea.vmem [#allocation0], 899
    %446 = vst.msk [vmem:[%s445] sm:$0x40] %vm432, %v431
    %s447 = scalar_lea.vmem [#allocation0], 962
    %448 = vst.msk [vmem:[%s447] sm:$0x80] %vm432, %v431
    %s449 = scalar_lea.vmem %s0, 16
    %v450 = vld [vmem:[%s449] sm:$0xff]
    %451 = vrot.lane.b32.xlu0 %v450, 108
    %v452 = vpop.permute.xlu0 %451
    %vm453 = vcmask 31744
    %s454 = scalar_lea.vmem [#allocation0], 1033
    %455 = vst.msk [vmem:[%s454] sm:$0x1] %vm453, %v452
    %s456 = scalar_lea.vmem [#allocation0], 1096
    %457 = vst.msk [vmem:[%s456] sm:$0x2] %vm453, %v452
    %s458 = scalar_lea.vmem [#allocation0], 1159
    %459 = vst.msk [vmem:[%s458] sm:$0x4] %vm453, %v452
    %s460 = scalar_lea.vmem [#allocation0], 1222
    %461 = vst.msk [vmem:[%s460] sm:$0x8] %vm453, %v452
    %s462 = scalar_lea.vmem [#allocation0], 1285
    %463 = vst.msk [vmem:[%s462] sm:$0x10] %vm453, %v452
    %s464 = scalar_lea.vmem [#allocation0], 1348
    %465 = vst.msk [vmem:[%s464] sm:$0x20] %vm453, %v452
    %s466 = scalar_lea.vmem [#allocation0], 1411
    %467 = vst.msk [vmem:[%s466] sm:$0x40] %vm453, %v452
    %s468 = scalar_lea.vmem [#allocation0], 1474
    %469 = vst.msk [vmem:[%s468] sm:$0x80] %vm453, %v452
    %s470 = scalar_lea.vmem %s0, 24
    %v471 = vld [vmem:[%s470] sm:$0xff]
    %472 = vrot.lane.b32.xlu0 %v471, 108
    %v473 = vpop.permute.xlu0 %472
    %vm474 = vcmask 31744
    %s475 = scalar_lea.vmem [#allocation0], 1545
    %476 = vst.msk [vmem:[%s475] sm:$0x1] %vm474, %v473
    %s477 = scalar_lea.vmem [#allocation0], 1608
    %478 = vst.msk [vmem:[%s477] sm:$0x2] %vm474, %v473
    %s479 = scalar_lea.vmem [#allocation0], 1671
    %480 = vst.msk [vmem:[%s479] sm:$0x4] %vm474, %v473
    %s481 = scalar_lea.vmem [#allocation0], 1734
    %482 = vst.msk [vmem:[%s481] sm:$0x8] %vm474, %v473
    %s483 = scalar_lea.vmem [#allocation0], 1797
    %484 = vst.msk [vmem:[%s483] sm:$0x10] %vm474, %v473
    %s485 = scalar_lea.vmem [#allocation0], 1860
    %486 = vst.msk [vmem:[%s485] sm:$0x20] %vm474, %v473
    %s487 = scalar_lea.vmem [#allocation0], 1923
    %488 = vst.msk [vmem:[%s487] sm:$0x40] %vm474, %v473
    %s489 = scalar_lea.vmem [#allocation0], 1986
    %490 = vst.msk [vmem:[%s489] sm:$0x80] %vm474, %v473
    %v491 = vld [vmem:[%s0] sm:$0xff]
    %492 = vrot.lane.b32.xlu0 %v491, 104
    %v493 = vpop.permute.xlu0 %492
    %vm494 = vcmask 31744
    %s495 = scalar_lea.vmem [#allocation0], 10
    %496 = vst.msk [vmem:[%s495] sm:$0x1] %vm494, %v493
    %s497 = scalar_lea.vmem [#allocation0], 73
    %498 = vst.msk [vmem:[%s497] sm:$0x2] %vm494, %v493
    %s499 = scalar_lea.vmem [#allocation0], 136
    %500 = vst.msk [vmem:[%s499] sm:$0x4] %vm494, %v493
    %s501 = scalar_lea.vmem [#allocation0], 199
    %502 = vst.msk [vmem:[%s501] sm:$0x8] %vm494, %v493
    %s503 = scalar_lea.vmem [#allocation0], 262
    %504 = vst.msk [vmem:[%s503] sm:$0x10] %vm494, %v493
    %s505 = scalar_lea.vmem [#allocation0], 325
    %506 = vst.msk [vmem:[%s505] sm:$0x20] %vm494, %v493
    %s507 = scalar_lea.vmem [#allocation0], 388
    %508 = vst.msk [vmem:[%s507] sm:$0x40] %vm494, %v493
    %s509 = scalar_lea.vmem [#allocation0], 451
    %510 = vst.msk [vmem:[%s509] sm:$0x80] %vm494, %v493
    %s511 = scalar_lea.vmem %s0, 8
    %v512 = vld [vmem:[%s511] sm:$0xff]
    %513 = vrot.lane.b32.xlu0 %v512, 104
    %v514 = vpop.permute.xlu0 %513
    %vm515 = vcmask 31744
    %s516 = scalar_lea.vmem [#allocation0], 522
    %517 = vst.msk [vmem:[%s516] sm:$0x1] %vm515, %v514
    %s518 = scalar_lea.vmem [#allocation0], 585
    %519 = vst.msk [vmem:[%s518] sm:$0x2] %vm515, %v514
    %s520 = scalar_lea.vmem [#allocation0], 648
    %521 = vst.msk [vmem:[%s520] sm:$0x4] %vm515, %v514
    %s522 = scalar_lea.vmem [#allocation0], 711
    %523 = vst.msk [vmem:[%s522] sm:$0x8] %vm515, %v514
    %s524 = scalar_lea.vmem [#allocation0], 774
    %525 = vst.msk [vmem:[%s524] sm:$0x10] %vm515, %v514
    %s526 = scalar_lea.vmem [#allocation0], 837
    %527 = vst.msk [vmem:[%s526] sm:$0x20] %vm515, %v514
    %s528 = scalar_lea.vmem [#allocation0], 900
    %529 = vst.msk [vmem:[%s528] sm:$0x40] %vm515, %v514
    %s530 = scalar_lea.vmem [#allocation0], 963
    %531 = vst.msk [vmem:[%s530] sm:$0x80] %vm515, %v514
    %s532 = scalar_lea.vmem %s0, 16
    %v533 = vld [vmem:[%s532] sm:$0xff]
    %534 = vrot.lane.b32.xlu0 %v533, 104
    %v535 = vpop.permute.xlu0 %534
    %vm536 = vcmask 31744
    %s537 = scalar_lea.vmem [#allocation0], 1034
    %538 = vst.msk [vmem:[%s537] sm:$0x1] %vm536, %v535
    %s539 = scalar_lea.vmem [#allocation0], 1097
    %540 = vst.msk [vmem:[%s539] sm:$0x2] %vm536, %v535
    %s541 = scalar_lea.vmem [#allocation0], 1160
    %542 = vst.msk [vmem:[%s541] sm:$0x4] %vm536, %v535
    %s543 = scalar_lea.vmem [#allocation0], 1223
    %544 = vst.msk [vmem:[%s543] sm:$0x8] %vm536, %v535
    %s545 = scalar_lea.vmem [#allocation0], 1286
    %546 = vst.msk [vmem:[%s545] sm:$0x10] %vm536, %v535
    %s547 = scalar_lea.vmem [#allocation0], 1349
    %548 = vst.msk [vmem:[%s547] sm:$0x20] %vm536, %v535
    %s549 = scalar_lea.vmem [#allocation0], 1412
    %550 = vst.msk [vmem:[%s549] sm:$0x40] %vm536, %v535
    %s551 = scalar_lea.vmem [#allocation0], 1475
    %552 = vst.msk [vmem:[%s551] sm:$0x80] %vm536, %v535
    %s553 = scalar_lea.vmem %s0, 24
    %v554 = vld [vmem:[%s553] sm:$0xff]
    %555 = vrot.lane.b32.xlu0 %v554, 104
    %v556 = vpop.permute.xlu0 %555
    %vm557 = vcmask 31744
    %s558 = scalar_lea.vmem [#allocation0], 1546
    %559 = vst.msk [vmem:[%s558] sm:$0x1] %vm557, %v556
    %s560 = scalar_lea.vmem [#allocation0], 1609
    %561 = vst.msk [vmem:[%s560] sm:$0x2] %vm557, %v556
    %s562 = scalar_lea.vmem [#allocation0], 1672
    %563 = vst.msk [vmem:[%s562] sm:$0x4] %vm557, %v556
    %s564 = scalar_lea.vmem [#allocation0], 1735
    %565 = vst.msk [vmem:[%s564] sm:$0x8] %vm557, %v556
    %s566 = scalar_lea.vmem [#allocation0], 1798
    %567 = vst.msk [vmem:[%s566] sm:$0x10] %vm557, %v556
    %s568 = scalar_lea.vmem [#allocation0], 1861
    %569 = vst.msk [vmem:[%s568] sm:$0x20] %vm557, %v556
    %s570 = scalar_lea.vmem [#allocation0], 1924
    %571 = vst.msk [vmem:[%s570] sm:$0x40] %vm557, %v556
    %s572 = scalar_lea.vmem [#allocation0], 1987
    %573 = vst.msk [vmem:[%s572] sm:$0x80] %vm557, %v556
    %v574 = vld [vmem:[%s0] sm:$0xff]
    %575 = vrot.lane.b32.xlu0 %v574, 100
    %v576 = vpop.permute.xlu0 %575
    %vm577 = vcmask 31744
    %s578 = scalar_lea.vmem [#allocation0], 11
    %579 = vst.msk [vmem:[%s578] sm:$0x1] %vm577, %v576
    %s580 = scalar_lea.vmem [#allocation0], 74
    %581 = vst.msk [vmem:[%s580] sm:$0x2] %vm577, %v576
    %s582 = scalar_lea.vmem [#allocation0], 137
    %583 = vst.msk [vmem:[%s582] sm:$0x4] %vm577, %v576
    %s584 = scalar_lea.vmem [#allocation0], 200
    %585 = vst.msk [vmem:[%s584] sm:$0x8] %vm577, %v576
    %s586 = scalar_lea.vmem [#allocation0], 263
    %587 = vst.msk [vmem:[%s586] sm:$0x10] %vm577, %v576
    %s588 = scalar_lea.vmem [#allocation0], 326
    %589 = vst.msk [vmem:[%s588] sm:$0x20] %vm577, %v576
    %s590 = scalar_lea.vmem [#allocation0], 389
    %591 = vst.msk [vmem:[%s590] sm:$0x40] %vm577, %v576
    %s592 = scalar_lea.vmem [#allocation0], 452
    %593 = vst.msk [vmem:[%s592] sm:$0x80] %vm577, %v576
    %s594 = scalar_lea.vmem %s0, 8
    %v595 = vld [vmem:[%s594] sm:$0xff]
    %596 = vrot.lane.b32.xlu0 %v595, 100
    %v597 = vpop.permute.xlu0 %596
    %vm598 = vcmask 31744
    %s599 = scalar_lea.vmem [#allocation0], 523
    %600 = vst.msk [vmem:[%s599] sm:$0x1] %vm598, %v597
    %s601 = scalar_lea.vmem [#allocation0], 586
    %602 = vst.msk [vmem:[%s601] sm:$0x2] %vm598, %v597
    %s603 = scalar_lea.vmem [#allocation0], 649
    %604 = vst.msk [vmem:[%s603] sm:$0x4] %vm598, %v597
    %s605 = scalar_lea.vmem [#allocation0], 712
    %606 = vst.msk [vmem:[%s605] sm:$0x8] %vm598, %v597
    %s607 = scalar_lea.vmem [#allocation0], 775
    %608 = vst.msk [vmem:[%s607] sm:$0x10] %vm598, %v597
    %s609 = scalar_lea.vmem [#allocation0], 838
    %610 = vst.msk [vmem:[%s609] sm:$0x20] %vm598, %v597
    %s611 = scalar_lea.vmem [#allocation0], 901
    %612 = vst.msk [vmem:[%s611] sm:$0x40] %vm598, %v597
    %s613 = scalar_lea.vmem [#allocation0], 964
    %614 = vst.msk [vmem:[%s613] sm:$0x80] %vm598, %v597
    %s615 = scalar_lea.vmem %s0, 16
    %v616 = vld [vmem:[%s615] sm:$0xff]
    %617 = vrot.lane.b32.xlu0 %v616, 100
    %v618 = vpop.permute.xlu0 %617
    %vm619 = vcmask 31744
    %s620 = scalar_lea.vmem [#allocation0], 1035
    %621 = vst.msk [vmem:[%s620] sm:$0x1] %vm619, %v618
    %s622 = scalar_lea.vmem [#allocation0], 1098
    %623 = vst.msk [vmem:[%s622] sm:$0x2] %vm619, %v618
    %s624 = scalar_lea.vmem [#allocation0], 1161
    %625 = vst.msk [vmem:[%s624] sm:$0x4] %vm619, %v618
    %s626 = scalar_lea.vmem [#allocation0], 1224
    %627 = vst.msk [vmem:[%s626] sm:$0x8] %vm619, %v618
    %s628 = scalar_lea.vmem [#allocation0], 1287
    %629 = vst.msk [vmem:[%s628] sm:$0x10] %vm619, %v618
    %s630 = scalar_lea.vmem [#allocation0], 1350
    %631 = vst.msk [vmem:[%s630] sm:$0x20] %vm619, %v618
    %s632 = scalar_lea.vmem [#allocation0], 1413
    %633 = vst.msk [vmem:[%s632] sm:$0x40] %vm619, %v618
    %s634 = scalar_lea.vmem [#allocation0], 1476
    %635 = vst.msk [vmem:[%s634] sm:$0x80] %vm619, %v618
    %s636 = scalar_lea.vmem %s0, 24
    %v637 = vld [vmem:[%s636] sm:$0xff]
    %638 = vrot.lane.b32.xlu0 %v637, 100
    %v639 = vpop.permute.xlu0 %638
    %vm640 = vcmask 31744
    %s641 = scalar_lea.vmem [#allocation0], 1547
    %642 = vst.msk [vmem:[%s641] sm:$0x1] %vm640, %v639
    %s643 = scalar_lea.vmem [#allocation0], 1610
    %644 = vst.msk [vmem:[%s643] sm:$0x2] %vm640, %v639
    %s645 = scalar_lea.vmem [#allocation0], 1673
    %646 = vst.msk [vmem:[%s645] sm:$0x4] %vm640, %v639
    %s647 = scalar_lea.vmem [#allocation0], 1736
    %648 = vst.msk [vmem:[%s647] sm:$0x8] %vm640, %v639
    %s649 = scalar_lea.vmem [#allocation0], 1799
    %650 = vst.msk [vmem:[%s649] sm:$0x10] %vm640, %v639
    %s651 = scalar_lea.vmem [#allocation0], 1862
    %652 = vst.msk [vmem:[%s651] sm:$0x20] %vm640, %v639
    %s653 = scalar_lea.vmem [#allocation0], 1925
    %654 = vst.msk [vmem:[%s653] sm:$0x40] %vm640, %v639
    %s655 = scalar_lea.vmem [#allocation0], 1988
    %656 = vst.msk [vmem:[%s655] sm:$0x80] %vm640, %v639
    %v657 = vld [vmem:[%s0] sm:$0xff]
    %658 = vrot.lane.b32.xlu0 %v657, 96
    %v659 = vpop.permute.xlu0 %658
    %vm660 = vcmask 31744
    %s661 = scalar_lea.vmem [#allocation0], 16
    %662 = vst.msk [vmem:[%s661] sm:$0x1] %vm660, %v659
    %s663 = scalar_lea.vmem [#allocation0], 79
    %664 = vst.msk [vmem:[%s663] sm:$0x2] %vm660, %v659
    %s665 = scalar_lea.vmem [#allocation0], 142
    %666 = vst.msk [vmem:[%s665] sm:$0x4] %vm660, %v659
    %s667 = scalar_lea.vmem [#allocation0], 205
    %668 = vst.msk [vmem:[%s667] sm:$0x8] %vm660, %v659
    %s669 = scalar_lea.vmem [#allocation0], 268
    %670 = vst.msk [vmem:[%s669] sm:$0x10] %vm660, %v659
    %s671 = scalar_lea.vmem [#allocation0], 331
    %672 = vst.msk [vmem:[%s671] sm:$0x20] %vm660, %v659
    %s673 = scalar_lea.vmem [#allocation0], 394
    %674 = vst.msk [vmem:[%s673] sm:$0x40] %vm660, %v659
    %s675 = scalar_lea.vmem [#allocation0], 457
    %676 = vst.msk [vmem:[%s675] sm:$0x80] %vm660, %v659
    %s677 = scalar_lea.vmem %s0, 8
    %v678 = vld [vmem:[%s677] sm:$0xff]
    %679 = vrot.lane.b32.xlu0 %v678, 96
    %v680 = vpop.permute.xlu0 %679
    %vm681 = vcmask 31744
    %s682 = scalar_lea.vmem [#allocation0], 528
    %683 = vst.msk [vmem:[%s682] sm:$0x1] %vm681, %v680
    %s684 = scalar_lea.vmem [#allocation0], 591
    %685 = vst.msk [vmem:[%s684] sm:$0x2] %vm681, %v680
    %s686 = scalar_lea.vmem [#allocation0], 654
    %687 = vst.msk [vmem:[%s686] sm:$0x4] %vm681, %v680
    %s688 = scalar_lea.vmem [#allocation0], 717
    %689 = vst.msk [vmem:[%s688] sm:$0x8] %vm681, %v680
    %s690 = scalar_lea.vmem [#allocation0], 780
    %691 = vst.msk [vmem:[%s690] sm:$0x10] %vm681, %v680
    %s692 = scalar_lea.vmem [#allocation0], 843
    %693 = vst.msk [vmem:[%s692] sm:$0x20] %vm681, %v680
    %s694 = scalar_lea.vmem [#allocation0], 906
    %695 = vst.msk [vmem:[%s694] sm:$0x40] %vm681, %v680
    %s696 = scalar_lea.vmem [#allocation0], 969
    %697 = vst.msk [vmem:[%s696] sm:$0x80] %vm681, %v680
    %s698 = scalar_lea.vmem %s0, 16
    %v699 = vld [vmem:[%s698] sm:$0xff]
    %700 = vrot.lane.b32.xlu0 %v699, 96
    %v701 = vpop.permute.xlu0 %700
    %vm702 = vcmask 31744
    %s703 = scalar_lea.vmem [#allocation0], 1040
    %704 = vst.msk [vmem:[%s703] sm:$0x1] %vm702, %v701
    %s705 = scalar_lea.vmem [#allocation0], 1103
    %706 = vst.msk [vmem:[%s705] sm:$0x2] %vm702, %v701
    %s707 = scalar_lea.vmem [#allocation0], 1166
    %708 = vst.msk [vmem:[%s707] sm:$0x4] %vm702, %v701
    %s709 = scalar_lea.vmem [#allocation0], 1229
    %710 = vst.msk [vmem:[%s709] sm:$0x8] %vm702, %v701
    %s711 = scalar_lea.vmem [#allocation0], 1292
    %712 = vst.msk [vmem:[%s711] sm:$0x10] %vm702, %v701
    %s713 = scalar_lea.vmem [#allocation0], 1355
    %714 = vst.msk [vmem:[%s713] sm:$0x20] %vm702, %v701
    %s715 = scalar_lea.vmem [#allocation0], 1418
    %716 = vst.msk [vmem:[%s715] sm:$0x40] %vm702, %v701
    %s717 = scalar_lea.vmem [#allocation0], 1481
    %718 = vst.msk [vmem:[%s717] sm:$0x80] %vm702, %v701
    %s719 = scalar_lea.vmem %s0, 24
    %v720 = vld [vmem:[%s719] sm:$0xff]
    %721 = vrot.lane.b32.xlu0 %v720, 96
    %v722 = vpop.permute.xlu0 %721
    %vm723 = vcmask 31744
    %s724 = scalar_lea.vmem [#allocation0], 1552
    %725 = vst.msk [vmem:[%s724] sm:$0x1] %vm723, %v722
    %s726 = scalar_lea.vmem [#allocation0], 1615
    %727 = vst.msk [vmem:[%s726] sm:$0x2] %vm723, %v722
    %s728 = scalar_lea.vmem [#allocation0], 1678
    %729 = vst.msk [vmem:[%s728] sm:$0x4] %vm723, %v722
    %s730 = scalar_lea.vmem [#allocation0], 1741
    %731 = vst.msk [vmem:[%s730] sm:$0x8] %vm723, %v722
    %s732 = scalar_lea.vmem [#allocation0], 1804
    %733 = vst.msk [vmem:[%s732] sm:$0x10] %vm723, %v722
    %s734 = scalar_lea.vmem [#allocation0], 1867
    %735 = vst.msk [vmem:[%s734] sm:$0x20] %vm723, %v722
    %s736 = scalar_lea.vmem [#allocation0], 1930
    %737 = vst.msk [vmem:[%s736] sm:$0x40] %vm723, %v722
    %s738 = scalar_lea.vmem [#allocation0], 1993
    %739 = vst.msk [vmem:[%s738] sm:$0x80] %vm723, %v722
    %v740 = vld [vmem:[%s0] sm:$0xff]
    %741 = vrot.lane.b32.xlu0 %v740, 92
    %v742 = vpop.permute.xlu0 %741
    %vm743 = vcmask 31744
    %s744 = scalar_lea.vmem [#allocation0], 17
    %745 = vst.msk [vmem:[%s744] sm:$0x1] %vm743, %v742
    %s746 = scalar_lea.vmem [#allocation0], 80
    %747 = vst.msk [vmem:[%s746] sm:$0x2] %vm743, %v742
    %s748 = scalar_lea.vmem [#allocation0], 143
    %749 = vst.msk [vmem:[%s748] sm:$0x4] %vm743, %v742
    %s750 = scalar_lea.vmem [#allocation0], 206
    %751 = vst.msk [vmem:[%s750] sm:$0x8] %vm743, %v742
    %s752 = scalar_lea.vmem [#allocation0], 269
    %753 = vst.msk [vmem:[%s752] sm:$0x10] %vm743, %v742
    %s754 = scalar_lea.vmem [#allocation0], 332
    %755 = vst.msk [vmem:[%s754] sm:$0x20] %vm743, %v742
    %s756 = scalar_lea.vmem [#allocation0], 395
    %757 = vst.msk [vmem:[%s756] sm:$0x40] %vm743, %v742
    %s758 = scalar_lea.vmem [#allocation0], 458
    %759 = vst.msk [vmem:[%s758] sm:$0x80] %vm743, %v742
    %s760 = scalar_lea.vmem %s0, 8
    %v761 = vld [vmem:[%s760] sm:$0xff]
    %762 = vrot.lane.b32.xlu0 %v761, 92
    %v763 = vpop.permute.xlu0 %762
    %vm764 = vcmask 31744
    %s765 = scalar_lea.vmem [#allocation0], 529
    %766 = vst.msk [vmem:[%s765] sm:$0x1] %vm764, %v763
    %s767 = scalar_lea.vmem [#allocation0], 592
    %768 = vst.msk [vmem:[%s767] sm:$0x2] %vm764, %v763
    %s769 = scalar_lea.vmem [#allocation0], 655
    %770 = vst.msk [vmem:[%s769] sm:$0x4] %vm764, %v763
    %s771 = scalar_lea.vmem [#allocation0], 718
    %772 = vst.msk [vmem:[%s771] sm:$0x8] %vm764, %v763
    %s773 = scalar_lea.vmem [#allocation0], 781
    %774 = vst.msk [vmem:[%s773] sm:$0x10] %vm764, %v763
    %s775 = scalar_lea.vmem [#allocation0], 844
    %776 = vst.msk [vmem:[%s775] sm:$0x20] %vm764, %v763
    %s777 = scalar_lea.vmem [#allocation0], 907
    %778 = vst.msk [vmem:[%s777] sm:$0x40] %vm764, %v763
    %s779 = scalar_lea.vmem [#allocation0], 970
    %780 = vst.msk [vmem:[%s779] sm:$0x80] %vm764, %v763
    %s781 = scalar_lea.vmem %s0, 16
    %v782 = vld [vmem:[%s781] sm:$0xff]
    %783 = vrot.lane.b32.xlu0 %v782, 92
    %v784 = vpop.permute.xlu0 %783
    %vm785 = vcmask 31744
    %s786 = scalar_lea.vmem [#allocation0], 1041
    %787 = vst.msk [vmem:[%s786] sm:$0x1] %vm785, %v784
    %s788 = scalar_lea.vmem [#allocation0], 1104
    %789 = vst.msk [vmem:[%s788] sm:$0x2] %vm785, %v784
    %s790 = scalar_lea.vmem [#allocation0], 1167
    %791 = vst.msk [vmem:[%s790] sm:$0x4] %vm785, %v784
    %s792 = scalar_lea.vmem [#allocation0], 1230
    %793 = vst.msk [vmem:[%s792] sm:$0x8] %vm785, %v784
    %s794 = scalar_lea.vmem [#allocation0], 1293
    %795 = vst.msk [vmem:[%s794] sm:$0x10] %vm785, %v784
    %s796 = scalar_lea.vmem [#allocation0], 1356
    %797 = vst.msk [vmem:[%s796] sm:$0x20] %vm785, %v784
    %s798 = scalar_lea.vmem [#allocation0], 1419
    %799 = vst.msk [vmem:[%s798] sm:$0x40] %vm785, %v784
    %s800 = scalar_lea.vmem [#allocation0], 1482
    %801 = vst.msk [vmem:[%s800] sm:$0x80] %vm785, %v784
    %s802 = scalar_lea.vmem %s0, 24
    %v803 = vld [vmem:[%s802] sm:$0xff]
    %804 = vrot.lane.b32.xlu0 %v803, 92
    %v805 = vpop.permute.xlu0 %804
    %vm806 = vcmask 31744
    %s807 = scalar_lea.vmem [#allocation0], 1553
    %808 = vst.msk [vmem:[%s807] sm:$0x1] %vm806, %v805
    %s809 = scalar_lea.vmem [#allocation0], 1616
    %810 = vst.msk [vmem:[%s809] sm:$0x2] %vm806, %v805
    %s811 = scalar_lea.vmem [#allocation0], 1679
    %812 = vst.msk [vmem:[%s811] sm:$0x4] %vm806, %v805
    %s813 = scalar_lea.vmem [#allocation0], 1742
    %814 = vst.msk [vmem:[%s813] sm:$0x8] %vm806, %v805
    %s815 = scalar_lea.vmem [#allocation0], 1805
    %816 = vst.msk [vmem:[%s815] sm:$0x10] %vm806, %v805
    %s817 = scalar_lea.vmem [#allocation0], 1868
    %818 = vst.msk [vmem:[%s817] sm:$0x20] %vm806, %v805
    %s819 = scalar_lea.vmem [#allocation0], 1931
    %820 = vst.msk [vmem:[%s819] sm:$0x40] %vm806, %v805
    %s821 = scalar_lea.vmem [#allocation0], 1994
    %822 = vst.msk [vmem:[%s821] sm:$0x80] %vm806, %v805
    %v823 = vld [vmem:[%s0] sm:$0xff]
    %824 = vrot.lane.b32.xlu0 %v823, 88
    %v825 = vpop.permute.xlu0 %824
    %vm826 = vcmask 31744
    %s827 = scalar_lea.vmem [#allocation0], 18
    %828 = vst.msk [vmem:[%s827] sm:$0x1] %vm826, %v825
    %s829 = scalar_lea.vmem [#allocation0], 81
    %830 = vst.msk [vmem:[%s829] sm:$0x2] %vm826, %v825
    %s831 = scalar_lea.vmem [#allocation0], 144
    %832 = vst.msk [vmem:[%s831] sm:$0x4] %vm826, %v825
    %s833 = scalar_lea.vmem [#allocation0], 207
    %834 = vst.msk [vmem:[%s833] sm:$0x8] %vm826, %v825
    %s835 = scalar_lea.vmem [#allocation0], 270
    %836 = vst.msk [vmem:[%s835] sm:$0x10] %vm826, %v825
    %s837 = scalar_lea.vmem [#allocation0], 333
    %838 = vst.msk [vmem:[%s837] sm:$0x20] %vm826, %v825
    %s839 = scalar_lea.vmem [#allocation0], 396
    %840 = vst.msk [vmem:[%s839] sm:$0x40] %vm826, %v825
    %s841 = scalar_lea.vmem [#allocation0], 459
    %842 = vst.msk [vmem:[%s841] sm:$0x80] %vm826, %v825
    %s843 = scalar_lea.vmem %s0, 8
    %v844 = vld [vmem:[%s843] sm:$0xff]
    %845 = vrot.lane.b32.xlu0 %v844, 88
    %v846 = vpop.permute.xlu0 %845
    %vm847 = vcmask 31744
    %s848 = scalar_lea.vmem [#allocation0], 530
    %849 = vst.msk [vmem:[%s848] sm:$0x1] %vm847, %v846
    %s850 = scalar_lea.vmem [#allocation0], 593
    %851 = vst.msk [vmem:[%s850] sm:$0x2] %vm847, %v846
    %s852 = scalar_lea.vmem [#allocation0], 656
    %853 = vst.msk [vmem:[%s852] sm:$0x4] %vm847, %v846
    %s854 = scalar_lea.vmem [#allocation0], 719
    %855 = vst.msk [vmem:[%s854] sm:$0x8] %vm847, %v846
    %s856 = scalar_lea.vmem [#allocation0], 782
    %857 = vst.msk [vmem:[%s856] sm:$0x10] %vm847, %v846
    %s858 = scalar_lea.vmem [#allocation0], 845
    %859 = vst.msk [vmem:[%s858] sm:$0x20] %vm847, %v846
    %s860 = scalar_lea.vmem [#allocation0], 908
    %861 = vst.msk [vmem:[%s860] sm:$0x40] %vm847, %v846
    %s862 = scalar_lea.vmem [#allocation0], 971
    %863 = vst.msk [vmem:[%s862] sm:$0x80] %vm847, %v846
    %s864 = scalar_lea.vmem %s0, 16
    %v865 = vld [vmem:[%s864] sm:$0xff]
    %866 = vrot.lane.b32.xlu0 %v865, 88
    %v867 = vpop.permute.xlu0 %866
    %vm868 = vcmask 31744
    %s869 = scalar_lea.vmem [#allocation0], 1042
    %870 = vst.msk [vmem:[%s869] sm:$0x1] %vm868, %v867
    %s871 = scalar_lea.vmem [#allocation0], 1105
    %872 = vst.msk [vmem:[%s871] sm:$0x2] %vm868, %v867
    %s873 = scalar_lea.vmem [#allocation0], 1168
    %874 = vst.msk [vmem:[%s873] sm:$0x4] %vm868, %v867
    %s875 = scalar_lea.vmem [#allocation0], 1231
    %876 = vst.msk [vmem:[%s875] sm:$0x8] %vm868, %v867
    %s877 = scalar_lea.vmem [#allocation0], 1294
    %878 = vst.msk [vmem:[%s877] sm:$0x10] %vm868, %v867
    %s879 = scalar_lea.vmem [#allocation0], 1357
    %880 = vst.msk [vmem:[%s879] sm:$0x20] %vm868, %v867
    %s881 = scalar_lea.vmem [#allocation0], 1420
    %882 = vst.msk [vmem:[%s881] sm:$0x40] %vm868, %v867
    %s883 = scalar_lea.vmem [#allocation0], 1483
    %884 = vst.msk [vmem:[%s883] sm:$0x80] %vm868, %v867
    %s885 = scalar_lea.vmem %s0, 24
    %v886 = vld [vmem:[%s885] sm:$0xff]
    %887 = vrot.lane.b32.xlu0 %v886, 88
    %v888 = vpop.permute.xlu0 %887
    %vm889 = vcmask 31744
    %s890 = scalar_lea.vmem [#allocation0], 1554
    %891 = vst.msk [vmem:[%s890] sm:$0x1] %vm889, %v888
    %s892 = scalar_lea.vmem [#allocation0], 1617
    %893 = vst.msk [vmem:[%s892] sm:$0x2] %vm889, %v888
    %s894 = scalar_lea.vmem [#allocation0], 1680
    %895 = vst.msk [vmem:[%s894] sm:$0x4] %vm889, %v888
    %s896 = scalar_lea.vmem [#allocation0], 1743
    %897 = vst.msk [vmem:[%s896] sm:$0x8] %vm889, %v888
    %s898 = scalar_lea.vmem [#allocation0], 1806
    %899 = vst.msk [vmem:[%s898] sm:$0x10] %vm889, %v888
    %s900 = scalar_lea.vmem [#allocation0], 1869
    %901 = vst.msk [vmem:[%s900] sm:$0x20] %vm889, %v888
    %s902 = scalar_lea.vmem [#allocation0], 1932
    %903 = vst.msk [vmem:[%s902] sm:$0x40] %vm889, %v888
    %s904 = scalar_lea.vmem [#allocation0], 1995
    %905 = vst.msk [vmem:[%s904] sm:$0x80] %vm889, %v888
    %v906 = vld [vmem:[%s0] sm:$0xff]
    %907 = vrot.lane.b32.xlu0 %v906, 84
    %v908 = vpop.permute.xlu0 %907
    %vm909 = vcmask 31744
    %s910 = scalar_lea.vmem [#allocation0], 19
    %911 = vst.msk [vmem:[%s910] sm:$0x1] %vm909, %v908
    %s912 = scalar_lea.vmem [#allocation0], 82
    %913 = vst.msk [vmem:[%s912] sm:$0x2] %vm909, %v908
    %s914 = scalar_lea.vmem [#allocation0], 145
    %915 = vst.msk [vmem:[%s914] sm:$0x4] %vm909, %v908
    %s916 = scalar_lea.vmem [#allocation0], 208
    %917 = vst.msk [vmem:[%s916] sm:$0x8] %vm909, %v908
    %s918 = scalar_lea.vmem [#allocation0], 271
    %919 = vst.msk [vmem:[%s918] sm:$0x10] %vm909, %v908
    %s920 = scalar_lea.vmem [#allocation0], 334
    %921 = vst.msk [vmem:[%s920] sm:$0x20] %vm909, %v908
    %s922 = scalar_lea.vmem [#allocation0], 397
    %923 = vst.msk [vmem:[%s922] sm:$0x40] %vm909, %v908
    %s924 = scalar_lea.vmem [#allocation0], 460
    %925 = vst.msk [vmem:[%s924] sm:$0x80] %vm909, %v908
    %s926 = scalar_lea.vmem %s0, 8
    %v927 = vld [vmem:[%s926] sm:$0xff]
    %928 = vrot.lane.b32.xlu0 %v927, 84
    %v929 = vpop.permute.xlu0 %928
    %vm930 = vcmask 31744
    %s931 = scalar_lea.vmem [#allocation0], 531
    %932 = vst.msk [vmem:[%s931] sm:$0x1] %vm930, %v929
    %s933 = scalar_lea.vmem [#allocation0], 594
    %934 = vst.msk [vmem:[%s933] sm:$0x2] %vm930, %v929
    %s935 = scalar_lea.vmem [#allocation0], 657
    %936 = vst.msk [vmem:[%s935] sm:$0x4] %vm930, %v929
    %s937 = scalar_lea.vmem [#allocation0], 720
    %938 = vst.msk [vmem:[%s937] sm:$0x8] %vm930, %v929
    %s939 = scalar_lea.vmem [#allocation0], 783
    %940 = vst.msk [vmem:[%s939] sm:$0x10] %vm930, %v929
    %s941 = scalar_lea.vmem [#allocation0], 846
    %942 = vst.msk [vmem:[%s941] sm:$0x20] %vm930, %v929
    %s943 = scalar_lea.vmem [#allocation0], 909
    %944 = vst.msk [vmem:[%s943] sm:$0x40] %vm930, %v929
    %s945 = scalar_lea.vmem [#allocation0], 972
    %946 = vst.msk [vmem:[%s945] sm:$0x80] %vm930, %v929
    %s947 = scalar_lea.vmem %s0, 16
    %v948 = vld [vmem:[%s947] sm:$0xff]
    %949 = vrot.lane.b32.xlu0 %v948, 84
    %v950 = vpop.permute.xlu0 %949
    %vm951 = vcmask 31744
    %s952 = scalar_lea.vmem [#allocation0], 1043
    %953 = vst.msk [vmem:[%s952] sm:$0x1] %vm951, %v950
    %s954 = scalar_lea.vmem [#allocation0], 1106
    %955 = vst.msk [vmem:[%s954] sm:$0x2] %vm951, %v950
    %s956 = scalar_lea.vmem [#allocation0], 1169
    %957 = vst.msk [vmem:[%s956] sm:$0x4] %vm951, %v950
    %s958 = scalar_lea.vmem [#allocation0], 1232
    %959 = vst.msk [vmem:[%s958] sm:$0x8] %vm951, %v950
    %s960 = scalar_lea.vmem [#allocation0], 1295
    %961 = vst.msk [vmem:[%s960] sm:$0x10] %vm951, %v950
    %s962 = scalar_lea.vmem [#allocation0], 1358
    %963 = vst.msk [vmem:[%s962] sm:$0x20] %vm951, %v950
    %s964 = scalar_lea.vmem [#allocation0], 1421
    %965 = vst.msk [vmem:[%s964] sm:$0x40] %vm951, %v950
    %s966 = scalar_lea.vmem [#allocation0], 1484
    %967 = vst.msk [vmem:[%s966] sm:$0x80] %vm951, %v950
    %s968 = scalar_lea.vmem %s0, 24
    %v969 = vld [vmem:[%s968] sm:$0xff]
    %970 = vrot.lane.b32.xlu0 %v969, 84
    %v971 = vpop.permute.xlu0 %970
    %vm972 = vcmask 31744
    %s973 = scalar_lea.vmem [#allocation0], 1555
    %974 = vst.msk [vmem:[%s973] sm:$0x1] %vm972, %v971
    %s975 = scalar_lea.vmem [#allocation0], 1618
    %976 = vst.msk [vmem:[%s975] sm:$0x2] %vm972, %v971
    %s977 = scalar_lea.vmem [#allocation0], 1681
    %978 = vst.msk [vmem:[%s977] sm:$0x4] %vm972, %v971
    %s979 = scalar_lea.vmem [#allocation0], 1744
    %980 = vst.msk [vmem:[%s979] sm:$0x8] %vm972, %v971
    %s981 = scalar_lea.vmem [#allocation0], 1807
    %982 = vst.msk [vmem:[%s981] sm:$0x10] %vm972, %v971
    %s983 = scalar_lea.vmem [#allocation0], 1870
    %984 = vst.msk [vmem:[%s983] sm:$0x20] %vm972, %v971
    %s985 = scalar_lea.vmem [#allocation0], 1933
    %986 = vst.msk [vmem:[%s985] sm:$0x40] %vm972, %v971
    %s987 = scalar_lea.vmem [#allocation0], 1996
    %988 = vst.msk [vmem:[%s987] sm:$0x80] %vm972, %v971
    %v989 = vld [vmem:[%s0] sm:$0xff]
    %990 = vrot.lane.b32.xlu0 %v989, 80
    %v991 = vpop.permute.xlu0 %990
    %vm992 = vcmask 31744
    %s993 = scalar_lea.vmem [#allocation0], 24
    %994 = vst.msk [vmem:[%s993] sm:$0x1] %vm992, %v991
    %s995 = scalar_lea.vmem [#allocation0], 87
    %996 = vst.msk [vmem:[%s995] sm:$0x2] %vm992, %v991
    %s997 = scalar_lea.vmem [#allocation0], 150
    %998 = vst.msk [vmem:[%s997] sm:$0x4] %vm992, %v991
    %s999 = scalar_lea.vmem [#allocation0], 213
    %1000 = vst.msk [vmem:[%s999] sm:$0x8] %vm992, %v991
    %s1001 = scalar_lea.vmem [#allocation0], 276
    %1002 = vst.msk [vmem:[%s1001] sm:$0x10] %vm992, %v991
    %s1003 = scalar_lea.vmem [#allocation0], 339
    %1004 = vst.msk [vmem:[%s1003] sm:$0x20] %vm992, %v991
    %s1005 = scalar_lea.vmem [#allocation0], 402
    %1006 = vst.msk [vmem:[%s1005] sm:$0x40] %vm992, %v991
    %s1007 = scalar_lea.vmem [#allocation0], 465
    %1008 = vst.msk [vmem:[%s1007] sm:$0x80] %vm992, %v991
    %s1009 = scalar_lea.vmem %s0, 8
    %v1010 = vld [vmem:[%s1009] sm:$0xff]
    %1011 = vrot.lane.b32.xlu0 %v1010, 80
    %v1012 = vpop.permute.xlu0 %1011
    %vm1013 = vcmask 31744
    %s1014 = scalar_lea.vmem [#allocation0], 536
    %1015 = vst.msk [vmem:[%s1014] sm:$0x1] %vm1013, %v1012
    %s1016 = scalar_lea.vmem [#allocation0], 599
    %1017 = vst.msk [vmem:[%s1016] sm:$0x2] %vm1013, %v1012
    %s1018 = scalar_lea.vmem [#allocation0], 662
    %1019 = vst.msk [vmem:[%s1018] sm:$0x4] %vm1013, %v1012
    %s1020 = scalar_lea.vmem [#allocation0], 725
    %1021 = vst.msk [vmem:[%s1020] sm:$0x8] %vm1013, %v1012
    %s1022 = scalar_lea.vmem [#allocation0], 788
    %1023 = vst.msk [vmem:[%s1022] sm:$0x10] %vm1013, %v1012
    %s1024 = scalar_lea.vmem [#allocation0], 851
    %1025 = vst.msk [vmem:[%s1024] sm:$0x20] %vm1013, %v1012
    %s1026 = scalar_lea.vmem [#allocation0], 914
    %1027 = vst.msk [vmem:[%s1026] sm:$0x40] %vm1013, %v1012
    %s1028 = scalar_lea.vmem [#allocation0], 977
    %1029 = vst.msk [vmem:[%s1028] sm:$0x80] %vm1013, %v1012
    %s1030 = scalar_lea.vmem %s0, 16
    %v1031 = vld [vmem:[%s1030] sm:$0xff]
    %1032 = vrot.lane.b32.xlu0 %v1031, 80
    %v1033 = vpop.permute.xlu0 %1032
    %vm1034 = vcmask 31744
    %s1035 = scalar_lea.vmem [#allocation0], 1048
    %1036 = vst.msk [vmem:[%s1035] sm:$0x1] %vm1034, %v1033
    %s1037 = scalar_lea.vmem [#allocation0], 1111
    %1038 = vst.msk [vmem:[%s1037] sm:$0x2] %vm1034, %v1033
    %s1039 = scalar_lea.vmem [#allocation0], 1174
    %1040 = vst.msk [vmem:[%s1039] sm:$0x4] %vm1034, %v1033
    %s1041 = scalar_lea.vmem [#allocation0], 1237
    %1042 = vst.msk [vmem:[%s1041] sm:$0x8] %vm1034, %v1033
    %s1043 = scalar_lea.vmem [#allocation0], 1300
    %1044 = vst.msk [vmem:[%s1043] sm:$0x10] %vm1034, %v1033
    %s1045 = scalar_lea.vmem [#allocation0], 1363
    %1046 = vst.msk [vmem:[%s1045] sm:$0x20] %vm1034, %v1033
    %s1047 = scalar_lea.vmem [#allocation0], 1426
    %1048 = vst.msk [vmem:[%s1047] sm:$0x40] %vm1034, %v1033
    %s1049 = scalar_lea.vmem [#allocation0], 1489
    %1050 = vst.msk [vmem:[%s1049] sm:$0x80] %vm1034, %v1033
    %s1051 = scalar_lea.vmem %s0, 24
    %v1052 = vld [vmem:[%s1051] sm:$0xff]
    %1053 = vrot.lane.b32.xlu0 %v1052, 80
    %v1054 = vpop.permute.xlu0 %1053
    %vm1055 = vcmask 31744
    %s1056 = scalar_lea.vmem [#allocation0], 1560
    %1057 = vst.msk [vmem:[%s1056] sm:$0x1] %vm1055, %v1054
    %s1058 = scalar_lea.vmem [#allocation0], 1623
    %1059 = vst.msk [vmem:[%s1058] sm:$0x2] %vm1055, %v1054
    %s1060 = scalar_lea.vmem [#allocation0], 1686
    %1061 = vst.msk [vmem:[%s1060] sm:$0x4] %vm1055, %v1054
    %s1062 = scalar_lea.vmem [#allocation0], 1749
    %1063 = vst.msk [vmem:[%s1062] sm:$0x8] %vm1055, %v1054
    %s1064 = scalar_lea.vmem [#allocation0], 1812
    %1065 = vst.msk [vmem:[%s1064] sm:$0x10] %vm1055, %v1054
    %s1066 = scalar_lea.vmem [#allocation0], 1875
    %1067 = vst.msk [vmem:[%s1066] sm:$0x20] %vm1055, %v1054
    %s1068 = scalar_lea.vmem [#allocation0], 1938
    %1069 = vst.msk [vmem:[%s1068] sm:$0x40] %vm1055, %v1054
    %s1070 = scalar_lea.vmem [#allocation0], 2001
    %1071 = vst.msk [vmem:[%s1070] sm:$0x80] %vm1055, %v1054
    %v1072 = vld [vmem:[%s0] sm:$0xff]
    %1073 = vrot.lane.b32.xlu0 %v1072, 76
    %v1074 = vpop.permute.xlu0 %1073
    %vm1075 = vcmask 31744
    %s1076 = scalar_lea.vmem [#allocation0], 25
    %1077 = vst.msk [vmem:[%s1076] sm:$0x1] %vm1075, %v1074
    %s1078 = scalar_lea.vmem [#allocation0], 88
    %1079 = vst.msk [vmem:[%s1078] sm:$0x2] %vm1075, %v1074
    %s1080 = scalar_lea.vmem [#allocation0], 151
    %1081 = vst.msk [vmem:[%s1080] sm:$0x4] %vm1075, %v1074
    %s1082 = scalar_lea.vmem [#allocation0], 214
    %1083 = vst.msk [vmem:[%s1082] sm:$0x8] %vm1075, %v1074
    %s1084 = scalar_lea.vmem [#allocation0], 277
    %1085 = vst.msk [vmem:[%s1084] sm:$0x10] %vm1075, %v1074
    %s1086 = scalar_lea.vmem [#allocation0], 340
    %1087 = vst.msk [vmem:[%s1086] sm:$0x20] %vm1075, %v1074
    %s1088 = scalar_lea.vmem [#allocation0], 403
    %1089 = vst.msk [vmem:[%s1088] sm:$0x40] %vm1075, %v1074
    %s1090 = scalar_lea.vmem [#allocation0], 466
    %1091 = vst.msk [vmem:[%s1090] sm:$0x80] %vm1075, %v1074
    %s1092 = scalar_lea.vmem %s0, 8
    %v1093 = vld [vmem:[%s1092] sm:$0xff]
    %1094 = vrot.lane.b32.xlu0 %v1093, 76
    %v1095 = vpop.permute.xlu0 %1094
    %vm1096 = vcmask 31744
    %s1097 = scalar_lea.vmem [#allocation0], 537
    %1098 = vst.msk [vmem:[%s1097] sm:$0x1] %vm1096, %v1095
    %s1099 = scalar_lea.vmem [#allocation0], 600
    %1100 = vst.msk [vmem:[%s1099] sm:$0x2] %vm1096, %v1095
    %s1101 = scalar_lea.vmem [#allocation0], 663
    %1102 = vst.msk [vmem:[%s1101] sm:$0x4] %vm1096, %v1095
    %s1103 = scalar_lea.vmem [#allocation0], 726
    %1104 = vst.msk [vmem:[%s1103] sm:$0x8] %vm1096, %v1095
    %s1105 = scalar_lea.vmem [#allocation0], 789
    %1106 = vst.msk [vmem:[%s1105] sm:$0x10] %vm1096, %v1095
    %s1107 = scalar_lea.vmem [#allocation0], 852
    %1108 = vst.msk [vmem:[%s1107] sm:$0x20] %vm1096, %v1095
    %s1109 = scalar_lea.vmem [#allocation0], 915
    %1110 = vst.msk [vmem:[%s1109] sm:$0x40] %vm1096, %v1095
    %s1111 = scalar_lea.vmem [#allocation0], 978
    %1112 = vst.msk [vmem:[%s1111] sm:$0x80] %vm1096, %v1095
    %s1113 = scalar_lea.vmem %s0, 16
    %v1114 = vld [vmem:[%s1113] sm:$0xff]
    %1115 = vrot.lane.b32.xlu0 %v1114, 76
    %v1116 = vpop.permute.xlu0 %1115
    %vm1117 = vcmask 31744
    %s1118 = scalar_lea.vmem [#allocation0], 1049
    %1119 = vst.msk [vmem:[%s1118] sm:$0x1] %vm1117, %v1116
    %s1120 = scalar_lea.vmem [#allocation0], 1112
    %1121 = vst.msk [vmem:[%s1120] sm:$0x2] %vm1117, %v1116
    %s1122 = scalar_lea.vmem [#allocation0], 1175
    %1123 = vst.msk [vmem:[%s1122] sm:$0x4] %vm1117, %v1116
    %s1124 = scalar_lea.vmem [#allocation0], 1238
    %1125 = vst.msk [vmem:[%s1124] sm:$0x8] %vm1117, %v1116
    %s1126 = scalar_lea.vmem [#allocation0], 1301
    %1127 = vst.msk [vmem:[%s1126] sm:$0x10] %vm1117, %v1116
    %s1128 = scalar_lea.vmem [#allocation0], 1364
    %1129 = vst.msk [vmem:[%s1128] sm:$0x20] %vm1117, %v1116
    %s1130 = scalar_lea.vmem [#allocation0], 1427
    %1131 = vst.msk [vmem:[%s1130] sm:$0x40] %vm1117, %v1116
    %s1132 = scalar_lea.vmem [#allocation0], 1490
    %1133 = vst.msk [vmem:[%s1132] sm:$0x80] %vm1117, %v1116
    %s1134 = scalar_lea.vmem %s0, 24
    %v1135 = vld [vmem:[%s1134] sm:$0xff]
    %1136 = vrot.lane.b32.xlu0 %v1135, 76
    %v1137 = vpop.permute.xlu0 %1136
    %vm1138 = vcmask 31744
    %s1139 = scalar_lea.vmem [#allocation0], 1561
    %1140 = vst.msk [vmem:[%s1139] sm:$0x1] %vm1138, %v1137
    %s1141 = scalar_lea.vmem [#allocation0], 1624
    %1142 = vst.msk [vmem:[%s1141] sm:$0x2] %vm1138, %v1137
    %s1143 = scalar_lea.vmem [#allocation0], 1687
    %1144 = vst.msk [vmem:[%s1143] sm:$0x4] %vm1138, %v1137
    %s1145 = scalar_lea.vmem [#allocation0], 1750
    %1146 = vst.msk [vmem:[%s1145] sm:$0x8] %vm1138, %v1137
    %s1147 = scalar_lea.vmem [#allocation0], 1813
    %1148 = vst.msk [vmem:[%s1147] sm:$0x10] %vm1138, %v1137
    %s1149 = scalar_lea.vmem [#allocation0], 1876
    %1150 = vst.msk [vmem:[%s1149] sm:$0x20] %vm1138, %v1137
    %s1151 = scalar_lea.vmem [#allocation0], 1939
    %1152 = vst.msk [vmem:[%s1151] sm:$0x40] %vm1138, %v1137
    %s1153 = scalar_lea.vmem [#allocation0], 2002
    %1154 = vst.msk [vmem:[%s1153] sm:$0x80] %vm1138, %v1137
    %v1155 = vld [vmem:[%s0] sm:$0xff]
    %1156 = vrot.lane.b32.xlu0 %v1155, 72
    %v1157 = vpop.permute.xlu0 %1156
    %vm1158 = vcmask 31744
    %s1159 = scalar_lea.vmem [#allocation0], 26
    %1160 = vst.msk [vmem:[%s1159] sm:$0x1] %vm1158, %v1157
    %s1161 = scalar_lea.vmem [#allocation0], 89
    %1162 = vst.msk [vmem:[%s1161] sm:$0x2] %vm1158, %v1157
    %s1163 = scalar_lea.vmem [#allocation0], 152
    %1164 = vst.msk [vmem:[%s1163] sm:$0x4] %vm1158, %v1157
    %s1165 = scalar_lea.vmem [#allocation0], 215
    %1166 = vst.msk [vmem:[%s1165] sm:$0x8] %vm1158, %v1157
    %s1167 = scalar_lea.vmem [#allocation0], 278
    %1168 = vst.msk [vmem:[%s1167] sm:$0x10] %vm1158, %v1157
    %s1169 = scalar_lea.vmem [#allocation0], 341
    %1170 = vst.msk [vmem:[%s1169] sm:$0x20] %vm1158, %v1157
    %s1171 = scalar_lea.vmem [#allocation0], 404
    %1172 = vst.msk [vmem:[%s1171] sm:$0x40] %vm1158, %v1157
    %s1173 = scalar_lea.vmem [#allocation0], 467
    %1174 = vst.msk [vmem:[%s1173] sm:$0x80] %vm1158, %v1157
    %s1175 = scalar_lea.vmem %s0, 8
    %v1176 = vld [vmem:[%s1175] sm:$0xff]
    %1177 = vrot.lane.b32.xlu0 %v1176, 72
    %v1178 = vpop.permute.xlu0 %1177
    %vm1179 = vcmask 31744
    %s1180 = scalar_lea.vmem [#allocation0], 538
    %1181 = vst.msk [vmem:[%s1180] sm:$0x1] %vm1179, %v1178
    %s1182 = scalar_lea.vmem [#allocation0], 601
    %1183 = vst.msk [vmem:[%s1182] sm:$0x2] %vm1179, %v1178
    %s1184 = scalar_lea.vmem [#allocation0], 664
    %1185 = vst.msk [vmem:[%s1184] sm:$0x4] %vm1179, %v1178
    %s1186 = scalar_lea.vmem [#allocation0], 727
    %1187 = vst.msk [vmem:[%s1186] sm:$0x8] %vm1179, %v1178
    %s1188 = scalar_lea.vmem [#allocation0], 790
    %1189 = vst.msk [vmem:[%s1188] sm:$0x10] %vm1179, %v1178
    %s1190 = scalar_lea.vmem [#allocation0], 853
    %1191 = vst.msk [vmem:[%s1190] sm:$0x20] %vm1179, %v1178
    %s1192 = scalar_lea.vmem [#allocation0], 916
    %1193 = vst.msk [vmem:[%s1192] sm:$0x40] %vm1179, %v1178
    %s1194 = scalar_lea.vmem [#allocation0], 979
    %1195 = vst.msk [vmem:[%s1194] sm:$0x80] %vm1179, %v1178
    %s1196 = scalar_lea.vmem %s0, 16
    %v1197 = vld [vmem:[%s1196] sm:$0xff]
    %1198 = vrot.lane.b32.xlu0 %v1197, 72
    %v1199 = vpop.permute.xlu0 %1198
    %vm1200 = vcmask 31744
    %s1201 = scalar_lea.vmem [#allocation0], 1050
    %1202 = vst.msk [vmem:[%s1201] sm:$0x1] %vm1200, %v1199
    %s1203 = scalar_lea.vmem [#allocation0], 1113
    %1204 = vst.msk [vmem:[%s1203] sm:$0x2] %vm1200, %v1199
    %s1205 = scalar_lea.vmem [#allocation0], 1176
    %1206 = vst.msk [vmem:[%s1205] sm:$0x4] %vm1200, %v1199
    %s1207 = scalar_lea.vmem [#allocation0], 1239
    %1208 = vst.msk [vmem:[%s1207] sm:$0x8] %vm1200, %v1199
    %s1209 = scalar_lea.vmem [#allocation0], 1302
    %1210 = vst.msk [vmem:[%s1209] sm:$0x10] %vm1200, %v1199
    %s1211 = scalar_lea.vmem [#allocation0], 1365
    %1212 = vst.msk [vmem:[%s1211] sm:$0x20] %vm1200, %v1199
    %s1213 = scalar_lea.vmem [#allocation0], 1428
    %1214 = vst.msk [vmem:[%s1213] sm:$0x40] %vm1200, %v1199
    %s1215 = scalar_lea.vmem [#allocation0], 1491
    %1216 = vst.msk [vmem:[%s1215] sm:$0x80] %vm1200, %v1199
    %s1217 = scalar_lea.vmem %s0, 24
    %v1218 = vld [vmem:[%s1217] sm:$0xff]
    %1219 = vrot.lane.b32.xlu0 %v1218, 72
    %v1220 = vpop.permute.xlu0 %1219
    %vm1221 = vcmask 31744
    %s1222 = scalar_lea.vmem [#allocation0], 1562
    %1223 = vst.msk [vmem:[%s1222] sm:$0x1] %vm1221, %v1220
    %s1224 = scalar_lea.vmem [#allocation0], 1625
    %1225 = vst.msk [vmem:[%s1224] sm:$0x2] %vm1221, %v1220
    %s1226 = scalar_lea.vmem [#allocation0], 1688
    %1227 = vst.msk [vmem:[%s1226] sm:$0x4] %vm1221, %v1220
    %s1228 = scalar_lea.vmem [#allocation0], 1751
    %1229 = vst.msk [vmem:[%s1228] sm:$0x8] %vm1221, %v1220
    %s1230 = scalar_lea.vmem [#allocation0], 1814
    %1231 = vst.msk [vmem:[%s1230] sm:$0x10] %vm1221, %v1220
    %s1232 = scalar_lea.vmem [#allocation0], 1877
    %1233 = vst.msk [vmem:[%s1232] sm:$0x20] %vm1221, %v1220
    %s1234 = scalar_lea.vmem [#allocation0], 1940
    %1235 = vst.msk [vmem:[%s1234] sm:$0x40] %vm1221, %v1220
    %s1236 = scalar_lea.vmem [#allocation0], 2003
    %1237 = vst.msk [vmem:[%s1236] sm:$0x80] %vm1221, %v1220
    %v1238 = vld [vmem:[%s0] sm:$0xff]
    %1239 = vrot.lane.b32.xlu0 %v1238, 68
    %v1240 = vpop.permute.xlu0 %1239
    %vm1241 = vcmask 31744
    %s1242 = scalar_lea.vmem [#allocation0], 27
    %1243 = vst.msk [vmem:[%s1242] sm:$0x1] %vm1241, %v1240
    %s1244 = scalar_lea.vmem [#allocation0], 90
    %1245 = vst.msk [vmem:[%s1244] sm:$0x2] %vm1241, %v1240
    %s1246 = scalar_lea.vmem [#allocation0], 153
    %1247 = vst.msk [vmem:[%s1246] sm:$0x4] %vm1241, %v1240
    %s1248 = scalar_lea.vmem [#allocation0], 216
    %1249 = vst.msk [vmem:[%s1248] sm:$0x8] %vm1241, %v1240
    %s1250 = scalar_lea.vmem [#allocation0], 279
    %1251 = vst.msk [vmem:[%s1250] sm:$0x10] %vm1241, %v1240
    %s1252 = scalar_lea.vmem [#allocation0], 342
    %1253 = vst.msk [vmem:[%s1252] sm:$0x20] %vm1241, %v1240
    %s1254 = scalar_lea.vmem [#allocation0], 405
    %1255 = vst.msk [vmem:[%s1254] sm:$0x40] %vm1241, %v1240
    %s1256 = scalar_lea.vmem [#allocation0], 468
    %1257 = vst.msk [vmem:[%s1256] sm:$0x80] %vm1241, %v1240
    %s1258 = scalar_lea.vmem %s0, 8
    %v1259 = vld [vmem:[%s1258] sm:$0xff]
    %1260 = vrot.lane.b32.xlu0 %v1259, 68
    %v1261 = vpop.permute.xlu0 %1260
    %vm1262 = vcmask 31744
    %s1263 = scalar_lea.vmem [#allocation0], 539
    %1264 = vst.msk [vmem:[%s1263] sm:$0x1] %vm1262, %v1261
    %s1265 = scalar_lea.vmem [#allocation0], 602
    %1266 = vst.msk [vmem:[%s1265] sm:$0x2] %vm1262, %v1261
    %s1267 = scalar_lea.vmem [#allocation0], 665
    %1268 = vst.msk [vmem:[%s1267] sm:$0x4] %vm1262, %v1261
    %s1269 = scalar_lea.vmem [#allocation0], 728
    %1270 = vst.msk [vmem:[%s1269] sm:$0x8] %vm1262, %v1261
    %s1271 = scalar_lea.vmem [#allocation0], 791
    %1272 = vst.msk [vmem:[%s1271] sm:$0x10] %vm1262, %v1261
    %s1273 = scalar_lea.vmem [#allocation0], 854
    %1274 = vst.msk [vmem:[%s1273] sm:$0x20] %vm1262, %v1261
    %s1275 = scalar_lea.vmem [#allocation0], 917
    %1276 = vst.msk [vmem:[%s1275] sm:$0x40] %vm1262, %v1261
    %s1277 = scalar_lea.vmem [#allocation0], 980
    %1278 = vst.msk [vmem:[%s1277] sm:$0x80] %vm1262, %v1261
    %s1279 = scalar_lea.vmem %s0, 16
    %v1280 = vld [vmem:[%s1279] sm:$0xff]
    %1281 = vrot.lane.b32.xlu0 %v1280, 68
    %v1282 = vpop.permute.xlu0 %1281
    %vm1283 = vcmask 31744
    %s1284 = scalar_lea.vmem [#allocation0], 1051
    %1285 = vst.msk [vmem:[%s1284] sm:$0x1] %vm1283, %v1282
    %s1286 = scalar_lea.vmem [#allocation0], 1114
    %1287 = vst.msk [vmem:[%s1286] sm:$0x2] %vm1283, %v1282
    %s1288 = scalar_lea.vmem [#allocation0], 1177
    %1289 = vst.msk [vmem:[%s1288] sm:$0x4] %vm1283, %v1282
    %s1290 = scalar_lea.vmem [#allocation0], 1240
    %1291 = vst.msk [vmem:[%s1290] sm:$0x8] %vm1283, %v1282
    %s1292 = scalar_lea.vmem [#allocation0], 1303
    %1293 = vst.msk [vmem:[%s1292] sm:$0x10] %vm1283, %v1282
    %s1294 = scalar_lea.vmem [#allocation0], 1366
    %1295 = vst.msk [vmem:[%s1294] sm:$0x20] %vm1283, %v1282
    %s1296 = scalar_lea.vmem [#allocation0], 1429
    %1297 = vst.msk [vmem:[%s1296] sm:$0x40] %vm1283, %v1282
    %s1298 = scalar_lea.vmem [#allocation0], 1492
    %1299 = vst.msk [vmem:[%s1298] sm:$0x80] %vm1283, %v1282
    %s1300 = scalar_lea.vmem %s0, 24
    %v1301 = vld [vmem:[%s1300] sm:$0xff]
    %1302 = vrot.lane.b32.xlu0 %v1301, 68
    %v1303 = vpop.permute.xlu0 %1302
    %vm1304 = vcmask 31744
    %s1305 = scalar_lea.vmem [#allocation0], 1563
    %1306 = vst.msk [vmem:[%s1305] sm:$0x1] %vm1304, %v1303
    %s1307 = scalar_lea.vmem [#allocation0], 1626
    %1308 = vst.msk [vmem:[%s1307] sm:$0x2] %vm1304, %v1303
    %s1309 = scalar_lea.vmem [#allocation0], 1689
    %1310 = vst.msk [vmem:[%s1309] sm:$0x4] %vm1304, %v1303
    %s1311 = scalar_lea.vmem [#allocation0], 1752
    %1312 = vst.msk [vmem:[%s1311] sm:$0x8] %vm1304, %v1303
    %s1313 = scalar_lea.vmem [#allocation0], 1815
    %1314 = vst.msk [vmem:[%s1313] sm:$0x10] %vm1304, %v1303
    %s1315 = scalar_lea.vmem [#allocation0], 1878
    %1316 = vst.msk [vmem:[%s1315] sm:$0x20] %vm1304, %v1303
    %s1317 = scalar_lea.vmem [#allocation0], 1941
    %1318 = vst.msk [vmem:[%s1317] sm:$0x40] %vm1304, %v1303
    %s1319 = scalar_lea.vmem [#allocation0], 2004
    %1320 = vst.msk [vmem:[%s1319] sm:$0x80] %vm1304, %v1303
    %v1321 = vld [vmem:[%s0] sm:$0xff]
    %1322 = vrot.lane.b32.xlu0 %v1321, 64
    %v1323 = vpop.permute.xlu0 %1322
    %vm1324 = vcmask 31744
    %s1325 = scalar_lea.vmem [#allocation0], 32
    %1326 = vst.msk [vmem:[%s1325] sm:$0x1] %vm1324, %v1323
    %s1327 = scalar_lea.vmem [#allocation0], 95
    %1328 = vst.msk [vmem:[%s1327] sm:$0x2] %vm1324, %v1323
    %s1329 = scalar_lea.vmem [#allocation0], 158
    %1330 = vst.msk [vmem:[%s1329] sm:$0x4] %vm1324, %v1323
    %s1331 = scalar_lea.vmem [#allocation0], 221
    %1332 = vst.msk [vmem:[%s1331] sm:$0x8] %vm1324, %v1323
    %s1333 = scalar_lea.vmem [#allocation0], 284
    %1334 = vst.msk [vmem:[%s1333] sm:$0x10] %vm1324, %v1323
    %s1335 = scalar_lea.vmem [#allocation0], 347
    %1336 = vst.msk [vmem:[%s1335] sm:$0x20] %vm1324, %v1323
    %s1337 = scalar_lea.vmem [#allocation0], 410
    %1338 = vst.msk [vmem:[%s1337] sm:$0x40] %vm1324, %v1323
    %s1339 = scalar_lea.vmem [#allocation0], 473
    %1340 = vst.msk [vmem:[%s1339] sm:$0x80] %vm1324, %v1323
    %s1341 = scalar_lea.vmem %s0, 8
    %v1342 = vld [vmem:[%s1341] sm:$0xff]
    %1343 = vrot.lane.b32.xlu0 %v1342, 64
    %v1344 = vpop.permute.xlu0 %1343
    %vm1345 = vcmask 31744
    %s1346 = scalar_lea.vmem [#allocation0], 544
    %1347 = vst.msk [vmem:[%s1346] sm:$0x1] %vm1345, %v1344
    %s1348 = scalar_lea.vmem [#allocation0], 607
    %1349 = vst.msk [vmem:[%s1348] sm:$0x2] %vm1345, %v1344
    %s1350 = scalar_lea.vmem [#allocation0], 670
    %1351 = vst.msk [vmem:[%s1350] sm:$0x4] %vm1345, %v1344
    %s1352 = scalar_lea.vmem [#allocation0], 733
    %1353 = vst.msk [vmem:[%s1352] sm:$0x8] %vm1345, %v1344
    %s1354 = scalar_lea.vmem [#allocation0], 796
    %1355 = vst.msk [vmem:[%s1354] sm:$0x10] %vm1345, %v1344
    %s1356 = scalar_lea.vmem [#allocation0], 859
    %1357 = vst.msk [vmem:[%s1356] sm:$0x20] %vm1345, %v1344
    %s1358 = scalar_lea.vmem [#allocation0], 922
    %1359 = vst.msk [vmem:[%s1358] sm:$0x40] %vm1345, %v1344
    %s1360 = scalar_lea.vmem [#allocation0], 985
    %1361 = vst.msk [vmem:[%s1360] sm:$0x80] %vm1345, %v1344
    %s1362 = scalar_lea.vmem %s0, 16
    %v1363 = vld [vmem:[%s1362] sm:$0xff]
    %1364 = vrot.lane.b32.xlu0 %v1363, 64
    %v1365 = vpop.permute.xlu0 %1364
    %vm1366 = vcmask 31744
    %s1367 = scalar_lea.vmem [#allocation0], 1056
    %1368 = vst.msk [vmem:[%s1367] sm:$0x1] %vm1366, %v1365
    %s1369 = scalar_lea.vmem [#allocation0], 1119
    %1370 = vst.msk [vmem:[%s1369] sm:$0x2] %vm1366, %v1365
    %s1371 = scalar_lea.vmem [#allocation0], 1182
    %1372 = vst.msk [vmem:[%s1371] sm:$0x4] %vm1366, %v1365
    %s1373 = scalar_lea.vmem [#allocation0], 1245
    %1374 = vst.msk [vmem:[%s1373] sm:$0x8] %vm1366, %v1365
    %s1375 = scalar_lea.vmem [#allocation0], 1308
    %1376 = vst.msk [vmem:[%s1375] sm:$0x10] %vm1366, %v1365
    %s1377 = scalar_lea.vmem [#allocation0], 1371
    %1378 = vst.msk [vmem:[%s1377] sm:$0x20] %vm1366, %v1365
    %s1379 = scalar_lea.vmem [#allocation0], 1434
    %1380 = vst.msk [vmem:[%s1379] sm:$0x40] %vm1366, %v1365
    %s1381 = scalar_lea.vmem [#allocation0], 1497
    %1382 = vst.msk [vmem:[%s1381] sm:$0x80] %vm1366, %v1365
    %s1383 = scalar_lea.vmem %s0, 24
    %v1384 = vld [vmem:[%s1383] sm:$0xff]
    %1385 = vrot.lane.b32.xlu0 %v1384, 64
    %v1386 = vpop.permute.xlu0 %1385
    %vm1387 = vcmask 31744
    %s1388 = scalar_lea.vmem [#allocation0], 1568
    %1389 = vst.msk [vmem:[%s1388] sm:$0x1] %vm1387, %v1386
    %s1390 = scalar_lea.vmem [#allocation0], 1631
    %1391 = vst.msk [vmem:[%s1390] sm:$0x2] %vm1387, %v1386
    %s1392 = scalar_lea.vmem [#allocation0], 1694
    %1393 = vst.msk [vmem:[%s1392] sm:$0x4] %vm1387, %v1386
    %s1394 = scalar_lea.vmem [#allocation0], 1757
    %1395 = vst.msk [vmem:[%s1394] sm:$0x8] %vm1387, %v1386
    %s1396 = scalar_lea.vmem [#allocation0], 1820
    %1397 = vst.msk [vmem:[%s1396] sm:$0x10] %vm1387, %v1386
    %s1398 = scalar_lea.vmem [#allocation0], 1883
    %1399 = vst.msk [vmem:[%s1398] sm:$0x20] %vm1387, %v1386
    %s1400 = scalar_lea.vmem [#allocation0], 1946
    %1401 = vst.msk [vmem:[%s1400] sm:$0x40] %vm1387, %v1386
    %s1402 = scalar_lea.vmem [#allocation0], 2009
    %1403 = vst.msk [vmem:[%s1402] sm:$0x80] %vm1387, %v1386
    %v1404 = vld [vmem:[%s0] sm:$0xff]
    %1405 = vrot.lane.b32.xlu0 %v1404, 60
    %v1406 = vpop.permute.xlu0 %1405
    %vm1407 = vcmask 31744
    %s1408 = scalar_lea.vmem [#allocation0], 33
    %1409 = vst.msk [vmem:[%s1408] sm:$0x1] %vm1407, %v1406
    %s1410 = scalar_lea.vmem [#allocation0], 96
    %1411 = vst.msk [vmem:[%s1410] sm:$0x2] %vm1407, %v1406
    %s1412 = scalar_lea.vmem [#allocation0], 159
    %1413 = vst.msk [vmem:[%s1412] sm:$0x4] %vm1407, %v1406
    %s1414 = scalar_lea.vmem [#allocation0], 222
    %1415 = vst.msk [vmem:[%s1414] sm:$0x8] %vm1407, %v1406
    %s1416 = scalar_lea.vmem [#allocation0], 285
    %1417 = vst.msk [vmem:[%s1416] sm:$0x10] %vm1407, %v1406
    %s1418 = scalar_lea.vmem [#allocation0], 348
    %1419 = vst.msk [vmem:[%s1418] sm:$0x20] %vm1407, %v1406
    %s1420 = scalar_lea.vmem [#allocation0], 411
    %1421 = vst.msk [vmem:[%s1420] sm:$0x40] %vm1407, %v1406
    %s1422 = scalar_lea.vmem [#allocation0], 474
    %1423 = vst.msk [vmem:[%s1422] sm:$0x80] %vm1407, %v1406
    %s1424 = scalar_lea.vmem %s0, 8
    %v1425 = vld [vmem:[%s1424] sm:$0xff]
    %1426 = vrot.lane.b32.xlu0 %v1425, 60
    %v1427 = vpop.permute.xlu0 %1426
    %vm1428 = vcmask 31744
    %s1429 = scalar_lea.vmem [#allocation0], 545
    %1430 = vst.msk [vmem:[%s1429] sm:$0x1] %vm1428, %v1427
    %s1431 = scalar_lea.vmem [#allocation0], 608
    %1432 = vst.msk [vmem:[%s1431] sm:$0x2] %vm1428, %v1427
    %s1433 = scalar_lea.vmem [#allocation0], 671
    %1434 = vst.msk [vmem:[%s1433] sm:$0x4] %vm1428, %v1427
    %s1435 = scalar_lea.vmem [#allocation0], 734
    %1436 = vst.msk [vmem:[%s1435] sm:$0x8] %vm1428, %v1427
    %s1437 = scalar_lea.vmem [#allocation0], 797
    %1438 = vst.msk [vmem:[%s1437] sm:$0x10] %vm1428, %v1427
    %s1439 = scalar_lea.vmem [#allocation0], 860
    %1440 = vst.msk [vmem:[%s1439] sm:$0x20] %vm1428, %v1427
    %s1441 = scalar_lea.vmem [#allocation0], 923
    %1442 = vst.msk [vmem:[%s1441] sm:$0x40] %vm1428, %v1427
    %s1443 = scalar_lea.vmem [#allocation0], 986
    %1444 = vst.msk [vmem:[%s1443] sm:$0x80] %vm1428, %v1427
    %s1445 = scalar_lea.vmem %s0, 16
    %v1446 = vld [vmem:[%s1445] sm:$0xff]
    %1447 = vrot.lane.b32.xlu0 %v1446, 60
    %v1448 = vpop.permute.xlu0 %1447
    %vm1449 = vcmask 31744
    %s1450 = scalar_lea.vmem [#allocation0], 1057
    %1451 = vst.msk [vmem:[%s1450] sm:$0x1] %vm1449, %v1448
    %s1452 = scalar_lea.vmem [#allocation0], 1120
    %1453 = vst.msk [vmem:[%s1452] sm:$0x2] %vm1449, %v1448
    %s1454 = scalar_lea.vmem [#allocation0], 1183
    %1455 = vst.msk [vmem:[%s1454] sm:$0x4] %vm1449, %v1448
    %s1456 = scalar_lea.vmem [#allocation0], 1246
    %1457 = vst.msk [vmem:[%s1456] sm:$0x8] %vm1449, %v1448
    %s1458 = scalar_lea.vmem [#allocation0], 1309
    %1459 = vst.msk [vmem:[%s1458] sm:$0x10] %vm1449, %v1448
    %s1460 = scalar_lea.vmem [#allocation0], 1372
    %1461 = vst.msk [vmem:[%s1460] sm:$0x20] %vm1449, %v1448
    %s1462 = scalar_lea.vmem [#allocation0], 1435
    %1463 = vst.msk [vmem:[%s1462] sm:$0x40] %vm1449, %v1448
    %s1464 = scalar_lea.vmem [#allocation0], 1498
    %1465 = vst.msk [vmem:[%s1464] sm:$0x80] %vm1449, %v1448
    %s1466 = scalar_lea.vmem %s0, 24
    %v1467 = vld [vmem:[%s1466] sm:$0xff]
    %1468 = vrot.lane.b32.xlu0 %v1467, 60
    %v1469 = vpop.permute.xlu0 %1468
    %vm1470 = vcmask 31744
    %s1471 = scalar_lea.vmem [#allocation0], 1569
    %1472 = vst.msk [vmem:[%s1471] sm:$0x1] %vm1470, %v1469
    %s1473 = scalar_lea.vmem [#allocation0], 1632
    %1474 = vst.msk [vmem:[%s1473] sm:$0x2] %vm1470, %v1469
    %s1475 = scalar_lea.vmem [#allocation0], 1695
    %1476 = vst.msk [vmem:[%s1475] sm:$0x4] %vm1470, %v1469
    %s1477 = scalar_lea.vmem [#allocation0], 1758
    %1478 = vst.msk [vmem:[%s1477] sm:$0x8] %vm1470, %v1469
    %s1479 = scalar_lea.vmem [#allocation0], 1821
    %1480 = vst.msk [vmem:[%s1479] sm:$0x10] %vm1470, %v1469
    %s1481 = scalar_lea.vmem [#allocation0], 1884
    %1482 = vst.msk [vmem:[%s1481] sm:$0x20] %vm1470, %v1469
    %s1483 = scalar_lea.vmem [#allocation0], 1947
    %1484 = vst.msk [vmem:[%s1483] sm:$0x40] %vm1470, %v1469
    %s1485 = scalar_lea.vmem [#allocation0], 2010
    %1486 = vst.msk [vmem:[%s1485] sm:$0x80] %vm1470, %v1469
    %v1487 = vld [vmem:[%s0] sm:$0xff]
    %1488 = vrot.lane.b32.xlu0 %v1487, 56
    %v1489 = vpop.permute.xlu0 %1488
    %vm1490 = vcmask 31744
    %s1491 = scalar_lea.vmem [#allocation0], 34
    %1492 = vst.msk [vmem:[%s1491] sm:$0x1] %vm1490, %v1489
    %s1493 = scalar_lea.vmem [#allocation0], 97
    %1494 = vst.msk [vmem:[%s1493] sm:$0x2] %vm1490, %v1489
    %s1495 = scalar_lea.vmem [#allocation0], 160
    %1496 = vst.msk [vmem:[%s1495] sm:$0x4] %vm1490, %v1489
    %s1497 = scalar_lea.vmem [#allocation0], 223
    %1498 = vst.msk [vmem:[%s1497] sm:$0x8] %vm1490, %v1489
    %s1499 = scalar_lea.vmem [#allocation0], 286
    %1500 = vst.msk [vmem:[%s1499] sm:$0x10] %vm1490, %v1489
    %s1501 = scalar_lea.vmem [#allocation0], 349
    %1502 = vst.msk [vmem:[%s1501] sm:$0x20] %vm1490, %v1489
    %s1503 = scalar_lea.vmem [#allocation0], 412
    %1504 = vst.msk [vmem:[%s1503] sm:$0x40] %vm1490, %v1489
    %s1505 = scalar_lea.vmem [#allocation0], 475
    %1506 = vst.msk [vmem:[%s1505] sm:$0x80] %vm1490, %v1489
    %s1507 = scalar_lea.vmem %s0, 8
    %v1508 = vld [vmem:[%s1507] sm:$0xff]
    %1509 = vrot.lane.b32.xlu0 %v1508, 56
    %v1510 = vpop.permute.xlu0 %1509
    %vm1511 = vcmask 31744
    %s1512 = scalar_lea.vmem [#allocation0], 546
    %1513 = vst.msk [vmem:[%s1512] sm:$0x1] %vm1511, %v1510
    %s1514 = scalar_lea.vmem [#allocation0], 609
    %1515 = vst.msk [vmem:[%s1514] sm:$0x2] %vm1511, %v1510
    %s1516 = scalar_lea.vmem [#allocation0], 672
    %1517 = vst.msk [vmem:[%s1516] sm:$0x4] %vm1511, %v1510
    %s1518 = scalar_lea.vmem [#allocation0], 735
    %1519 = vst.msk [vmem:[%s1518] sm:$0x8] %vm1511, %v1510
    %s1520 = scalar_lea.vmem [#allocation0], 798
    %1521 = vst.msk [vmem:[%s1520] sm:$0x10] %vm1511, %v1510
    %s1522 = scalar_lea.vmem [#allocation0], 861
    %1523 = vst.msk [vmem:[%s1522] sm:$0x20] %vm1511, %v1510
    %s1524 = scalar_lea.vmem [#allocation0], 924
    %1525 = vst.msk [vmem:[%s1524] sm:$0x40] %vm1511, %v1510
    %s1526 = scalar_lea.vmem [#allocation0], 987
    %1527 = vst.msk [vmem:[%s1526] sm:$0x80] %vm1511, %v1510
    %s1528 = scalar_lea.vmem %s0, 16
    %v1529 = vld [vmem:[%s1528] sm:$0xff]
    %1530 = vrot.lane.b32.xlu0 %v1529, 56
    %v1531 = vpop.permute.xlu0 %1530
    %vm1532 = vcmask 31744
    %s1533 = scalar_lea.vmem [#allocation0], 1058
    %1534 = vst.msk [vmem:[%s1533] sm:$0x1] %vm1532, %v1531
    %s1535 = scalar_lea.vmem [#allocation0], 1121
    %1536 = vst.msk [vmem:[%s1535] sm:$0x2] %vm1532, %v1531
    %s1537 = scalar_lea.vmem [#allocation0], 1184
    %1538 = vst.msk [vmem:[%s1537] sm:$0x4] %vm1532, %v1531
    %s1539 = scalar_lea.vmem [#allocation0], 1247
    %1540 = vst.msk [vmem:[%s1539] sm:$0x8] %vm1532, %v1531
    %s1541 = scalar_lea.vmem [#allocation0], 1310
    %1542 = vst.msk [vmem:[%s1541] sm:$0x10] %vm1532, %v1531
    %s1543 = scalar_lea.vmem [#allocation0], 1373
    %1544 = vst.msk [vmem:[%s1543] sm:$0x20] %vm1532, %v1531
    %s1545 = scalar_lea.vmem [#allocation0], 1436
    %1546 = vst.msk [vmem:[%s1545] sm:$0x40] %vm1532, %v1531
    %s1547 = scalar_lea.vmem [#allocation0], 1499
    %1548 = vst.msk [vmem:[%s1547] sm:$0x80] %vm1532, %v1531
    %s1549 = scalar_lea.vmem %s0, 24
    %v1550 = vld [vmem:[%s1549] sm:$0xff]
    %1551 = vrot.lane.b32.xlu0 %v1550, 56
    %v1552 = vpop.permute.xlu0 %1551
    %vm1553 = vcmask 31744
    %s1554 = scalar_lea.vmem [#allocation0], 1570
    %1555 = vst.msk [vmem:[%s1554] sm:$0x1] %vm1553, %v1552
    %s1556 = scalar_lea.vmem [#allocation0], 1633
    %1557 = vst.msk [vmem:[%s1556] sm:$0x2] %vm1553, %v1552
    %s1558 = scalar_lea.vmem [#allocation0], 1696
    %1559 = vst.msk [vmem:[%s1558] sm:$0x4] %vm1553, %v1552
    %s1560 = scalar_lea.vmem [#allocation0], 1759
    %1561 = vst.msk [vmem:[%s1560] sm:$0x8] %vm1553, %v1552
    %s1562 = scalar_lea.vmem [#allocation0], 1822
    %1563 = vst.msk [vmem:[%s1562] sm:$0x10] %vm1553, %v1552
    %s1564 = scalar_lea.vmem [#allocation0], 1885
    %1565 = vst.msk [vmem:[%s1564] sm:$0x20] %vm1553, %v1552
    %s1566 = scalar_lea.vmem [#allocation0], 1948
    %1567 = vst.msk [vmem:[%s1566] sm:$0x40] %vm1553, %v1552
    %s1568 = scalar_lea.vmem [#allocation0], 2011
    %1569 = vst.msk [vmem:[%s1568] sm:$0x80] %vm1553, %v1552
    %v1570 = vld [vmem:[%s0] sm:$0xff]
    %1571 = vrot.lane.b32.xlu0 %v1570, 52
    %v1572 = vpop.permute.xlu0 %1571
    %vm1573 = vcmask 31744
    %s1574 = scalar_lea.vmem [#allocation0], 35
    %1575 = vst.msk [vmem:[%s1574] sm:$0x1] %vm1573, %v1572
    %s1576 = scalar_lea.vmem [#allocation0], 98
    %1577 = vst.msk [vmem:[%s1576] sm:$0x2] %vm1573, %v1572
    %s1578 = scalar_lea.vmem [#allocation0], 161
    %1579 = vst.msk [vmem:[%s1578] sm:$0x4] %vm1573, %v1572
    %s1580 = scalar_lea.vmem [#allocation0], 224
    %1581 = vst.msk [vmem:[%s1580] sm:$0x8] %vm1573, %v1572
    %s1582 = scalar_lea.vmem [#allocation0], 287
    %1583 = vst.msk [vmem:[%s1582] sm:$0x10] %vm1573, %v1572
    %s1584 = scalar_lea.vmem [#allocation0], 350
    %1585 = vst.msk [vmem:[%s1584] sm:$0x20] %vm1573, %v1572
    %s1586 = scalar_lea.vmem [#allocation0], 413
    %1587 = vst.msk [vmem:[%s1586] sm:$0x40] %vm1573, %v1572
    %s1588 = scalar_lea.vmem [#allocation0], 476
    %1589 = vst.msk [vmem:[%s1588] sm:$0x80] %vm1573, %v1572
    %s1590 = scalar_lea.vmem %s0, 8
    %v1591 = vld [vmem:[%s1590] sm:$0xff]
    %1592 = vrot.lane.b32.xlu0 %v1591, 52
    %v1593 = vpop.permute.xlu0 %1592
    %vm1594 = vcmask 31744
    %s1595 = scalar_lea.vmem [#allocation0], 547
    %1596 = vst.msk [vmem:[%s1595] sm:$0x1] %vm1594, %v1593
    %s1597 = scalar_lea.vmem [#allocation0], 610
    %1598 = vst.msk [vmem:[%s1597] sm:$0x2] %vm1594, %v1593
    %s1599 = scalar_lea.vmem [#allocation0], 673
    %1600 = vst.msk [vmem:[%s1599] sm:$0x4] %vm1594, %v1593
    %s1601 = scalar_lea.vmem [#allocation0], 736
    %1602 = vst.msk [vmem:[%s1601] sm:$0x8] %vm1594, %v1593
    %s1603 = scalar_lea.vmem [#allocation0], 799
    %1604 = vst.msk [vmem:[%s1603] sm:$0x10] %vm1594, %v1593
    %s1605 = scalar_lea.vmem [#allocation0], 862
    %1606 = vst.msk [vmem:[%s1605] sm:$0x20] %vm1594, %v1593
    %s1607 = scalar_lea.vmem [#allocation0], 925
    %1608 = vst.msk [vmem:[%s1607] sm:$0x40] %vm1594, %v1593
    %s1609 = scalar_lea.vmem [#allocation0], 988
    %1610 = vst.msk [vmem:[%s1609] sm:$0x80] %vm1594, %v1593
    %s1611 = scalar_lea.vmem %s0, 16
    %v1612 = vld [vmem:[%s1611] sm:$0xff]
    %1613 = vrot.lane.b32.xlu0 %v1612, 52
    %v1614 = vpop.permute.xlu0 %1613
    %vm1615 = vcmask 31744
    %s1616 = scalar_lea.vmem [#allocation0], 1059
    %1617 = vst.msk [vmem:[%s1616] sm:$0x1] %vm1615, %v1614
    %s1618 = scalar_lea.vmem [#allocation0], 1122
    %1619 = vst.msk [vmem:[%s1618] sm:$0x2] %vm1615, %v1614
    %s1620 = scalar_lea.vmem [#allocation0], 1185
    %1621 = vst.msk [vmem:[%s1620] sm:$0x4] %vm1615, %v1614
    %s1622 = scalar_lea.vmem [#allocation0], 1248
    %1623 = vst.msk [vmem:[%s1622] sm:$0x8] %vm1615, %v1614
    %s1624 = scalar_lea.vmem [#allocation0], 1311
    %1625 = vst.msk [vmem:[%s1624] sm:$0x10] %vm1615, %v1614
    %s1626 = scalar_lea.vmem [#allocation0], 1374
    %1627 = vst.msk [vmem:[%s1626] sm:$0x20] %vm1615, %v1614
    %s1628 = scalar_lea.vmem [#allocation0], 1437
    %1629 = vst.msk [vmem:[%s1628] sm:$0x40] %vm1615, %v1614
    %s1630 = scalar_lea.vmem [#allocation0], 1500
    %1631 = vst.msk [vmem:[%s1630] sm:$0x80] %vm1615, %v1614
    %s1632 = scalar_lea.vmem %s0, 24
    %v1633 = vld [vmem:[%s1632] sm:$0xff]
    %1634 = vrot.lane.b32.xlu0 %v1633, 52
    %v1635 = vpop.permute.xlu0 %1634
    %vm1636 = vcmask 31744
    %s1637 = scalar_lea.vmem [#allocation0], 1571
    %1638 = vst.msk [vmem:[%s1637] sm:$0x1] %vm1636, %v1635
    %s1639 = scalar_lea.vmem [#allocation0], 1634
    %1640 = vst.msk [vmem:[%s1639] sm:$0x2] %vm1636, %v1635
    %s1641 = scalar_lea.vmem [#allocation0], 1697
    %1642 = vst.msk [vmem:[%s1641] sm:$0x4] %vm1636, %v1635
    %s1643 = scalar_lea.vmem [#allocation0], 1760
    %1644 = vst.msk [vmem:[%s1643] sm:$0x8] %vm1636, %v1635
    %s1645 = scalar_lea.vmem [#allocation0], 1823
    %1646 = vst.msk [vmem:[%s1645] sm:$0x10] %vm1636, %v1635
    %s1647 = scalar_lea.vmem [#allocation0], 1886
    %1648 = vst.msk [vmem:[%s1647] sm:$0x20] %vm1636, %v1635
    %s1649 = scalar_lea.vmem [#allocation0], 1949
    %1650 = vst.msk [vmem:[%s1649] sm:$0x40] %vm1636, %v1635
    %s1651 = scalar_lea.vmem [#allocation0], 2012
    %1652 = vst.msk [vmem:[%s1651] sm:$0x80] %vm1636, %v1635
    %v1653 = vld [vmem:[%s0] sm:$0xff]
    %1654 = vrot.lane.b32.xlu0 %v1653, 48
    %v1655 = vpop.permute.xlu0 %1654
    %vm1656 = vcmask 31744
    %s1657 = scalar_lea.vmem [#allocation0], 40
    %1658 = vst.msk [vmem:[%s1657] sm:$0x1] %vm1656, %v1655
    %s1659 = scalar_lea.vmem [#allocation0], 103
    %1660 = vst.msk [vmem:[%s1659] sm:$0x2] %vm1656, %v1655
    %s1661 = scalar_lea.vmem [#allocation0], 166
    %1662 = vst.msk [vmem:[%s1661] sm:$0x4] %vm1656, %v1655
    %s1663 = scalar_lea.vmem [#allocation0], 229
    %1664 = vst.msk [vmem:[%s1663] sm:$0x8] %vm1656, %v1655
    %s1665 = scalar_lea.vmem [#allocation0], 292
    %1666 = vst.msk [vmem:[%s1665] sm:$0x10] %vm1656, %v1655
    %s1667 = scalar_lea.vmem [#allocation0], 355
    %1668 = vst.msk [vmem:[%s1667] sm:$0x20] %vm1656, %v1655
    %s1669 = scalar_lea.vmem [#allocation0], 418
    %1670 = vst.msk [vmem:[%s1669] sm:$0x40] %vm1656, %v1655
    %s1671 = scalar_lea.vmem [#allocation0], 481
    %1672 = vst.msk [vmem:[%s1671] sm:$0x80] %vm1656, %v1655
    %s1673 = scalar_lea.vmem %s0, 8
    %v1674 = vld [vmem:[%s1673] sm:$0xff]
    %1675 = vrot.lane.b32.xlu0 %v1674, 48
    %v1676 = vpop.permute.xlu0 %1675
    %vm1677 = vcmask 31744
    %s1678 = scalar_lea.vmem [#allocation0], 552
    %1679 = vst.msk [vmem:[%s1678] sm:$0x1] %vm1677, %v1676
    %s1680 = scalar_lea.vmem [#allocation0], 615
    %1681 = vst.msk [vmem:[%s1680] sm:$0x2] %vm1677, %v1676
    %s1682 = scalar_lea.vmem [#allocation0], 678
    %1683 = vst.msk [vmem:[%s1682] sm:$0x4] %vm1677, %v1676
    %s1684 = scalar_lea.vmem [#allocation0], 741
    %1685 = vst.msk [vmem:[%s1684] sm:$0x8] %vm1677, %v1676
    %s1686 = scalar_lea.vmem [#allocation0], 804
    %1687 = vst.msk [vmem:[%s1686] sm:$0x10] %vm1677, %v1676
    %s1688 = scalar_lea.vmem [#allocation0], 867
    %1689 = vst.msk [vmem:[%s1688] sm:$0x20] %vm1677, %v1676
    %s1690 = scalar_lea.vmem [#allocation0], 930
    %1691 = vst.msk [vmem:[%s1690] sm:$0x40] %vm1677, %v1676
    %s1692 = scalar_lea.vmem [#allocation0], 993
    %1693 = vst.msk [vmem:[%s1692] sm:$0x80] %vm1677, %v1676
    %s1694 = scalar_lea.vmem %s0, 16
    %v1695 = vld [vmem:[%s1694] sm:$0xff]
    %1696 = vrot.lane.b32.xlu0 %v1695, 48
    %v1697 = vpop.permute.xlu0 %1696
    %vm1698 = vcmask 31744
    %s1699 = scalar_lea.vmem [#allocation0], 1064
    %1700 = vst.msk [vmem:[%s1699] sm:$0x1] %vm1698, %v1697
    %s1701 = scalar_lea.vmem [#allocation0], 1127
    %1702 = vst.msk [vmem:[%s1701] sm:$0x2] %vm1698, %v1697
    %s1703 = scalar_lea.vmem [#allocation0], 1190
    %1704 = vst.msk [vmem:[%s1703] sm:$0x4] %vm1698, %v1697
    %s1705 = scalar_lea.vmem [#allocation0], 1253
    %1706 = vst.msk [vmem:[%s1705] sm:$0x8] %vm1698, %v1697
    %s1707 = scalar_lea.vmem [#allocation0], 1316
    %1708 = vst.msk [vmem:[%s1707] sm:$0x10] %vm1698, %v1697
    %s1709 = scalar_lea.vmem [#allocation0], 1379
    %1710 = vst.msk [vmem:[%s1709] sm:$0x20] %vm1698, %v1697
    %s1711 = scalar_lea.vmem [#allocation0], 1442
    %1712 = vst.msk [vmem:[%s1711] sm:$0x40] %vm1698, %v1697
    %s1713 = scalar_lea.vmem [#allocation0], 1505
    %1714 = vst.msk [vmem:[%s1713] sm:$0x80] %vm1698, %v1697
    %s1715 = scalar_lea.vmem %s0, 24
    %v1716 = vld [vmem:[%s1715] sm:$0xff]
    %1717 = vrot.lane.b32.xlu0 %v1716, 48
    %v1718 = vpop.permute.xlu0 %1717
    %vm1719 = vcmask 31744
    %s1720 = scalar_lea.vmem [#allocation0], 1576
    %1721 = vst.msk [vmem:[%s1720] sm:$0x1] %vm1719, %v1718
    %s1722 = scalar_lea.vmem [#allocation0], 1639
    %1723 = vst.msk [vmem:[%s1722] sm:$0x2] %vm1719, %v1718
    %s1724 = scalar_lea.vmem [#allocation0], 1702
    %1725 = vst.msk [vmem:[%s1724] sm:$0x4] %vm1719, %v1718
    %s1726 = scalar_lea.vmem [#allocation0], 1765
    %1727 = vst.msk [vmem:[%s1726] sm:$0x8] %vm1719, %v1718
    %s1728 = scalar_lea.vmem [#allocation0], 1828
    %1729 = vst.msk [vmem:[%s1728] sm:$0x10] %vm1719, %v1718
    %s1730 = scalar_lea.vmem [#allocation0], 1891
    %1731 = vst.msk [vmem:[%s1730] sm:$0x20] %vm1719, %v1718
    %s1732 = scalar_lea.vmem [#allocation0], 1954
    %1733 = vst.msk [vmem:[%s1732] sm:$0x40] %vm1719, %v1718
    %s1734 = scalar_lea.vmem [#allocation0], 2017
    %1735 = vst.msk [vmem:[%s1734] sm:$0x80] %vm1719, %v1718
    %v1736 = vld [vmem:[%s0] sm:$0xff]
    %1737 = vrot.lane.b32.xlu0 %v1736, 44
    %v1738 = vpop.permute.xlu0 %1737
    %vm1739 = vcmask 31744
    %s1740 = scalar_lea.vmem [#allocation0], 41
    %1741 = vst.msk [vmem:[%s1740] sm:$0x1] %vm1739, %v1738
    %s1742 = scalar_lea.vmem [#allocation0], 104
    %1743 = vst.msk [vmem:[%s1742] sm:$0x2] %vm1739, %v1738
    %s1744 = scalar_lea.vmem [#allocation0], 167
    %1745 = vst.msk [vmem:[%s1744] sm:$0x4] %vm1739, %v1738
    %s1746 = scalar_lea.vmem [#allocation0], 230
    %1747 = vst.msk [vmem:[%s1746] sm:$0x8] %vm1739, %v1738
    %s1748 = scalar_lea.vmem [#allocation0], 293
    %1749 = vst.msk [vmem:[%s1748] sm:$0x10] %vm1739, %v1738
    %s1750 = scalar_lea.vmem [#allocation0], 356
    %1751 = vst.msk [vmem:[%s1750] sm:$0x20] %vm1739, %v1738
    %s1752 = scalar_lea.vmem [#allocation0], 419
    %1753 = vst.msk [vmem:[%s1752] sm:$0x40] %vm1739, %v1738
    %s1754 = scalar_lea.vmem [#allocation0], 482
    %1755 = vst.msk [vmem:[%s1754] sm:$0x80] %vm1739, %v1738
    %s1756 = scalar_lea.vmem %s0, 8
    %v1757 = vld [vmem:[%s1756] sm:$0xff]
    %1758 = vrot.lane.b32.xlu0 %v1757, 44
    %v1759 = vpop.permute.xlu0 %1758
    %vm1760 = vcmask 31744
    %s1761 = scalar_lea.vmem [#allocation0], 553
    %1762 = vst.msk [vmem:[%s1761] sm:$0x1] %vm1760, %v1759
    %s1763 = scalar_lea.vmem [#allocation0], 616
    %1764 = vst.msk [vmem:[%s1763] sm:$0x2] %vm1760, %v1759
    %s1765 = scalar_lea.vmem [#allocation0], 679
    %1766 = vst.msk [vmem:[%s1765] sm:$0x4] %vm1760, %v1759
    %s1767 = scalar_lea.vmem [#allocation0], 742
    %1768 = vst.msk [vmem:[%s1767] sm:$0x8] %vm1760, %v1759
    %s1769 = scalar_lea.vmem [#allocation0], 805
    %1770 = vst.msk [vmem:[%s1769] sm:$0x10] %vm1760, %v1759
    %s1771 = scalar_lea.vmem [#allocation0], 868
    %1772 = vst.msk [vmem:[%s1771] sm:$0x20] %vm1760, %v1759
    %s1773 = scalar_lea.vmem [#allocation0], 931
    %1774 = vst.msk [vmem:[%s1773] sm:$0x40] %vm1760, %v1759
    %s1775 = scalar_lea.vmem [#allocation0], 994
    %1776 = vst.msk [vmem:[%s1775] sm:$0x80] %vm1760, %v1759
    %s1777 = scalar_lea.vmem %s0, 16
    %v1778 = vld [vmem:[%s1777] sm:$0xff]
    %1779 = vrot.lane.b32.xlu0 %v1778, 44
    %v1780 = vpop.permute.xlu0 %1779
    %vm1781 = vcmask 31744
    %s1782 = scalar_lea.vmem [#allocation0], 1065
    %1783 = vst.msk [vmem:[%s1782] sm:$0x1] %vm1781, %v1780
    %s1784 = scalar_lea.vmem [#allocation0], 1128
    %1785 = vst.msk [vmem:[%s1784] sm:$0x2] %vm1781, %v1780
    %s1786 = scalar_lea.vmem [#allocation0], 1191
    %1787 = vst.msk [vmem:[%s1786] sm:$0x4] %vm1781, %v1780
    %s1788 = scalar_lea.vmem [#allocation0], 1254
    %1789 = vst.msk [vmem:[%s1788] sm:$0x8] %vm1781, %v1780
    %s1790 = scalar_lea.vmem [#allocation0], 1317
    %1791 = vst.msk [vmem:[%s1790] sm:$0x10] %vm1781, %v1780
    %s1792 = scalar_lea.vmem [#allocation0], 1380
    %1793 = vst.msk [vmem:[%s1792] sm:$0x20] %vm1781, %v1780
    %s1794 = scalar_lea.vmem [#allocation0], 1443
    %1795 = vst.msk [vmem:[%s1794] sm:$0x40] %vm1781, %v1780
    %s1796 = scalar_lea.vmem [#allocation0], 1506
    %1797 = vst.msk [vmem:[%s1796] sm:$0x80] %vm1781, %v1780
    %s1798 = scalar_lea.vmem %s0, 24
    %v1799 = vld [vmem:[%s1798] sm:$0xff]
    %1800 = vrot.lane.b32.xlu0 %v1799, 44
    %v1801 = vpop.permute.xlu0 %1800
    %vm1802 = vcmask 31744
    %s1803 = scalar_lea.vmem [#allocation0], 1577
    %1804 = vst.msk [vmem:[%s1803] sm:$0x1] %vm1802, %v1801
    %s1805 = scalar_lea.vmem [#allocation0], 1640
    %1806 = vst.msk [vmem:[%s1805] sm:$0x2] %vm1802, %v1801
    %s1807 = scalar_lea.vmem [#allocation0], 1703
    %1808 = vst.msk [vmem:[%s1807] sm:$0x4] %vm1802, %v1801
    %s1809 = scalar_lea.vmem [#allocation0], 1766
    %1810 = vst.msk [vmem:[%s1809] sm:$0x8] %vm1802, %v1801
    %s1811 = scalar_lea.vmem [#allocation0], 1829
    %1812 = vst.msk [vmem:[%s1811] sm:$0x10] %vm1802, %v1801
    %s1813 = scalar_lea.vmem [#allocation0], 1892
    %1814 = vst.msk [vmem:[%s1813] sm:$0x20] %vm1802, %v1801
    %s1815 = scalar_lea.vmem [#allocation0], 1955
    %1816 = vst.msk [vmem:[%s1815] sm:$0x40] %vm1802, %v1801
    %s1817 = scalar_lea.vmem [#allocation0], 2018
    %1818 = vst.msk [vmem:[%s1817] sm:$0x80] %vm1802, %v1801
    %v1819 = vld [vmem:[%s0] sm:$0xff]
    %1820 = vrot.lane.b32.xlu0 %v1819, 40
    %v1821 = vpop.permute.xlu0 %1820
    %vm1822 = vcmask 31744
    %s1823 = scalar_lea.vmem [#allocation0], 42
    %1824 = vst.msk [vmem:[%s1823] sm:$0x1] %vm1822, %v1821
    %s1825 = scalar_lea.vmem [#allocation0], 105
    %1826 = vst.msk [vmem:[%s1825] sm:$0x2] %vm1822, %v1821
    %s1827 = scalar_lea.vmem [#allocation0], 168
    %1828 = vst.msk [vmem:[%s1827] sm:$0x4] %vm1822, %v1821
    %s1829 = scalar_lea.vmem [#allocation0], 231
    %1830 = vst.msk [vmem:[%s1829] sm:$0x8] %vm1822, %v1821
    %s1831 = scalar_lea.vmem [#allocation0], 294
    %1832 = vst.msk [vmem:[%s1831] sm:$0x10] %vm1822, %v1821
    %s1833 = scalar_lea.vmem [#allocation0], 357
    %1834 = vst.msk [vmem:[%s1833] sm:$0x20] %vm1822, %v1821
    %s1835 = scalar_lea.vmem [#allocation0], 420
    %1836 = vst.msk [vmem:[%s1835] sm:$0x40] %vm1822, %v1821
    %s1837 = scalar_lea.vmem [#allocation0], 483
    %1838 = vst.msk [vmem:[%s1837] sm:$0x80] %vm1822, %v1821
    %s1839 = scalar_lea.vmem %s0, 8
    %v1840 = vld [vmem:[%s1839] sm:$0xff]
    %1841 = vrot.lane.b32.xlu0 %v1840, 40
    %v1842 = vpop.permute.xlu0 %1841
    %vm1843 = vcmask 31744
    %s1844 = scalar_lea.vmem [#allocation0], 554
    %1845 = vst.msk [vmem:[%s1844] sm:$0x1] %vm1843, %v1842
    %s1846 = scalar_lea.vmem [#allocation0], 617
    %1847 = vst.msk [vmem:[%s1846] sm:$0x2] %vm1843, %v1842
    %s1848 = scalar_lea.vmem [#allocation0], 680
    %1849 = vst.msk [vmem:[%s1848] sm:$0x4] %vm1843, %v1842
    %s1850 = scalar_lea.vmem [#allocation0], 743
    %1851 = vst.msk [vmem:[%s1850] sm:$0x8] %vm1843, %v1842
    %s1852 = scalar_lea.vmem [#allocation0], 806
    %1853 = vst.msk [vmem:[%s1852] sm:$0x10] %vm1843, %v1842
    %s1854 = scalar_lea.vmem [#allocation0], 869
    %1855 = vst.msk [vmem:[%s1854] sm:$0x20] %vm1843, %v1842
    %s1856 = scalar_lea.vmem [#allocation0], 932
    %1857 = vst.msk [vmem:[%s1856] sm:$0x40] %vm1843, %v1842
    %s1858 = scalar_lea.vmem [#allocation0], 995
    %1859 = vst.msk [vmem:[%s1858] sm:$0x80] %vm1843, %v1842
    %s1860 = scalar_lea.vmem %s0, 16
    %v1861 = vld [vmem:[%s1860] sm:$0xff]
    %1862 = vrot.lane.b32.xlu0 %v1861, 40
    %v1863 = vpop.permute.xlu0 %1862
    %vm1864 = vcmask 31744
    %s1865 = scalar_lea.vmem [#allocation0], 1066
    %1866 = vst.msk [vmem:[%s1865] sm:$0x1] %vm1864, %v1863
    %s1867 = scalar_lea.vmem [#allocation0], 1129
    %1868 = vst.msk [vmem:[%s1867] sm:$0x2] %vm1864, %v1863
    %s1869 = scalar_lea.vmem [#allocation0], 1192
    %1870 = vst.msk [vmem:[%s1869] sm:$0x4] %vm1864, %v1863
    %s1871 = scalar_lea.vmem [#allocation0], 1255
    %1872 = vst.msk [vmem:[%s1871] sm:$0x8] %vm1864, %v1863
    %s1873 = scalar_lea.vmem [#allocation0], 1318
    %1874 = vst.msk [vmem:[%s1873] sm:$0x10] %vm1864, %v1863
    %s1875 = scalar_lea.vmem [#allocation0], 1381
    %1876 = vst.msk [vmem:[%s1875] sm:$0x20] %vm1864, %v1863
    %s1877 = scalar_lea.vmem [#allocation0], 1444
    %1878 = vst.msk [vmem:[%s1877] sm:$0x40] %vm1864, %v1863
    %s1879 = scalar_lea.vmem [#allocation0], 1507
    %1880 = vst.msk [vmem:[%s1879] sm:$0x80] %vm1864, %v1863
    %s1881 = scalar_lea.vmem %s0, 24
    %v1882 = vld [vmem:[%s1881] sm:$0xff]
    %1883 = vrot.lane.b32.xlu0 %v1882, 40
    %v1884 = vpop.permute.xlu0 %1883
    %vm1885 = vcmask 31744
    %s1886 = scalar_lea.vmem [#allocation0], 1578
    %1887 = vst.msk [vmem:[%s1886] sm:$0x1] %vm1885, %v1884
    %s1888 = scalar_lea.vmem [#allocation0], 1641
    %1889 = vst.msk [vmem:[%s1888] sm:$0x2] %vm1885, %v1884
    %s1890 = scalar_lea.vmem [#allocation0], 1704
    %1891 = vst.msk [vmem:[%s1890] sm:$0x4] %vm1885, %v1884
    %s1892 = scalar_lea.vmem [#allocation0], 1767
    %1893 = vst.msk [vmem:[%s1892] sm:$0x8] %vm1885, %v1884
    %s1894 = scalar_lea.vmem [#allocation0], 1830
    %1895 = vst.msk [vmem:[%s1894] sm:$0x10] %vm1885, %v1884
    %s1896 = scalar_lea.vmem [#allocation0], 1893
    %1897 = vst.msk [vmem:[%s1896] sm:$0x20] %vm1885, %v1884
    %s1898 = scalar_lea.vmem [#allocation0], 1956
    %1899 = vst.msk [vmem:[%s1898] sm:$0x40] %vm1885, %v1884
    %s1900 = scalar_lea.vmem [#allocation0], 2019
    %1901 = vst.msk [vmem:[%s1900] sm:$0x80] %vm1885, %v1884
    %v1902 = vld [vmem:[%s0] sm:$0xff]
    %1903 = vrot.lane.b32.xlu0 %v1902, 36
    %v1904 = vpop.permute.xlu0 %1903
    %vm1905 = vcmask 31744
    %s1906 = scalar_lea.vmem [#allocation0], 43
    %1907 = vst.msk [vmem:[%s1906] sm:$0x1] %vm1905, %v1904
    %s1908 = scalar_lea.vmem [#allocation0], 106
    %1909 = vst.msk [vmem:[%s1908] sm:$0x2] %vm1905, %v1904
    %s1910 = scalar_lea.vmem [#allocation0], 169
    %1911 = vst.msk [vmem:[%s1910] sm:$0x4] %vm1905, %v1904
    %s1912 = scalar_lea.vmem [#allocation0], 232
    %1913 = vst.msk [vmem:[%s1912] sm:$0x8] %vm1905, %v1904
    %s1914 = scalar_lea.vmem [#allocation0], 295
    %1915 = vst.msk [vmem:[%s1914] sm:$0x10] %vm1905, %v1904
    %s1916 = scalar_lea.vmem [#allocation0], 358
    %1917 = vst.msk [vmem:[%s1916] sm:$0x20] %vm1905, %v1904
    %s1918 = scalar_lea.vmem [#allocation0], 421
    %1919 = vst.msk [vmem:[%s1918] sm:$0x40] %vm1905, %v1904
    %s1920 = scalar_lea.vmem [#allocation0], 484
    %1921 = vst.msk [vmem:[%s1920] sm:$0x80] %vm1905, %v1904
    %s1922 = scalar_lea.vmem %s0, 8
    %v1923 = vld [vmem:[%s1922] sm:$0xff]
    %1924 = vrot.lane.b32.xlu0 %v1923, 36
    %v1925 = vpop.permute.xlu0 %1924
    %vm1926 = vcmask 31744
    %s1927 = scalar_lea.vmem [#allocation0], 555
    %1928 = vst.msk [vmem:[%s1927] sm:$0x1] %vm1926, %v1925
    %s1929 = scalar_lea.vmem [#allocation0], 618
    %1930 = vst.msk [vmem:[%s1929] sm:$0x2] %vm1926, %v1925
    %s1931 = scalar_lea.vmem [#allocation0], 681
    %1932 = vst.msk [vmem:[%s1931] sm:$0x4] %vm1926, %v1925
    %s1933 = scalar_lea.vmem [#allocation0], 744
    %1934 = vst.msk [vmem:[%s1933] sm:$0x8] %vm1926, %v1925
    %s1935 = scalar_lea.vmem [#allocation0], 807
    %1936 = vst.msk [vmem:[%s1935] sm:$0x10] %vm1926, %v1925
    %s1937 = scalar_lea.vmem [#allocation0], 870
    %1938 = vst.msk [vmem:[%s1937] sm:$0x20] %vm1926, %v1925
    %s1939 = scalar_lea.vmem [#allocation0], 933
    %1940 = vst.msk [vmem:[%s1939] sm:$0x40] %vm1926, %v1925
    %s1941 = scalar_lea.vmem [#allocation0], 996
    %1942 = vst.msk [vmem:[%s1941] sm:$0x80] %vm1926, %v1925
    %s1943 = scalar_lea.vmem %s0, 16
    %v1944 = vld [vmem:[%s1943] sm:$0xff]
    %1945 = vrot.lane.b32.xlu0 %v1944, 36
    %v1946 = vpop.permute.xlu0 %1945
    %vm1947 = vcmask 31744
    %s1948 = scalar_lea.vmem [#allocation0], 1067
    %1949 = vst.msk [vmem:[%s1948] sm:$0x1] %vm1947, %v1946
    %s1950 = scalar_lea.vmem [#allocation0], 1130
    %1951 = vst.msk [vmem:[%s1950] sm:$0x2] %vm1947, %v1946
    %s1952 = scalar_lea.vmem [#allocation0], 1193
    %1953 = vst.msk [vmem:[%s1952] sm:$0x4] %vm1947, %v1946
    %s1954 = scalar_lea.vmem [#allocation0], 1256
    %1955 = vst.msk [vmem:[%s1954] sm:$0x8] %vm1947, %v1946
    %s1956 = scalar_lea.vmem [#allocation0], 1319
    %1957 = vst.msk [vmem:[%s1956] sm:$0x10] %vm1947, %v1946
    %s1958 = scalar_lea.vmem [#allocation0], 1382
    %1959 = vst.msk [vmem:[%s1958] sm:$0x20] %vm1947, %v1946
    %s1960 = scalar_lea.vmem [#allocation0], 1445
    %1961 = vst.msk [vmem:[%s1960] sm:$0x40] %vm1947, %v1946
    %s1962 = scalar_lea.vmem [#allocation0], 1508
    %1963 = vst.msk [vmem:[%s1962] sm:$0x80] %vm1947, %v1946
    %s1964 = scalar_lea.vmem %s0, 24
    %v1965 = vld [vmem:[%s1964] sm:$0xff]
    %1966 = vrot.lane.b32.xlu0 %v1965, 36
    %v1967 = vpop.permute.xlu0 %1966
    %vm1968 = vcmask 31744
    %s1969 = scalar_lea.vmem [#allocation0], 1579
    %1970 = vst.msk [vmem:[%s1969] sm:$0x1] %vm1968, %v1967
    %s1971 = scalar_lea.vmem [#allocation0], 1642
    %1972 = vst.msk [vmem:[%s1971] sm:$0x2] %vm1968, %v1967
    %s1973 = scalar_lea.vmem [#allocation0], 1705
    %1974 = vst.msk [vmem:[%s1973] sm:$0x4] %vm1968, %v1967
    %s1975 = scalar_lea.vmem [#allocation0], 1768
    %1976 = vst.msk [vmem:[%s1975] sm:$0x8] %vm1968, %v1967
    %s1977 = scalar_lea.vmem [#allocation0], 1831
    %1978 = vst.msk [vmem:[%s1977] sm:$0x10] %vm1968, %v1967
    %s1979 = scalar_lea.vmem [#allocation0], 1894
    %1980 = vst.msk [vmem:[%s1979] sm:$0x20] %vm1968, %v1967
    %s1981 = scalar_lea.vmem [#allocation0], 1957
    %1982 = vst.msk [vmem:[%s1981] sm:$0x40] %vm1968, %v1967
    %s1983 = scalar_lea.vmem [#allocation0], 2020
    %1984 = vst.msk [vmem:[%s1983] sm:$0x80] %vm1968, %v1967
    %v1985 = vld [vmem:[%s0] sm:$0xff]
    %1986 = vrot.lane.b32.xlu0 %v1985, 32
    %v1987 = vpop.permute.xlu0 %1986
    %vm1988 = vcmask 31744
    %s1989 = scalar_lea.vmem [#allocation0], 48
    %1990 = vst.msk [vmem:[%s1989] sm:$0x1] %vm1988, %v1987
    %s1991 = scalar_lea.vmem [#allocation0], 111
    %1992 = vst.msk [vmem:[%s1991] sm:$0x2] %vm1988, %v1987
    %s1993 = scalar_lea.vmem [#allocation0], 174
    %1994 = vst.msk [vmem:[%s1993] sm:$0x4] %vm1988, %v1987
    %s1995 = scalar_lea.vmem [#allocation0], 237
    %1996 = vst.msk [vmem:[%s1995] sm:$0x8] %vm1988, %v1987
    %s1997 = scalar_lea.vmem [#allocation0], 300
    %1998 = vst.msk [vmem:[%s1997] sm:$0x10] %vm1988, %v1987
    %s1999 = scalar_lea.vmem [#allocation0], 363
    %2000 = vst.msk [vmem:[%s1999] sm:$0x20] %vm1988, %v1987
    %s2001 = scalar_lea.vmem [#allocation0], 426
    %2002 = vst.msk [vmem:[%s2001] sm:$0x40] %vm1988, %v1987
    %s2003 = scalar_lea.vmem [#allocation0], 489
    %2004 = vst.msk [vmem:[%s2003] sm:$0x80] %vm1988, %v1987
    %s2005 = scalar_lea.vmem %s0, 8
    %v2006 = vld [vmem:[%s2005] sm:$0xff]
    %2007 = vrot.lane.b32.xlu0 %v2006, 32
    %v2008 = vpop.permute.xlu0 %2007
    %vm2009 = vcmask 31744
    %s2010 = scalar_lea.vmem [#allocation0], 560
    %2011 = vst.msk [vmem:[%s2010] sm:$0x1] %vm2009, %v2008
    %s2012 = scalar_lea.vmem [#allocation0], 623
    %2013 = vst.msk [vmem:[%s2012] sm:$0x2] %vm2009, %v2008
    %s2014 = scalar_lea.vmem [#allocation0], 686
    %2015 = vst.msk [vmem:[%s2014] sm:$0x4] %vm2009, %v2008
    %s2016 = scalar_lea.vmem [#allocation0], 749
    %2017 = vst.msk [vmem:[%s2016] sm:$0x8] %vm2009, %v2008
    %s2018 = scalar_lea.vmem [#allocation0], 812
    %2019 = vst.msk [vmem:[%s2018] sm:$0x10] %vm2009, %v2008
    %s2020 = scalar_lea.vmem [#allocation0], 875
    %2021 = vst.msk [vmem:[%s2020] sm:$0x20] %vm2009, %v2008
    %s2022 = scalar_lea.vmem [#allocation0], 938
    %2023 = vst.msk [vmem:[%s2022] sm:$0x40] %vm2009, %v2008
    %s2024 = scalar_lea.vmem [#allocation0], 1001
    %2025 = vst.msk [vmem:[%s2024] sm:$0x80] %vm2009, %v2008
    %s2026 = scalar_lea.vmem %s0, 16
    %v2027 = vld [vmem:[%s2026] sm:$0xff]
    %2028 = vrot.lane.b32.xlu0 %v2027, 32
    %v2029 = vpop.permute.xlu0 %2028
    %vm2030 = vcmask 31744
    %s2031 = scalar_lea.vmem [#allocation0], 1072
    %2032 = vst.msk [vmem:[%s2031] sm:$0x1] %vm2030, %v2029
    %s2033 = scalar_lea.vmem [#allocation0], 1135
    %2034 = vst.msk [vmem:[%s2033] sm:$0x2] %vm2030, %v2029
    %s2035 = scalar_lea.vmem [#allocation0], 1198
    %2036 = vst.msk [vmem:[%s2035] sm:$0x4] %vm2030, %v2029
    %s2037 = scalar_lea.vmem [#allocation0], 1261
    %2038 = vst.msk [vmem:[%s2037] sm:$0x8] %vm2030, %v2029
    %s2039 = scalar_lea.vmem [#allocation0], 1324
    %2040 = vst.msk [vmem:[%s2039] sm:$0x10] %vm2030, %v2029
    %s2041 = scalar_lea.vmem [#allocation0], 1387
    %2042 = vst.msk [vmem:[%s2041] sm:$0x20] %vm2030, %v2029
    %s2043 = scalar_lea.vmem [#allocation0], 1450
    %2044 = vst.msk [vmem:[%s2043] sm:$0x40] %vm2030, %v2029
    %s2045 = scalar_lea.vmem [#allocation0], 1513
    %2046 = vst.msk [vmem:[%s2045] sm:$0x80] %vm2030, %v2029
    %s2047 = scalar_lea.vmem %s0, 24
    %v2048 = vld [vmem:[%s2047] sm:$0xff]
    %2049 = vrot.lane.b32.xlu0 %v2048, 32
    %v2050 = vpop.permute.xlu0 %2049
    %vm2051 = vcmask 31744
    %s2052 = scalar_lea.vmem [#allocation0], 1584
    %2053 = vst.msk [vmem:[%s2052] sm:$0x1] %vm2051, %v2050
    %s2054 = scalar_lea.vmem [#allocation0], 1647
    %2055 = vst.msk [vmem:[%s2054] sm:$0x2] %vm2051, %v2050
    %s2056 = scalar_lea.vmem [#allocation0], 1710
    %2057 = vst.msk [vmem:[%s2056] sm:$0x4] %vm2051, %v2050
    %s2058 = scalar_lea.vmem [#allocation0], 1773
    %2059 = vst.msk [vmem:[%s2058] sm:$0x8] %vm2051, %v2050
    %s2060 = scalar_lea.vmem [#allocation0], 1836
    %2061 = vst.msk [vmem:[%s2060] sm:$0x10] %vm2051, %v2050
    %s2062 = scalar_lea.vmem [#allocation0], 1899
    %2063 = vst.msk [vmem:[%s2062] sm:$0x20] %vm2051, %v2050
    %s2064 = scalar_lea.vmem [#allocation0], 1962
    %2065 = vst.msk [vmem:[%s2064] sm:$0x40] %vm2051, %v2050
    %s2066 = scalar_lea.vmem [#allocation0], 2025
    %2067 = vst.msk [vmem:[%s2066] sm:$0x80] %vm2051, %v2050
    %v2068 = vld [vmem:[%s0] sm:$0xff]
    %2069 = vrot.lane.b32.xlu0 %v2068, 28
    %v2070 = vpop.permute.xlu0 %2069
    %vm2071 = vcmask 31744
    %s2072 = scalar_lea.vmem [#allocation0], 49
    %2073 = vst.msk [vmem:[%s2072] sm:$0x1] %vm2071, %v2070
    %s2074 = scalar_lea.vmem [#allocation0], 112
    %2075 = vst.msk [vmem:[%s2074] sm:$0x2] %vm2071, %v2070
    %s2076 = scalar_lea.vmem [#allocation0], 175
    %2077 = vst.msk [vmem:[%s2076] sm:$0x4] %vm2071, %v2070
    %s2078 = scalar_lea.vmem [#allocation0], 238
    %2079 = vst.msk [vmem:[%s2078] sm:$0x8] %vm2071, %v2070
    %s2080 = scalar_lea.vmem [#allocation0], 301
    %2081 = vst.msk [vmem:[%s2080] sm:$0x10] %vm2071, %v2070
    %s2082 = scalar_lea.vmem [#allocation0], 364
    %2083 = vst.msk [vmem:[%s2082] sm:$0x20] %vm2071, %v2070
    %s2084 = scalar_lea.vmem [#allocation0], 427
    %2085 = vst.msk [vmem:[%s2084] sm:$0x40] %vm2071, %v2070
    %s2086 = scalar_lea.vmem [#allocation0], 490
    %2087 = vst.msk [vmem:[%s2086] sm:$0x80] %vm2071, %v2070
    %s2088 = scalar_lea.vmem %s0, 8
    %v2089 = vld [vmem:[%s2088] sm:$0xff]
    %2090 = vrot.lane.b32.xlu0 %v2089, 28
    %v2091 = vpop.permute.xlu0 %2090
    %vm2092 = vcmask 31744
    %s2093 = scalar_lea.vmem [#allocation0], 561
    %2094 = vst.msk [vmem:[%s2093] sm:$0x1] %vm2092, %v2091
    %s2095 = scalar_lea.vmem [#allocation0], 624
    %2096 = vst.msk [vmem:[%s2095] sm:$0x2] %vm2092, %v2091
    %s2097 = scalar_lea.vmem [#allocation0], 687
    %2098 = vst.msk [vmem:[%s2097] sm:$0x4] %vm2092, %v2091
    %s2099 = scalar_lea.vmem [#allocation0], 750
    %2100 = vst.msk [vmem:[%s2099] sm:$0x8] %vm2092, %v2091
    %s2101 = scalar_lea.vmem [#allocation0], 813
    %2102 = vst.msk [vmem:[%s2101] sm:$0x10] %vm2092, %v2091
    %s2103 = scalar_lea.vmem [#allocation0], 876
    %2104 = vst.msk [vmem:[%s2103] sm:$0x20] %vm2092, %v2091
    %s2105 = scalar_lea.vmem [#allocation0], 939
    %2106 = vst.msk [vmem:[%s2105] sm:$0x40] %vm2092, %v2091
    %s2107 = scalar_lea.vmem [#allocation0], 1002
    %2108 = vst.msk [vmem:[%s2107] sm:$0x80] %vm2092, %v2091
    %s2109 = scalar_lea.vmem %s0, 16
    %v2110 = vld [vmem:[%s2109] sm:$0xff]
    %2111 = vrot.lane.b32.xlu0 %v2110, 28
    %v2112 = vpop.permute.xlu0 %2111
    %vm2113 = vcmask 31744
    %s2114 = scalar_lea.vmem [#allocation0], 1073
    %2115 = vst.msk [vmem:[%s2114] sm:$0x1] %vm2113, %v2112
    %s2116 = scalar_lea.vmem [#allocation0], 1136
    %2117 = vst.msk [vmem:[%s2116] sm:$0x2] %vm2113, %v2112
    %s2118 = scalar_lea.vmem [#allocation0], 1199
    %2119 = vst.msk [vmem:[%s2118] sm:$0x4] %vm2113, %v2112
    %s2120 = scalar_lea.vmem [#allocation0], 1262
    %2121 = vst.msk [vmem:[%s2120] sm:$0x8] %vm2113, %v2112
    %s2122 = scalar_lea.vmem [#allocation0], 1325
    %2123 = vst.msk [vmem:[%s2122] sm:$0x10] %vm2113, %v2112
    %s2124 = scalar_lea.vmem [#allocation0], 1388
    %2125 = vst.msk [vmem:[%s2124] sm:$0x20] %vm2113, %v2112
    %s2126 = scalar_lea.vmem [#allocation0], 1451
    %2127 = vst.msk [vmem:[%s2126] sm:$0x40] %vm2113, %v2112
    %s2128 = scalar_lea.vmem [#allocation0], 1514
    %2129 = vst.msk [vmem:[%s2128] sm:$0x80] %vm2113, %v2112
    %s2130 = scalar_lea.vmem %s0, 24
    %v2131 = vld [vmem:[%s2130] sm:$0xff]
    %2132 = vrot.lane.b32.xlu0 %v2131, 28
    %v2133 = vpop.permute.xlu0 %2132
    %vm2134 = vcmask 31744
    %s2135 = scalar_lea.vmem [#allocation0], 1585
    %2136 = vst.msk [vmem:[%s2135] sm:$0x1] %vm2134, %v2133
    %s2137 = scalar_lea.vmem [#allocation0], 1648
    %2138 = vst.msk [vmem:[%s2137] sm:$0x2] %vm2134, %v2133
    %s2139 = scalar_lea.vmem [#allocation0], 1711
    %2140 = vst.msk [vmem:[%s2139] sm:$0x4] %vm2134, %v2133
    %s2141 = scalar_lea.vmem [#allocation0], 1774
    %2142 = vst.msk [vmem:[%s2141] sm:$0x8] %vm2134, %v2133
    %s2143 = scalar_lea.vmem [#allocation0], 1837
    %2144 = vst.msk [vmem:[%s2143] sm:$0x10] %vm2134, %v2133
    %s2145 = scalar_lea.vmem [#allocation0], 1900
    %2146 = vst.msk [vmem:[%s2145] sm:$0x20] %vm2134, %v2133
    %s2147 = scalar_lea.vmem [#allocation0], 1963
    %2148 = vst.msk [vmem:[%s2147] sm:$0x40] %vm2134, %v2133
    %s2149 = scalar_lea.vmem [#allocation0], 2026
    %2150 = vst.msk [vmem:[%s2149] sm:$0x80] %vm2134, %v2133
    %v2151 = vld [vmem:[%s0] sm:$0xff]
    %2152 = vrot.lane.b32.xlu0 %v2151, 24
    %v2153 = vpop.permute.xlu0 %2152
    %vm2154 = vcmask 31744
    %s2155 = scalar_lea.vmem [#allocation0], 50
    %2156 = vst.msk [vmem:[%s2155] sm:$0x1] %vm2154, %v2153
    %s2157 = scalar_lea.vmem [#allocation0], 113
    %2158 = vst.msk [vmem:[%s2157] sm:$0x2] %vm2154, %v2153
    %s2159 = scalar_lea.vmem [#allocation0], 176
    %2160 = vst.msk [vmem:[%s2159] sm:$0x4] %vm2154, %v2153
    %s2161 = scalar_lea.vmem [#allocation0], 239
    %2162 = vst.msk [vmem:[%s2161] sm:$0x8] %vm2154, %v2153
    %s2163 = scalar_lea.vmem [#allocation0], 302
    %2164 = vst.msk [vmem:[%s2163] sm:$0x10] %vm2154, %v2153
    %s2165 = scalar_lea.vmem [#allocation0], 365
    %2166 = vst.msk [vmem:[%s2165] sm:$0x20] %vm2154, %v2153
    %s2167 = scalar_lea.vmem [#allocation0], 428
    %2168 = vst.msk [vmem:[%s2167] sm:$0x40] %vm2154, %v2153
    %s2169 = scalar_lea.vmem [#allocation0], 491
    %2170 = vst.msk [vmem:[%s2169] sm:$0x80] %vm2154, %v2153
    %s2171 = scalar_lea.vmem %s0, 8
    %v2172 = vld [vmem:[%s2171] sm:$0xff]
    %2173 = vrot.lane.b32.xlu0 %v2172, 24
    %v2174 = vpop.permute.xlu0 %2173
    %vm2175 = vcmask 31744
    %s2176 = scalar_lea.vmem [#allocation0], 562
    %2177 = vst.msk [vmem:[%s2176] sm:$0x1] %vm2175, %v2174
    %s2178 = scalar_lea.vmem [#allocation0], 625
    %2179 = vst.msk [vmem:[%s2178] sm:$0x2] %vm2175, %v2174
    %s2180 = scalar_lea.vmem [#allocation0], 688
    %2181 = vst.msk [vmem:[%s2180] sm:$0x4] %vm2175, %v2174
    %s2182 = scalar_lea.vmem [#allocation0], 751
    %2183 = vst.msk [vmem:[%s2182] sm:$0x8] %vm2175, %v2174
    %s2184 = scalar_lea.vmem [#allocation0], 814
    %2185 = vst.msk [vmem:[%s2184] sm:$0x10] %vm2175, %v2174
    %s2186 = scalar_lea.vmem [#allocation0], 877
    %2187 = vst.msk [vmem:[%s2186] sm:$0x20] %vm2175, %v2174
    %s2188 = scalar_lea.vmem [#allocation0], 940
    %2189 = vst.msk [vmem:[%s2188] sm:$0x40] %vm2175, %v2174
    %s2190 = scalar_lea.vmem [#allocation0], 1003
    %2191 = vst.msk [vmem:[%s2190] sm:$0x80] %vm2175, %v2174
    %s2192 = scalar_lea.vmem %s0, 16
    %v2193 = vld [vmem:[%s2192] sm:$0xff]
    %2194 = vrot.lane.b32.xlu0 %v2193, 24
    %v2195 = vpop.permute.xlu0 %2194
    %vm2196 = vcmask 31744
    %s2197 = scalar_lea.vmem [#allocation0], 1074
    %2198 = vst.msk [vmem:[%s2197] sm:$0x1] %vm2196, %v2195
    %s2199 = scalar_lea.vmem [#allocation0], 1137
    %2200 = vst.msk [vmem:[%s2199] sm:$0x2] %vm2196, %v2195
    %s2201 = scalar_lea.vmem [#allocation0], 1200
    %2202 = vst.msk [vmem:[%s2201] sm:$0x4] %vm2196, %v2195
    %s2203 = scalar_lea.vmem [#allocation0], 1263
    %2204 = vst.msk [vmem:[%s2203] sm:$0x8] %vm2196, %v2195
    %s2205 = scalar_lea.vmem [#allocation0], 1326
    %2206 = vst.msk [vmem:[%s2205] sm:$0x10] %vm2196, %v2195
    %s2207 = scalar_lea.vmem [#allocation0], 1389
    %2208 = vst.msk [vmem:[%s2207] sm:$0x20] %vm2196, %v2195
    %s2209 = scalar_lea.vmem [#allocation0], 1452
    %2210 = vst.msk [vmem:[%s2209] sm:$0x40] %vm2196, %v2195
    %s2211 = scalar_lea.vmem [#allocation0], 1515
    %2212 = vst.msk [vmem:[%s2211] sm:$0x80] %vm2196, %v2195
    %s2213 = scalar_lea.vmem %s0, 24
    %v2214 = vld [vmem:[%s2213] sm:$0xff]
    %2215 = vrot.lane.b32.xlu0 %v2214, 24
    %v2216 = vpop.permute.xlu0 %2215
    %vm2217 = vcmask 31744
    %s2218 = scalar_lea.vmem [#allocation0], 1586
    %2219 = vst.msk [vmem:[%s2218] sm:$0x1] %vm2217, %v2216
    %s2220 = scalar_lea.vmem [#allocation0], 1649
    %2221 = vst.msk [vmem:[%s2220] sm:$0x2] %vm2217, %v2216
    %s2222 = scalar_lea.vmem [#allocation0], 1712
    %2223 = vst.msk [vmem:[%s2222] sm:$0x4] %vm2217, %v2216
    %s2224 = scalar_lea.vmem [#allocation0], 1775
    %2225 = vst.msk [vmem:[%s2224] sm:$0x8] %vm2217, %v2216
    %s2226 = scalar_lea.vmem [#allocation0], 1838
    %2227 = vst.msk [vmem:[%s2226] sm:$0x10] %vm2217, %v2216
    %s2228 = scalar_lea.vmem [#allocation0], 1901
    %2229 = vst.msk [vmem:[%s2228] sm:$0x20] %vm2217, %v2216
    %s2230 = scalar_lea.vmem [#allocation0], 1964
    %2231 = vst.msk [vmem:[%s2230] sm:$0x40] %vm2217, %v2216
    %s2232 = scalar_lea.vmem [#allocation0], 2027
    %2233 = vst.msk [vmem:[%s2232] sm:$0x80] %vm2217, %v2216
    %v2234 = vld [vmem:[%s0] sm:$0xff]
    %2235 = vrot.lane.b32.xlu0 %v2234, 20
    %v2236 = vpop.permute.xlu0 %2235
    %vm2237 = vcmask 31744
    %s2238 = scalar_lea.vmem [#allocation0], 51
    %2239 = vst.msk [vmem:[%s2238] sm:$0x1] %vm2237, %v2236
    %s2240 = scalar_lea.vmem [#allocation0], 114
    %2241 = vst.msk [vmem:[%s2240] sm:$0x2] %vm2237, %v2236
    %s2242 = scalar_lea.vmem [#allocation0], 177
    %2243 = vst.msk [vmem:[%s2242] sm:$0x4] %vm2237, %v2236
    %s2244 = scalar_lea.vmem [#allocation0], 240
    %2245 = vst.msk [vmem:[%s2244] sm:$0x8] %vm2237, %v2236
    %s2246 = scalar_lea.vmem [#allocation0], 303
    %2247 = vst.msk [vmem:[%s2246] sm:$0x10] %vm2237, %v2236
    %s2248 = scalar_lea.vmem [#allocation0], 366
    %2249 = vst.msk [vmem:[%s2248] sm:$0x20] %vm2237, %v2236
    %s2250 = scalar_lea.vmem [#allocation0], 429
    %2251 = vst.msk [vmem:[%s2250] sm:$0x40] %vm2237, %v2236
    %s2252 = scalar_lea.vmem [#allocation0], 492
    %2253 = vst.msk [vmem:[%s2252] sm:$0x80] %vm2237, %v2236
    %s2254 = scalar_lea.vmem %s0, 8
    %v2255 = vld [vmem:[%s2254] sm:$0xff]
    %2256 = vrot.lane.b32.xlu0 %v2255, 20
    %v2257 = vpop.permute.xlu0 %2256
    %vm2258 = vcmask 31744
    %s2259 = scalar_lea.vmem [#allocation0], 563
    %2260 = vst.msk [vmem:[%s2259] sm:$0x1] %vm2258, %v2257
    %s2261 = scalar_lea.vmem [#allocation0], 626
    %2262 = vst.msk [vmem:[%s2261] sm:$0x2] %vm2258, %v2257
    %s2263 = scalar_lea.vmem [#allocation0], 689
    %2264 = vst.msk [vmem:[%s2263] sm:$0x4] %vm2258, %v2257
    %s2265 = scalar_lea.vmem [#allocation0], 752
    %2266 = vst.msk [vmem:[%s2265] sm:$0x8] %vm2258, %v2257
    %s2267 = scalar_lea.vmem [#allocation0], 815
    %2268 = vst.msk [vmem:[%s2267] sm:$0x10] %vm2258, %v2257
    %s2269 = scalar_lea.vmem [#allocation0], 878
    %2270 = vst.msk [vmem:[%s2269] sm:$0x20] %vm2258, %v2257
    %s2271 = scalar_lea.vmem [#allocation0], 941
    %2272 = vst.msk [vmem:[%s2271] sm:$0x40] %vm2258, %v2257
    %s2273 = scalar_lea.vmem [#allocation0], 1004
    %2274 = vst.msk [vmem:[%s2273] sm:$0x80] %vm2258, %v2257
    %s2275 = scalar_lea.vmem %s0, 16
    %v2276 = vld [vmem:[%s2275] sm:$0xff]
    %2277 = vrot.lane.b32.xlu0 %v2276, 20
    %v2278 = vpop.permute.xlu0 %2277
    %vm2279 = vcmask 31744
    %s2280 = scalar_lea.vmem [#allocation0], 1075
    %2281 = vst.msk [vmem:[%s2280] sm:$0x1] %vm2279, %v2278
    %s2282 = scalar_lea.vmem [#allocation0], 1138
    %2283 = vst.msk [vmem:[%s2282] sm:$0x2] %vm2279, %v2278
    %s2284 = scalar_lea.vmem [#allocation0], 1201
    %2285 = vst.msk [vmem:[%s2284] sm:$0x4] %vm2279, %v2278
    %s2286 = scalar_lea.vmem [#allocation0], 1264
    %2287 = vst.msk [vmem:[%s2286] sm:$0x8] %vm2279, %v2278
    %s2288 = scalar_lea.vmem [#allocation0], 1327
    %2289 = vst.msk [vmem:[%s2288] sm:$0x10] %vm2279, %v2278
    %s2290 = scalar_lea.vmem [#allocation0], 1390
    %2291 = vst.msk [vmem:[%s2290] sm:$0x20] %vm2279, %v2278
    %s2292 = scalar_lea.vmem [#allocation0], 1453
    %2293 = vst.msk [vmem:[%s2292] sm:$0x40] %vm2279, %v2278
    %s2294 = scalar_lea.vmem [#allocation0], 1516
    %2295 = vst.msk [vmem:[%s2294] sm:$0x80] %vm2279, %v2278
    %s2296 = scalar_lea.vmem %s0, 24
    %v2297 = vld [vmem:[%s2296] sm:$0xff]
    %2298 = vrot.lane.b32.xlu0 %v2297, 20
    %v2299 = vpop.permute.xlu0 %2298
    %vm2300 = vcmask 31744
    %s2301 = scalar_lea.vmem [#allocation0], 1587
    %2302 = vst.msk [vmem:[%s2301] sm:$0x1] %vm2300, %v2299
    %s2303 = scalar_lea.vmem [#allocation0], 1650
    %2304 = vst.msk [vmem:[%s2303] sm:$0x2] %vm2300, %v2299
    %s2305 = scalar_lea.vmem [#allocation0], 1713
    %2306 = vst.msk [vmem:[%s2305] sm:$0x4] %vm2300, %v2299
    %s2307 = scalar_lea.vmem [#allocation0], 1776
    %2308 = vst.msk [vmem:[%s2307] sm:$0x8] %vm2300, %v2299
    %s2309 = scalar_lea.vmem [#allocation0], 1839
    %2310 = vst.msk [vmem:[%s2309] sm:$0x10] %vm2300, %v2299
    %s2311 = scalar_lea.vmem [#allocation0], 1902
    %2312 = vst.msk [vmem:[%s2311] sm:$0x20] %vm2300, %v2299
    %s2313 = scalar_lea.vmem [#allocation0], 1965
    %2314 = vst.msk [vmem:[%s2313] sm:$0x40] %vm2300, %v2299
    %s2315 = scalar_lea.vmem [#allocation0], 2028
    %2316 = vst.msk [vmem:[%s2315] sm:$0x80] %vm2300, %v2299
    %v2317 = vld [vmem:[%s0] sm:$0xff]
    %2318 = vrot.lane.b32.xlu0 %v2317, 16
    %v2319 = vpop.permute.xlu0 %2318
    %vm2320 = vcmask 31744
    %s2321 = scalar_lea.vmem [#allocation0], 56
    %2322 = vst.msk [vmem:[%s2321] sm:$0x1] %vm2320, %v2319
    %s2323 = scalar_lea.vmem [#allocation0], 119
    %2324 = vst.msk [vmem:[%s2323] sm:$0x2] %vm2320, %v2319
    %s2325 = scalar_lea.vmem [#allocation0], 182
    %2326 = vst.msk [vmem:[%s2325] sm:$0x4] %vm2320, %v2319
    %s2327 = scalar_lea.vmem [#allocation0], 245
    %2328 = vst.msk [vmem:[%s2327] sm:$0x8] %vm2320, %v2319
    %s2329 = scalar_lea.vmem [#allocation0], 308
    %2330 = vst.msk [vmem:[%s2329] sm:$0x10] %vm2320, %v2319
    %s2331 = scalar_lea.vmem [#allocation0], 371
    %2332 = vst.msk [vmem:[%s2331] sm:$0x20] %vm2320, %v2319
    %s2333 = scalar_lea.vmem [#allocation0], 434
    %2334 = vst.msk [vmem:[%s2333] sm:$0x40] %vm2320, %v2319
    %s2335 = scalar_lea.vmem [#allocation0], 497
    %2336 = vst.msk [vmem:[%s2335] sm:$0x80] %vm2320, %v2319
    %s2337 = scalar_lea.vmem %s0, 8
    %v2338 = vld [vmem:[%s2337] sm:$0xff]
    %2339 = vrot.lane.b32.xlu0 %v2338, 16
    %v2340 = vpop.permute.xlu0 %2339
    %vm2341 = vcmask 31744
    %s2342 = scalar_lea.vmem [#allocation0], 568
    %2343 = vst.msk [vmem:[%s2342] sm:$0x1] %vm2341, %v2340
    %s2344 = scalar_lea.vmem [#allocation0], 631
    %2345 = vst.msk [vmem:[%s2344] sm:$0x2] %vm2341, %v2340
    %s2346 = scalar_lea.vmem [#allocation0], 694
    %2347 = vst.msk [vmem:[%s2346] sm:$0x4] %vm2341, %v2340
    %s2348 = scalar_lea.vmem [#allocation0], 757
    %2349 = vst.msk [vmem:[%s2348] sm:$0x8] %vm2341, %v2340
    %s2350 = scalar_lea.vmem [#allocation0], 820
    %2351 = vst.msk [vmem:[%s2350] sm:$0x10] %vm2341, %v2340
    %s2352 = scalar_lea.vmem [#allocation0], 883
    %2353 = vst.msk [vmem:[%s2352] sm:$0x20] %vm2341, %v2340
    %s2354 = scalar_lea.vmem [#allocation0], 946
    %2355 = vst.msk [vmem:[%s2354] sm:$0x40] %vm2341, %v2340
    %s2356 = scalar_lea.vmem [#allocation0], 1009
    %2357 = vst.msk [vmem:[%s2356] sm:$0x80] %vm2341, %v2340
    %s2358 = scalar_lea.vmem %s0, 16
    %v2359 = vld [vmem:[%s2358] sm:$0xff]
    %2360 = vrot.lane.b32.xlu0 %v2359, 16
    %v2361 = vpop.permute.xlu0 %2360
    %vm2362 = vcmask 31744
    %s2363 = scalar_lea.vmem [#allocation0], 1080
    %2364 = vst.msk [vmem:[%s2363] sm:$0x1] %vm2362, %v2361
    %s2365 = scalar_lea.vmem [#allocation0], 1143
    %2366 = vst.msk [vmem:[%s2365] sm:$0x2] %vm2362, %v2361
    %s2367 = scalar_lea.vmem [#allocation0], 1206
    %2368 = vst.msk [vmem:[%s2367] sm:$0x4] %vm2362, %v2361
    %s2369 = scalar_lea.vmem [#allocation0], 1269
    %2370 = vst.msk [vmem:[%s2369] sm:$0x8] %vm2362, %v2361
    %s2371 = scalar_lea.vmem [#allocation0], 1332
    %2372 = vst.msk [vmem:[%s2371] sm:$0x10] %vm2362, %v2361
    %s2373 = scalar_lea.vmem [#allocation0], 1395
    %2374 = vst.msk [vmem:[%s2373] sm:$0x20] %vm2362, %v2361
    %s2375 = scalar_lea.vmem [#allocation0], 1458
    %2376 = vst.msk [vmem:[%s2375] sm:$0x40] %vm2362, %v2361
    %s2377 = scalar_lea.vmem [#allocation0], 1521
    %2378 = vst.msk [vmem:[%s2377] sm:$0x80] %vm2362, %v2361
    %s2379 = scalar_lea.vmem %s0, 24
    %v2380 = vld [vmem:[%s2379] sm:$0xff]
    %2381 = vrot.lane.b32.xlu0 %v2380, 16
    %v2382 = vpop.permute.xlu0 %2381
    %vm2383 = vcmask 31744
    %s2384 = scalar_lea.vmem [#allocation0], 1592
    %2385 = vst.msk [vmem:[%s2384] sm:$0x1] %vm2383, %v2382
    %s2386 = scalar_lea.vmem [#allocation0], 1655
    %2387 = vst.msk [vmem:[%s2386] sm:$0x2] %vm2383, %v2382
    %s2388 = scalar_lea.vmem [#allocation0], 1718
    %2389 = vst.msk [vmem:[%s2388] sm:$0x4] %vm2383, %v2382
    %s2390 = scalar_lea.vmem [#allocation0], 1781
    %2391 = vst.msk [vmem:[%s2390] sm:$0x8] %vm2383, %v2382
    %s2392 = scalar_lea.vmem [#allocation0], 1844
    %2393 = vst.msk [vmem:[%s2392] sm:$0x10] %vm2383, %v2382
    %s2394 = scalar_lea.vmem [#allocation0], 1907
    %2395 = vst.msk [vmem:[%s2394] sm:$0x20] %vm2383, %v2382
    %s2396 = scalar_lea.vmem [#allocation0], 1970
    %2397 = vst.msk [vmem:[%s2396] sm:$0x40] %vm2383, %v2382
    %s2398 = scalar_lea.vmem [#allocation0], 2033
    %2399 = vst.msk [vmem:[%s2398] sm:$0x80] %vm2383, %v2382
    %v2400 = vld [vmem:[%s0] sm:$0xff]
    %2401 = vrot.lane.b32.xlu0 %v2400, 12
    %v2402 = vpop.permute.xlu0 %2401
    %vm2403 = vcmask 31744
    %s2404 = scalar_lea.vmem [#allocation0], 57
    %2405 = vst.msk [vmem:[%s2404] sm:$0x1] %vm2403, %v2402
    %s2406 = scalar_lea.vmem [#allocation0], 120
    %2407 = vst.msk [vmem:[%s2406] sm:$0x2] %vm2403, %v2402
    %s2408 = scalar_lea.vmem [#allocation0], 183
    %2409 = vst.msk [vmem:[%s2408] sm:$0x4] %vm2403, %v2402
    %s2410 = scalar_lea.vmem [#allocation0], 246
    %2411 = vst.msk [vmem:[%s2410] sm:$0x8] %vm2403, %v2402
    %s2412 = scalar_lea.vmem [#allocation0], 309
    %2413 = vst.msk [vmem:[%s2412] sm:$0x10] %vm2403, %v2402
    %s2414 = scalar_lea.vmem [#allocation0], 372
    %2415 = vst.msk [vmem:[%s2414] sm:$0x20] %vm2403, %v2402
    %s2416 = scalar_lea.vmem [#allocation0], 435
    %2417 = vst.msk [vmem:[%s2416] sm:$0x40] %vm2403, %v2402
    %s2418 = scalar_lea.vmem [#allocation0], 498
    %2419 = vst.msk [vmem:[%s2418] sm:$0x80] %vm2403, %v2402
    %s2420 = scalar_lea.vmem %s0, 8
    %v2421 = vld [vmem:[%s2420] sm:$0xff]
    %2422 = vrot.lane.b32.xlu0 %v2421, 12
    %v2423 = vpop.permute.xlu0 %2422
    %vm2424 = vcmask 31744
    %s2425 = scalar_lea.vmem [#allocation0], 569
    %2426 = vst.msk [vmem:[%s2425] sm:$0x1] %vm2424, %v2423
    %s2427 = scalar_lea.vmem [#allocation0], 632
    %2428 = vst.msk [vmem:[%s2427] sm:$0x2] %vm2424, %v2423
    %s2429 = scalar_lea.vmem [#allocation0], 695
    %2430 = vst.msk [vmem:[%s2429] sm:$0x4] %vm2424, %v2423
    %s2431 = scalar_lea.vmem [#allocation0], 758
    %2432 = vst.msk [vmem:[%s2431] sm:$0x8] %vm2424, %v2423
    %s2433 = scalar_lea.vmem [#allocation0], 821
    %2434 = vst.msk [vmem:[%s2433] sm:$0x10] %vm2424, %v2423
    %s2435 = scalar_lea.vmem [#allocation0], 884
    %2436 = vst.msk [vmem:[%s2435] sm:$0x20] %vm2424, %v2423
    %s2437 = scalar_lea.vmem [#allocation0], 947
    %2438 = vst.msk [vmem:[%s2437] sm:$0x40] %vm2424, %v2423
    %s2439 = scalar_lea.vmem [#allocation0], 1010
    %2440 = vst.msk [vmem:[%s2439] sm:$0x80] %vm2424, %v2423
    %s2441 = scalar_lea.vmem %s0, 16
    %v2442 = vld [vmem:[%s2441] sm:$0xff]
    %2443 = vrot.lane.b32.xlu0 %v2442, 12
    %v2444 = vpop.permute.xlu0 %2443
    %vm2445 = vcmask 31744
    %s2446 = scalar_lea.vmem [#allocation0], 1081
    %2447 = vst.msk [vmem:[%s2446] sm:$0x1] %vm2445, %v2444
    %s2448 = scalar_lea.vmem [#allocation0], 1144
    %2449 = vst.msk [vmem:[%s2448] sm:$0x2] %vm2445, %v2444
    %s2450 = scalar_lea.vmem [#allocation0], 1207
    %2451 = vst.msk [vmem:[%s2450] sm:$0x4] %vm2445, %v2444
    %s2452 = scalar_lea.vmem [#allocation0], 1270
    %2453 = vst.msk [vmem:[%s2452] sm:$0x8] %vm2445, %v2444
    %s2454 = scalar_lea.vmem [#allocation0], 1333
    %2455 = vst.msk [vmem:[%s2454] sm:$0x10] %vm2445, %v2444
    %s2456 = scalar_lea.vmem [#allocation0], 1396
    %2457 = vst.msk [vmem:[%s2456] sm:$0x20] %vm2445, %v2444
    %s2458 = scalar_lea.vmem [#allocation0], 1459
    %2459 = vst.msk [vmem:[%s2458] sm:$0x40] %vm2445, %v2444
    %s2460 = scalar_lea.vmem [#allocation0], 1522
    %2461 = vst.msk [vmem:[%s2460] sm:$0x80] %vm2445, %v2444
    %s2462 = scalar_lea.vmem %s0, 24
    %v2463 = vld [vmem:[%s2462] sm:$0xff]
    %2464 = vrot.lane.b32.xlu0 %v2463, 12
    %v2465 = vpop.permute.xlu0 %2464
    %vm2466 = vcmask 31744
    %s2467 = scalar_lea.vmem [#allocation0], 1593
    %2468 = vst.msk [vmem:[%s2467] sm:$0x1] %vm2466, %v2465
    %s2469 = scalar_lea.vmem [#allocation0], 1656
    %2470 = vst.msk [vmem:[%s2469] sm:$0x2] %vm2466, %v2465
    %s2471 = scalar_lea.vmem [#allocation0], 1719
    %2472 = vst.msk [vmem:[%s2471] sm:$0x4] %vm2466, %v2465
    %s2473 = scalar_lea.vmem [#allocation0], 1782
    %2474 = vst.msk [vmem:[%s2473] sm:$0x8] %vm2466, %v2465
    %s2475 = scalar_lea.vmem [#allocation0], 1845
    %2476 = vst.msk [vmem:[%s2475] sm:$0x10] %vm2466, %v2465
    %s2477 = scalar_lea.vmem [#allocation0], 1908
    %2478 = vst.msk [vmem:[%s2477] sm:$0x20] %vm2466, %v2465
    %s2479 = scalar_lea.vmem [#allocation0], 1971
    %2480 = vst.msk [vmem:[%s2479] sm:$0x40] %vm2466, %v2465
    %s2481 = scalar_lea.vmem [#allocation0], 2034
    %2482 = vst.msk [vmem:[%s2481] sm:$0x80] %vm2466, %v2465
    %v2483 = vld [vmem:[%s0] sm:$0xff]
    %2484 = vrot.lane.b32.xlu0 %v2483, 8
    %v2485 = vpop.permute.xlu0 %2484
    %vm2486 = vcmask 31744
    %s2487 = scalar_lea.vmem [#allocation0], 58
    %2488 = vst.msk [vmem:[%s2487] sm:$0x1] %vm2486, %v2485
    %s2489 = scalar_lea.vmem [#allocation0], 121
    %2490 = vst.msk [vmem:[%s2489] sm:$0x2] %vm2486, %v2485
    %s2491 = scalar_lea.vmem [#allocation0], 184
    %2492 = vst.msk [vmem:[%s2491] sm:$0x4] %vm2486, %v2485
    %s2493 = scalar_lea.vmem [#allocation0], 247
    %2494 = vst.msk [vmem:[%s2493] sm:$0x8] %vm2486, %v2485
    %s2495 = scalar_lea.vmem [#allocation0], 310
    %2496 = vst.msk [vmem:[%s2495] sm:$0x10] %vm2486, %v2485
    %s2497 = scalar_lea.vmem [#allocation0], 373
    %2498 = vst.msk [vmem:[%s2497] sm:$0x20] %vm2486, %v2485
    %s2499 = scalar_lea.vmem [#allocation0], 436
    %2500 = vst.msk [vmem:[%s2499] sm:$0x40] %vm2486, %v2485
    %s2501 = scalar_lea.vmem [#allocation0], 499
    %2502 = vst.msk [vmem:[%s2501] sm:$0x80] %vm2486, %v2485
    %s2503 = scalar_lea.vmem %s0, 8
    %v2504 = vld [vmem:[%s2503] sm:$0xff]
    %2505 = vrot.lane.b32.xlu0 %v2504, 8
    %v2506 = vpop.permute.xlu0 %2505
    %vm2507 = vcmask 31744
    %s2508 = scalar_lea.vmem [#allocation0], 570
    %2509 = vst.msk [vmem:[%s2508] sm:$0x1] %vm2507, %v2506
    %s2510 = scalar_lea.vmem [#allocation0], 633
    %2511 = vst.msk [vmem:[%s2510] sm:$0x2] %vm2507, %v2506
    %s2512 = scalar_lea.vmem [#allocation0], 696
    %2513 = vst.msk [vmem:[%s2512] sm:$0x4] %vm2507, %v2506
    %s2514 = scalar_lea.vmem [#allocation0], 759
    %2515 = vst.msk [vmem:[%s2514] sm:$0x8] %vm2507, %v2506
    %s2516 = scalar_lea.vmem [#allocation0], 822
    %2517 = vst.msk [vmem:[%s2516] sm:$0x10] %vm2507, %v2506
    %s2518 = scalar_lea.vmem [#allocation0], 885
    %2519 = vst.msk [vmem:[%s2518] sm:$0x20] %vm2507, %v2506
    %s2520 = scalar_lea.vmem [#allocation0], 948
    %2521 = vst.msk [vmem:[%s2520] sm:$0x40] %vm2507, %v2506
    %s2522 = scalar_lea.vmem [#allocation0], 1011
    %2523 = vst.msk [vmem:[%s2522] sm:$0x80] %vm2507, %v2506
    %s2524 = scalar_lea.vmem %s0, 16
    %v2525 = vld [vmem:[%s2524] sm:$0xff]
    %2526 = vrot.lane.b32.xlu0 %v2525, 8
    %v2527 = vpop.permute.xlu0 %2526
    %vm2528 = vcmask 31744
    %s2529 = scalar_lea.vmem [#allocation0], 1082
    %2530 = vst.msk [vmem:[%s2529] sm:$0x1] %vm2528, %v2527
    %s2531 = scalar_lea.vmem [#allocation0], 1145
    %2532 = vst.msk [vmem:[%s2531] sm:$0x2] %vm2528, %v2527
    %s2533 = scalar_lea.vmem [#allocation0], 1208
    %2534 = vst.msk [vmem:[%s2533] sm:$0x4] %vm2528, %v2527
    %s2535 = scalar_lea.vmem [#allocation0], 1271
    %2536 = vst.msk [vmem:[%s2535] sm:$0x8] %vm2528, %v2527
    %s2537 = scalar_lea.vmem [#allocation0], 1334
    %2538 = vst.msk [vmem:[%s2537] sm:$0x10] %vm2528, %v2527
    %s2539 = scalar_lea.vmem [#allocation0], 1397
    %2540 = vst.msk [vmem:[%s2539] sm:$0x20] %vm2528, %v2527
    %s2541 = scalar_lea.vmem [#allocation0], 1460
    %2542 = vst.msk [vmem:[%s2541] sm:$0x40] %vm2528, %v2527
    %s2543 = scalar_lea.vmem [#allocation0], 1523
    %2544 = vst.msk [vmem:[%s2543] sm:$0x80] %vm2528, %v2527
    %s2545 = scalar_lea.vmem %s0, 24
    %v2546 = vld [vmem:[%s2545] sm:$0xff]
    %2547 = vrot.lane.b32.xlu0 %v2546, 8
    %v2548 = vpop.permute.xlu0 %2547
    %vm2549 = vcmask 31744
    %s2550 = scalar_lea.vmem [#allocation0], 1594
    %2551 = vst.msk [vmem:[%s2550] sm:$0x1] %vm2549, %v2548
    %s2552 = scalar_lea.vmem [#allocation0], 1657
    %2553 = vst.msk [vmem:[%s2552] sm:$0x2] %vm2549, %v2548
    %s2554 = scalar_lea.vmem [#allocation0], 1720
    %2555 = vst.msk [vmem:[%s2554] sm:$0x4] %vm2549, %v2548
    %s2556 = scalar_lea.vmem [#allocation0], 1783
    %2557 = vst.msk [vmem:[%s2556] sm:$0x8] %vm2549, %v2548
    %s2558 = scalar_lea.vmem [#allocation0], 1846
    %2559 = vst.msk [vmem:[%s2558] sm:$0x10] %vm2549, %v2548
    %s2560 = scalar_lea.vmem [#allocation0], 1909
    %2561 = vst.msk [vmem:[%s2560] sm:$0x20] %vm2549, %v2548
    %s2562 = scalar_lea.vmem [#allocation0], 1972
    %2563 = vst.msk [vmem:[%s2562] sm:$0x40] %vm2549, %v2548
    %s2564 = scalar_lea.vmem [#allocation0], 2035
    %2565 = vst.msk [vmem:[%s2564] sm:$0x80] %vm2549, %v2548
    %v2566 = vld [vmem:[%s0] sm:$0xff]
    %2567 = vrot.lane.b32.xlu0 %v2566, 4
    %v2568 = vpop.permute.xlu0 %2567
    %vm2569 = vcmask 31744
    %s2570 = scalar_lea.vmem [#allocation0], 59
    %2571 = vst.msk [vmem:[%s2570] sm:$0x1] %vm2569, %v2568
    %s2572 = scalar_lea.vmem [#allocation0], 122
    %2573 = vst.msk [vmem:[%s2572] sm:$0x2] %vm2569, %v2568
    %s2574 = scalar_lea.vmem [#allocation0], 185
    %2575 = vst.msk [vmem:[%s2574] sm:$0x4] %vm2569, %v2568
    %s2576 = scalar_lea.vmem [#allocation0], 248
    %2577 = vst.msk [vmem:[%s2576] sm:$0x8] %vm2569, %v2568
    %s2578 = scalar_lea.vmem [#allocation0], 311
    %2579 = vst.msk [vmem:[%s2578] sm:$0x10] %vm2569, %v2568
    %s2580 = scalar_lea.vmem [#allocation0], 374
    %2581 = vst.msk [vmem:[%s2580] sm:$0x20] %vm2569, %v2568
    %s2582 = scalar_lea.vmem [#allocation0], 437
    %2583 = vst.msk [vmem:[%s2582] sm:$0x40] %vm2569, %v2568
    %s2584 = scalar_lea.vmem [#allocation0], 500
    %2585 = vst.msk [vmem:[%s2584] sm:$0x80] %vm2569, %v2568
    %s2586 = scalar_lea.vmem %s0, 8
    %v2587 = vld [vmem:[%s2586] sm:$0xff]
    %2588 = vrot.lane.b32.xlu0 %v2587, 4
    %v2589 = vpop.permute.xlu0 %2588
    %vm2590 = vcmask 31744
    %s2591 = scalar_lea.vmem [#allocation0], 571
    %2592 = vst.msk [vmem:[%s2591] sm:$0x1] %vm2590, %v2589
    %s2593 = scalar_lea.vmem [#allocation0], 634
    %2594 = vst.msk [vmem:[%s2593] sm:$0x2] %vm2590, %v2589
    %s2595 = scalar_lea.vmem [#allocation0], 697
    %2596 = vst.msk [vmem:[%s2595] sm:$0x4] %vm2590, %v2589
    %s2597 = scalar_lea.vmem [#allocation0], 760
    %2598 = vst.msk [vmem:[%s2597] sm:$0x8] %vm2590, %v2589
    %s2599 = scalar_lea.vmem [#allocation0], 823
    %2600 = vst.msk [vmem:[%s2599] sm:$0x10] %vm2590, %v2589
    %s2601 = scalar_lea.vmem [#allocation0], 886
    %2602 = vst.msk [vmem:[%s2601] sm:$0x20] %vm2590, %v2589
    %s2603 = scalar_lea.vmem [#allocation0], 949
    %2604 = vst.msk [vmem:[%s2603] sm:$0x40] %vm2590, %v2589
    %s2605 = scalar_lea.vmem [#allocation0], 1012
    %2606 = vst.msk [vmem:[%s2605] sm:$0x80] %vm2590, %v2589
    %s2607 = scalar_lea.vmem %s0, 16
    %v2608 = vld [vmem:[%s2607] sm:$0xff]
    %2609 = vrot.lane.b32.xlu0 %v2608, 4
    %v2610 = vpop.permute.xlu0 %2609
    %vm2611 = vcmask 31744
    %s2612 = scalar_lea.vmem [#allocation0], 1083
    %2613 = vst.msk [vmem:[%s2612] sm:$0x1] %vm2611, %v2610
    %s2614 = scalar_lea.vmem [#allocation0], 1146
    %2615 = vst.msk [vmem:[%s2614] sm:$0x2] %vm2611, %v2610
    %s2616 = scalar_lea.vmem [#allocation0], 1209
    %2617 = vst.msk [vmem:[%s2616] sm:$0x4] %vm2611, %v2610
    %s2618 = scalar_lea.vmem [#allocation0], 1272
    %2619 = vst.msk [vmem:[%s2618] sm:$0x8] %vm2611, %v2610
    %s2620 = scalar_lea.vmem [#allocation0], 1335
    %2621 = vst.msk [vmem:[%s2620] sm:$0x10] %vm2611, %v2610
    %s2622 = scalar_lea.vmem [#allocation0], 1398
    %2623 = vst.msk [vmem:[%s2622] sm:$0x20] %vm2611, %v2610
    %s2624 = scalar_lea.vmem [#allocation0], 1461
    %2625 = vst.msk [vmem:[%s2624] sm:$0x40] %vm2611, %v2610
    %s2626 = scalar_lea.vmem [#allocation0], 1524
    %2627 = vst.msk [vmem:[%s2626] sm:$0x80] %vm2611, %v2610
    %s2628 = scalar_lea.vmem %s0, 24
    %v2629 = vld [vmem:[%s2628] sm:$0xff]
    %2630 = vrot.lane.b32.xlu0 %v2629, 4
    %v2631 = vpop.permute.xlu0 %2630
    %vm2632 = vcmask 31744
    %s2633 = scalar_lea.vmem [#allocation0], 1595
    %2634 = vst.msk [vmem:[%s2633] sm:$0x1] %vm2632, %v2631
    %s2635 = scalar_lea.vmem [#allocation0], 1658
    %2636 = vst.msk [vmem:[%s2635] sm:$0x2] %vm2632, %v2631
    %s2637 = scalar_lea.vmem [#allocation0], 1721
    %2638 = vst.msk [vmem:[%s2637] sm:$0x4] %vm2632, %v2631
    %s2639 = scalar_lea.vmem [#allocation0], 1784
    %2640 = vst.msk [vmem:[%s2639] sm:$0x8] %vm2632, %v2631
    %s2641 = scalar_lea.vmem [#allocation0], 1847
    %2642 = vst.msk [vmem:[%s2641] sm:$0x10] %vm2632, %v2631
    %s2643 = scalar_lea.vmem [#allocation0], 1910
    %2644 = vst.msk [vmem:[%s2643] sm:$0x20] %vm2632, %v2631
    %s2645 = scalar_lea.vmem [#allocation0], 1973
    %2646 = vst.msk [vmem:[%s2645] sm:$0x40] %vm2632, %v2631
    %s2647 = scalar_lea.vmem [#allocation0], 2036
    %2648 = vst.msk [vmem:[%s2647] sm:$0x80] %vm2632, %v2631
    %s2650 = sshll.u32 1, 4
    %s2651 = ssub.s32 %s2650, 1
    %v2653 = vld [vmem:[#allocation0] sm:%s2651]
    %s2654 = sshll.u32 1, 4
    %s2655 = ssub.s32 %s2654, 1
    %2656 = vst [vmem:[%s1] sm:%s2655] %v2653
    %s2657 = scalar_lea.vmem [#allocation0], 8
    %v2658 = vld [vmem:[%s2657] sm:%s2651]
    %s2659 = sshll.u32 1, 4
    %s2660 = ssub.s32 %s2659, 1
    %s2661 = scalar_lea.vmem %s1, 4
    %2662 = vst [vmem:[%s2661] sm:%s2660] %v2658
    %s2663 = scalar_lea.vmem [#allocation0], 16
    %v2664 = vld [vmem:[%s2663] sm:%s2651]
    %s2665 = sshll.u32 1, 4
    %s2666 = ssub.s32 %s2665, 1
    %s2667 = smul.addr 4, 2
    %s2668 = scalar_lea.vmem %s1, %s2667
    %2669 = vst [vmem:[%s2668] sm:%s2666] %v2664
    %s2670 = scalar_lea.vmem [#allocation0], 24
    %v2671 = vld [vmem:[%s2670] sm:%s2651]
    %s2672 = sshll.u32 1, 4
    %s2673 = ssub.s32 %s2672, 1
    %s2674 = smul.addr 4, 3
    %s2675 = scalar_lea.vmem %s1, %s2674
    %2676 = vst [vmem:[%s2675] sm:%s2673] %v2671
    %s2677 = scalar_lea.vmem [#allocation0], 32
    %v2678 = vld [vmem:[%s2677] sm:%s2651]
    %s2679 = sshll.u32 1, 4
    %s2680 = ssub.s32 %s2679, 1
    %s2681 = smul.addr 4, 4
    %s2682 = scalar_lea.vmem %s1, %s2681
    %2683 = vst [vmem:[%s2682] sm:%s2680] %v2678
    %s2684 = scalar_lea.vmem [#allocation0], 40
    %v2685 = vld [vmem:[%s2684] sm:%s2651]
    %s2686 = sshll.u32 1, 4
    %s2687 = ssub.s32 %s2686, 1
    %s2688 = smul.addr 4, 5
    %s2689 = scalar_lea.vmem %s1, %s2688
    %2690 = vst [vmem:[%s2689] sm:%s2687] %v2685
    %s2691 = scalar_lea.vmem [#allocation0], 48
    %v2692 = vld [vmem:[%s2691] sm:%s2651]
    %s2693 = sshll.u32 1, 4
    %s2694 = ssub.s32 %s2693, 1
    %s2695 = smul.addr 4, 6
    %s2696 = scalar_lea.vmem %s1, %s2695
    %2697 = vst [vmem:[%s2696] sm:%s2694] %v2692
    %s2698 = scalar_lea.vmem [#allocation0], 56
    %v2699 = vld [vmem:[%s2698] sm:%s2651]
    %s2700 = sshll.u32 1, 4
    %s2701 = ssub.s32 %s2700, 1
    %s2702 = smul.addr 4, 7
    %s2703 = scalar_lea.vmem %s1, %s2702
    %2704 = vst [vmem:[%s2703] sm:%s2701] %v2699
    %s2705 = scalar_lea.vmem [#allocation0], 64
    %v2706 = vld [vmem:[%s2705] sm:%s2651]
    %s2707 = sshll.u32 1, 4
    %s2708 = ssub.s32 %s2707, 1
    %s2709 = smul.addr 4, 8
    %s2710 = scalar_lea.vmem %s1, %s2709
    %2711 = vst [vmem:[%s2710] sm:%s2708] %v2706
    %s2712 = scalar_lea.vmem [#allocation0], 72
    %v2713 = vld [vmem:[%s2712] sm:%s2651]
    %s2714 = sshll.u32 1, 4
    %s2715 = ssub.s32 %s2714, 1
    %s2716 = smul.addr 4, 9
    %s2717 = scalar_lea.vmem %s1, %s2716
    %2718 = vst [vmem:[%s2717] sm:%s2715] %v2713
    %s2719 = scalar_lea.vmem [#allocation0], 80
    %v2720 = vld [vmem:[%s2719] sm:%s2651]
    %s2721 = sshll.u32 1, 4
    %s2722 = ssub.s32 %s2721, 1
    %s2723 = smul.addr 4, 10
    %s2724 = scalar_lea.vmem %s1, %s2723
    %2725 = vst [vmem:[%s2724] sm:%s2722] %v2720
    %s2726 = scalar_lea.vmem [#allocation0], 88
    %v2727 = vld [vmem:[%s2726] sm:%s2651]
    %s2728 = sshll.u32 1, 4
    %s2729 = ssub.s32 %s2728, 1
    %s2730 = smul.addr 4, 11
    %s2731 = scalar_lea.vmem %s1, %s2730
    %2732 = vst [vmem:[%s2731] sm:%s2729] %v2727
    %s2733 = scalar_lea.vmem [#allocation0], 96
    %v2734 = vld [vmem:[%s2733] sm:%s2651]
    %s2735 = sshll.u32 1, 4
    %s2736 = ssub.s32 %s2735, 1
    %s2737 = smul.addr 4, 12
    %s2738 = scalar_lea.vmem %s1, %s2737
    %2739 = vst [vmem:[%s2738] sm:%s2736] %v2734
    %s2740 = scalar_lea.vmem [#allocation0], 104
    %v2741 = vld [vmem:[%s2740] sm:%s2651]
    %s2742 = sshll.u32 1, 4
    %s2743 = ssub.s32 %s2742, 1
    %s2744 = smul.addr 4, 13
    %s2745 = scalar_lea.vmem %s1, %s2744
    %2746 = vst [vmem:[%s2745] sm:%s2743] %v2741
    %s2747 = scalar_lea.vmem [#allocation0], 112
    %v2748 = vld [vmem:[%s2747] sm:%s2651]
    %s2749 = sshll.u32 1, 4
    %s2750 = ssub.s32 %s2749, 1
    %s2751 = smul.addr 4, 14
    %s2752 = scalar_lea.vmem %s1, %s2751
    %2753 = vst [vmem:[%s2752] sm:%s2750] %v2748
    %s2754 = scalar_lea.vmem [#allocation0], 120
    %v2755 = vld [vmem:[%s2754] sm:%s2651]
    %s2756 = sshll.u32 1, 4
    %s2757 = ssub.s32 %s2756, 1
    %s2758 = smul.addr 4, 15
    %s2759 = scalar_lea.vmem %s1, %s2758
    %2760 = vst [vmem:[%s2759] sm:%s2757] %v2755
    %s2761 = scalar_lea.vmem [#allocation0], 128
    %v2762 = vld [vmem:[%s2761] sm:%s2651]
    %s2763 = sshll.u32 1, 4
    %s2764 = ssub.s32 %s2763, 1
    %s2765 = smul.addr 4, 16
    %s2766 = scalar_lea.vmem %s1, %s2765
    %2767 = vst [vmem:[%s2766] sm:%s2764] %v2762
    %s2768 = scalar_lea.vmem [#allocation0], 136
    %v2769 = vld [vmem:[%s2768] sm:%s2651]
    %s2770 = sshll.u32 1, 4
    %s2771 = ssub.s32 %s2770, 1
    %s2772 = smul.addr 4, 17
    %s2773 = scalar_lea.vmem %s1, %s2772
    %2774 = vst [vmem:[%s2773] sm:%s2771] %v2769
    %s2775 = scalar_lea.vmem [#allocation0], 144
    %v2776 = vld [vmem:[%s2775] sm:%s2651]
    %s2777 = sshll.u32 1, 4
    %s2778 = ssub.s32 %s2777, 1
    %s2779 = smul.addr 4, 18
    %s2780 = scalar_lea.vmem %s1, %s2779
    %2781 = vst [vmem:[%s2780] sm:%s2778] %v2776
    %s2782 = scalar_lea.vmem [#allocation0], 152
    %v2783 = vld [vmem:[%s2782] sm:%s2651]
    %s2784 = sshll.u32 1, 4
    %s2785 = ssub.s32 %s2784, 1
    %s2786 = smul.addr 4, 19
    %s2787 = scalar_lea.vmem %s1, %s2786
    %2788 = vst [vmem:[%s2787] sm:%s2785] %v2783
    %s2789 = scalar_lea.vmem [#allocation0], 160
    %v2790 = vld [vmem:[%s2789] sm:%s2651]
    %s2791 = sshll.u32 1, 4
    %s2792 = ssub.s32 %s2791, 1
    %s2793 = smul.addr 4, 20
    %s2794 = scalar_lea.vmem %s1, %s2793
    %2795 = vst [vmem:[%s2794] sm:%s2792] %v2790
    %s2796 = scalar_lea.vmem [#allocation0], 168
    %v2797 = vld [vmem:[%s2796] sm:%s2651]
    %s2798 = sshll.u32 1, 4
    %s2799 = ssub.s32 %s2798, 1
    %s2800 = smul.addr 4, 21
    %s2801 = scalar_lea.vmem %s1, %s2800
    %2802 = vst [vmem:[%s2801] sm:%s2799] %v2797
    %s2803 = scalar_lea.vmem [#allocation0], 176
    %v2804 = vld [vmem:[%s2803] sm:%s2651]
    %s2805 = sshll.u32 1, 4
    %s2806 = ssub.s32 %s2805, 1
    %s2807 = smul.addr 4, 22
    %s2808 = scalar_lea.vmem %s1, %s2807
    %2809 = vst [vmem:[%s2808] sm:%s2806] %v2804
    %s2810 = scalar_lea.vmem [#allocation0], 184
    %v2811 = vld [vmem:[%s2810] sm:%s2651]
    %s2812 = sshll.u32 1, 4
    %s2813 = ssub.s32 %s2812, 1
    %s2814 = smul.addr 4, 23
    %s2815 = scalar_lea.vmem %s1, %s2814
    %2816 = vst [vmem:[%s2815] sm:%s2813] %v2811
    %s2817 = scalar_lea.vmem [#allocation0], 192
    %v2818 = vld [vmem:[%s2817] sm:%s2651]
    %s2819 = sshll.u32 1, 4
    %s2820 = ssub.s32 %s2819, 1
    %s2821 = smul.addr 4, 24
    %s2822 = scalar_lea.vmem %s1, %s2821
    %2823 = vst [vmem:[%s2822] sm:%s2820] %v2818
    %s2824 = scalar_lea.vmem [#allocation0], 200
    %v2825 = vld [vmem:[%s2824] sm:%s2651]
    %s2826 = sshll.u32 1, 4
    %s2827 = ssub.s32 %s2826, 1
    %s2828 = smul.addr 4, 25
    %s2829 = scalar_lea.vmem %s1, %s2828
    %2830 = vst [vmem:[%s2829] sm:%s2827] %v2825
    %s2831 = scalar_lea.vmem [#allocation0], 208
    %v2832 = vld [vmem:[%s2831] sm:%s2651]
    %s2833 = sshll.u32 1, 4
    %s2834 = ssub.s32 %s2833, 1
    %s2835 = smul.addr 4, 26
    %s2836 = scalar_lea.vmem %s1, %s2835
    %2837 = vst [vmem:[%s2836] sm:%s2834] %v2832
    %s2838 = scalar_lea.vmem [#allocation0], 216
    %v2839 = vld [vmem:[%s2838] sm:%s2651]
    %s2840 = sshll.u32 1, 4
    %s2841 = ssub.s32 %s2840, 1
    %s2842 = smul.addr 4, 27
    %s2843 = scalar_lea.vmem %s1, %s2842
    %2844 = vst [vmem:[%s2843] sm:%s2841] %v2839
    %s2845 = scalar_lea.vmem [#allocation0], 224
    %v2846 = vld [vmem:[%s2845] sm:%s2651]
    %s2847 = sshll.u32 1, 4
    %s2848 = ssub.s32 %s2847, 1
    %s2849 = smul.addr 4, 28
    %s2850 = scalar_lea.vmem %s1, %s2849
    %2851 = vst [vmem:[%s2850] sm:%s2848] %v2846
    %s2852 = scalar_lea.vmem [#allocation0], 232
    %v2853 = vld [vmem:[%s2852] sm:%s2651]
    %s2854 = sshll.u32 1, 4
    %s2855 = ssub.s32 %s2854, 1
    %s2856 = smul.addr 4, 29
    %s2857 = scalar_lea.vmem %s1, %s2856
    %2858 = vst [vmem:[%s2857] sm:%s2855] %v2853
    %s2859 = scalar_lea.vmem [#allocation0], 240
    %v2860 = vld [vmem:[%s2859] sm:%s2651]
    %s2861 = sshll.u32 1, 4
    %s2862 = ssub.s32 %s2861, 1
    %s2863 = smul.addr 4, 30
    %s2864 = scalar_lea.vmem %s1, %s2863
    %2865 = vst [vmem:[%s2864] sm:%s2862] %v2860
    %s2866 = scalar_lea.vmem [#allocation0], 248
    %v2867 = vld [vmem:[%s2866] sm:%s2651]
    %s2868 = sshll.u32 1, 4
    %s2869 = ssub.s32 %s2868, 1
    %s2870 = smul.addr 4, 31
    %s2871 = scalar_lea.vmem %s1, %s2870
    %2872 = vst [vmem:[%s2871] sm:%s2869] %v2867
    %s2873 = scalar_lea.vmem [#allocation0], 256
    %v2874 = vld [vmem:[%s2873] sm:%s2651]
    %s2875 = sshll.u32 1, 4
    %s2876 = ssub.s32 %s2875, 1
    %s2877 = smul.addr 4, 32
    %s2878 = scalar_lea.vmem %s1, %s2877
    %2879 = vst [vmem:[%s2878] sm:%s2876] %v2874
    %s2880 = scalar_lea.vmem [#allocation0], 264
    %v2881 = vld [vmem:[%s2880] sm:%s2651]
    %s2882 = sshll.u32 1, 4
    %s2883 = ssub.s32 %s2882, 1
    %s2884 = smul.addr 4, 33
    %s2885 = scalar_lea.vmem %s1, %s2884
    %2886 = vst [vmem:[%s2885] sm:%s2883] %v2881
    %s2887 = scalar_lea.vmem [#allocation0], 272
    %v2888 = vld [vmem:[%s2887] sm:%s2651]
    %s2889 = sshll.u32 1, 4
    %s2890 = ssub.s32 %s2889, 1
    %s2891 = smul.addr 4, 34
    %s2892 = scalar_lea.vmem %s1, %s2891
    %2893 = vst [vmem:[%s2892] sm:%s2890] %v2888
    %s2894 = scalar_lea.vmem [#allocation0], 280
    %v2895 = vld [vmem:[%s2894] sm:%s2651]
    %s2896 = sshll.u32 1, 4
    %s2897 = ssub.s32 %s2896, 1
    %s2898 = smul.addr 4, 35
    %s2899 = scalar_lea.vmem %s1, %s2898
    %2900 = vst [vmem:[%s2899] sm:%s2897] %v2895
    %s2901 = scalar_lea.vmem [#allocation0], 288
    %v2902 = vld [vmem:[%s2901] sm:%s2651]
    %s2903 = sshll.u32 1, 4
    %s2904 = ssub.s32 %s2903, 1
    %s2905 = smul.addr 4, 36
    %s2906 = scalar_lea.vmem %s1, %s2905
    %2907 = vst [vmem:[%s2906] sm:%s2904] %v2902
    %s2908 = scalar_lea.vmem [#allocation0], 296
    %v2909 = vld [vmem:[%s2908] sm:%s2651]
    %s2910 = sshll.u32 1, 4
    %s2911 = ssub.s32 %s2910, 1
    %s2912 = smul.addr 4, 37
    %s2913 = scalar_lea.vmem %s1, %s2912
    %2914 = vst [vmem:[%s2913] sm:%s2911] %v2909
    %s2915 = scalar_lea.vmem [#allocation0], 304
    %v2916 = vld [vmem:[%s2915] sm:%s2651]
    %s2917 = sshll.u32 1, 4
    %s2918 = ssub.s32 %s2917, 1
    %s2919 = smul.addr 4, 38
    %s2920 = scalar_lea.vmem %s1, %s2919
    %2921 = vst [vmem:[%s2920] sm:%s2918] %v2916
    %s2922 = scalar_lea.vmem [#allocation0], 312
    %v2923 = vld [vmem:[%s2922] sm:%s2651]
    %s2924 = sshll.u32 1, 4
    %s2925 = ssub.s32 %s2924, 1
    %s2926 = smul.addr 4, 39
    %s2927 = scalar_lea.vmem %s1, %s2926
    %2928 = vst [vmem:[%s2927] sm:%s2925] %v2923
    %s2929 = scalar_lea.vmem [#allocation0], 320
    %v2930 = vld [vmem:[%s2929] sm:%s2651]
    %s2931 = sshll.u32 1, 4
    %s2932 = ssub.s32 %s2931, 1
    %s2933 = smul.addr 4, 40
    %s2934 = scalar_lea.vmem %s1, %s2933
    %2935 = vst [vmem:[%s2934] sm:%s2932] %v2930
    %s2936 = scalar_lea.vmem [#allocation0], 328
    %v2937 = vld [vmem:[%s2936] sm:%s2651]
    %s2938 = sshll.u32 1, 4
    %s2939 = ssub.s32 %s2938, 1
    %s2940 = smul.addr 4, 41
    %s2941 = scalar_lea.vmem %s1, %s2940
    %2942 = vst [vmem:[%s2941] sm:%s2939] %v2937
    %s2943 = scalar_lea.vmem [#allocation0], 336
    %v2944 = vld [vmem:[%s2943] sm:%s2651]
    %s2945 = sshll.u32 1, 4
    %s2946 = ssub.s32 %s2945, 1
    %s2947 = smul.addr 4, 42
    %s2948 = scalar_lea.vmem %s1, %s2947
    %2949 = vst [vmem:[%s2948] sm:%s2946] %v2944
    %s2950 = scalar_lea.vmem [#allocation0], 344
    %v2951 = vld [vmem:[%s2950] sm:%s2651]
    %s2952 = sshll.u32 1, 4
    %s2953 = ssub.s32 %s2952, 1
    %s2954 = smul.addr 4, 43
    %s2955 = scalar_lea.vmem %s1, %s2954
    %2956 = vst [vmem:[%s2955] sm:%s2953] %v2951
    %s2957 = scalar_lea.vmem [#allocation0], 352
    %v2958 = vld [vmem:[%s2957] sm:%s2651]
    %s2959 = sshll.u32 1, 4
    %s2960 = ssub.s32 %s2959, 1
    %s2961 = smul.addr 4, 44
    %s2962 = scalar_lea.vmem %s1, %s2961
    %2963 = vst [vmem:[%s2962] sm:%s2960] %v2958
    %s2964 = scalar_lea.vmem [#allocation0], 360
    %v2965 = vld [vmem:[%s2964] sm:%s2651]
    %s2966 = sshll.u32 1, 4
    %s2967 = ssub.s32 %s2966, 1
    %s2968 = smul.addr 4, 45
    %s2969 = scalar_lea.vmem %s1, %s2968
    %2970 = vst [vmem:[%s2969] sm:%s2967] %v2965
    %s2971 = scalar_lea.vmem [#allocation0], 368
    %v2972 = vld [vmem:[%s2971] sm:%s2651]
    %s2973 = sshll.u32 1, 4
    %s2974 = ssub.s32 %s2973, 1
    %s2975 = smul.addr 4, 46
    %s2976 = scalar_lea.vmem %s1, %s2975
    %2977 = vst [vmem:[%s2976] sm:%s2974] %v2972
    %s2978 = scalar_lea.vmem [#allocation0], 376
    %v2979 = vld [vmem:[%s2978] sm:%s2651]
    %s2980 = sshll.u32 1, 4
    %s2981 = ssub.s32 %s2980, 1
    %s2982 = smul.addr 4, 47
    %s2983 = scalar_lea.vmem %s1, %s2982
    %2984 = vst [vmem:[%s2983] sm:%s2981] %v2979
    %s2985 = scalar_lea.vmem [#allocation0], 384
    %v2986 = vld [vmem:[%s2985] sm:%s2651]
    %s2987 = sshll.u32 1, 4
    %s2988 = ssub.s32 %s2987, 1
    %s2989 = smul.addr 4, 48
    %s2990 = scalar_lea.vmem %s1, %s2989
    %2991 = vst [vmem:[%s2990] sm:%s2988] %v2986
    %s2992 = scalar_lea.vmem [#allocation0], 392
    %v2993 = vld [vmem:[%s2992] sm:%s2651]
    %s2994 = sshll.u32 1, 4
    %s2995 = ssub.s32 %s2994, 1
    %s2996 = smul.addr 4, 49
    %s2997 = scalar_lea.vmem %s1, %s2996
    %2998 = vst [vmem:[%s2997] sm:%s2995] %v2993
    %s2999 = scalar_lea.vmem [#allocation0], 400
    %v3000 = vld [vmem:[%s2999] sm:%s2651]
    %s3001 = sshll.u32 1, 4
    %s3002 = ssub.s32 %s3001, 1
    %s3003 = smul.addr 4, 50
    %s3004 = scalar_lea.vmem %s1, %s3003
    %3005 = vst [vmem:[%s3004] sm:%s3002] %v3000
    %s3006 = scalar_lea.vmem [#allocation0], 408
    %v3007 = vld [vmem:[%s3006] sm:%s2651]
    %s3008 = sshll.u32 1, 4
    %s3009 = ssub.s32 %s3008, 1
    %s3010 = smul.addr 4, 51
    %s3011 = scalar_lea.vmem %s1, %s3010
    %3012 = vst [vmem:[%s3011] sm:%s3009] %v3007
    %s3013 = scalar_lea.vmem [#allocation0], 416
    %v3014 = vld [vmem:[%s3013] sm:%s2651]
    %s3015 = sshll.u32 1, 4
    %s3016 = ssub.s32 %s3015, 1
    %s3017 = smul.addr 4, 52
    %s3018 = scalar_lea.vmem %s1, %s3017
    %3019 = vst [vmem:[%s3018] sm:%s3016] %v3014
    %s3020 = scalar_lea.vmem [#allocation0], 424
    %v3021 = vld [vmem:[%s3020] sm:%s2651]
    %s3022 = sshll.u32 1, 4
    %s3023 = ssub.s32 %s3022, 1
    %s3024 = smul.addr 4, 53
    %s3025 = scalar_lea.vmem %s1, %s3024
    %3026 = vst [vmem:[%s3025] sm:%s3023] %v3021
    %s3027 = scalar_lea.vmem [#allocation0], 432
    %v3028 = vld [vmem:[%s3027] sm:%s2651]
    %s3029 = sshll.u32 1, 4
    %s3030 = ssub.s32 %s3029, 1
    %s3031 = smul.addr 4, 54
    %s3032 = scalar_lea.vmem %s1, %s3031
    %3033 = vst [vmem:[%s3032] sm:%s3030] %v3028
    %s3034 = scalar_lea.vmem [#allocation0], 440
    %v3035 = vld [vmem:[%s3034] sm:%s2651]
    %s3036 = sshll.u32 1, 4
    %s3037 = ssub.s32 %s3036, 1
    %s3038 = smul.addr 4, 55
    %s3039 = scalar_lea.vmem %s1, %s3038
    %3040 = vst [vmem:[%s3039] sm:%s3037] %v3035
    %s3041 = scalar_lea.vmem [#allocation0], 448
    %v3042 = vld [vmem:[%s3041] sm:%s2651]
    %s3043 = sshll.u32 1, 4
    %s3044 = ssub.s32 %s3043, 1
    %s3045 = smul.addr 4, 56
    %s3046 = scalar_lea.vmem %s1, %s3045
    %3047 = vst [vmem:[%s3046] sm:%s3044] %v3042
    %s3048 = scalar_lea.vmem [#allocation0], 456
    %v3049 = vld [vmem:[%s3048] sm:%s2651]
    %s3050 = sshll.u32 1, 4
    %s3051 = ssub.s32 %s3050, 1
    %s3052 = smul.addr 4, 57
    %s3053 = scalar_lea.vmem %s1, %s3052
    %3054 = vst [vmem:[%s3053] sm:%s3051] %v3049
    %s3055 = scalar_lea.vmem [#allocation0], 464
    %v3056 = vld [vmem:[%s3055] sm:%s2651]
    %s3057 = sshll.u32 1, 4
    %s3058 = ssub.s32 %s3057, 1
    %s3059 = smul.addr 4, 58
    %s3060 = scalar_lea.vmem %s1, %s3059
    %3061 = vst [vmem:[%s3060] sm:%s3058] %v3056
    %s3062 = scalar_lea.vmem [#allocation0], 472
    %v3063 = vld [vmem:[%s3062] sm:%s2651]
    %s3064 = sshll.u32 1, 4
    %s3065 = ssub.s32 %s3064, 1
    %s3066 = smul.addr 4, 59
    %s3067 = scalar_lea.vmem %s1, %s3066
    %3068 = vst [vmem:[%s3067] sm:%s3065] %v3063
    %s3069 = scalar_lea.vmem [#allocation0], 480
    %v3070 = vld [vmem:[%s3069] sm:%s2651]
    %s3071 = sshll.u32 1, 4
    %s3072 = ssub.s32 %s3071, 1
    %s3073 = smul.addr 4, 60
    %s3074 = scalar_lea.vmem %s1, %s3073
    %3075 = vst [vmem:[%s3074] sm:%s3072] %v3070
    %s3076 = scalar_lea.vmem [#allocation0], 488
    %v3077 = vld [vmem:[%s3076] sm:%s2651]
    %s3078 = sshll.u32 1, 4
    %s3079 = ssub.s32 %s3078, 1
    %s3080 = smul.addr 4, 61
    %s3081 = scalar_lea.vmem %s1, %s3080
    %3082 = vst [vmem:[%s3081] sm:%s3079] %v3077
    %s3083 = scalar_lea.vmem [#allocation0], 496
    %v3084 = vld [vmem:[%s3083] sm:%s2651]
    %s3085 = sshll.u32 1, 4
    %s3086 = ssub.s32 %s3085, 1
    %s3087 = smul.addr 4, 62
    %s3088 = scalar_lea.vmem %s1, %s3087
    %3089 = vst [vmem:[%s3088] sm:%s3086] %v3084
    %s3090 = scalar_lea.vmem [#allocation0], 504
    %v3091 = vld [vmem:[%s3090] sm:%s2651]
    %s3092 = sshll.u32 1, 4
    %s3093 = ssub.s32 %s3092, 1
    %s3094 = smul.addr 4, 63
    %s3095 = scalar_lea.vmem %s1, %s3094
    %3096 = vst [vmem:[%s3095] sm:%s3093] %v3091
    %s3097 = scalar_lea.vmem [#allocation0], 512
    %v3098 = vld [vmem:[%s3097] sm:%s2651]
    %s3099 = sshll.u32 1, 4
    %s3100 = ssub.s32 %s3099, 1
    %s3101 = smul.addr 4, 64
    %s3102 = scalar_lea.vmem %s1, %s3101
    %3103 = vst [vmem:[%s3102] sm:%s3100] %v3098
    %s3104 = scalar_lea.vmem [#allocation0], 520
    %v3105 = vld [vmem:[%s3104] sm:%s2651]
    %s3106 = sshll.u32 1, 4
    %s3107 = ssub.s32 %s3106, 1
    %s3108 = smul.addr 4, 65
    %s3109 = scalar_lea.vmem %s1, %s3108
    %3110 = vst [vmem:[%s3109] sm:%s3107] %v3105
    %s3111 = scalar_lea.vmem [#allocation0], 528
    %v3112 = vld [vmem:[%s3111] sm:%s2651]
    %s3113 = sshll.u32 1, 4
    %s3114 = ssub.s32 %s3113, 1
    %s3115 = smul.addr 4, 66
    %s3116 = scalar_lea.vmem %s1, %s3115
    %3117 = vst [vmem:[%s3116] sm:%s3114] %v3112
    %s3118 = scalar_lea.vmem [#allocation0], 536
    %v3119 = vld [vmem:[%s3118] sm:%s2651]
    %s3120 = sshll.u32 1, 4
    %s3121 = ssub.s32 %s3120, 1
    %s3122 = smul.addr 4, 67
    %s3123 = scalar_lea.vmem %s1, %s3122
    %3124 = vst [vmem:[%s3123] sm:%s3121] %v3119
    %s3125 = scalar_lea.vmem [#allocation0], 544
    %v3126 = vld [vmem:[%s3125] sm:%s2651]
    %s3127 = sshll.u32 1, 4
    %s3128 = ssub.s32 %s3127, 1
    %s3129 = smul.addr 4, 68
    %s3130 = scalar_lea.vmem %s1, %s3129
    %3131 = vst [vmem:[%s3130] sm:%s3128] %v3126
    %s3132 = scalar_lea.vmem [#allocation0], 552
    %v3133 = vld [vmem:[%s3132] sm:%s2651]
    %s3134 = sshll.u32 1, 4
    %s3135 = ssub.s32 %s3134, 1
    %s3136 = smul.addr 4, 69
    %s3137 = scalar_lea.vmem %s1, %s3136
    %3138 = vst [vmem:[%s3137] sm:%s3135] %v3133
    %s3139 = scalar_lea.vmem [#allocation0], 560
    %v3140 = vld [vmem:[%s3139] sm:%s2651]
    %s3141 = sshll.u32 1, 4
    %s3142 = ssub.s32 %s3141, 1
    %s3143 = smul.addr 4, 70
    %s3144 = scalar_lea.vmem %s1, %s3143
    %3145 = vst [vmem:[%s3144] sm:%s3142] %v3140
    %s3146 = scalar_lea.vmem [#allocation0], 568
    %v3147 = vld [vmem:[%s3146] sm:%s2651]
    %s3148 = sshll.u32 1, 4
    %s3149 = ssub.s32 %s3148, 1
    %s3150 = smul.addr 4, 71
    %s3151 = scalar_lea.vmem %s1, %s3150
    %3152 = vst [vmem:[%s3151] sm:%s3149] %v3147
    %s3153 = scalar_lea.vmem [#allocation0], 576
    %v3154 = vld [vmem:[%s3153] sm:%s2651]
    %s3155 = sshll.u32 1, 4
    %s3156 = ssub.s32 %s3155, 1
    %s3157 = smul.addr 4, 72
    %s3158 = scalar_lea.vmem %s1, %s3157
    %3159 = vst [vmem:[%s3158] sm:%s3156] %v3154
    %s3160 = scalar_lea.vmem [#allocation0], 584
    %v3161 = vld [vmem:[%s3160] sm:%s2651]
    %s3162 = sshll.u32 1, 4
    %s3163 = ssub.s32 %s3162, 1
    %s3164 = smul.addr 4, 73
    %s3165 = scalar_lea.vmem %s1, %s3164
    %3166 = vst [vmem:[%s3165] sm:%s3163] %v3161
    %s3167 = scalar_lea.vmem [#allocation0], 592
    %v3168 = vld [vmem:[%s3167] sm:%s2651]
    %s3169 = sshll.u32 1, 4
    %s3170 = ssub.s32 %s3169, 1
    %s3171 = smul.addr 4, 74
    %s3172 = scalar_lea.vmem %s1, %s3171
    %3173 = vst [vmem:[%s3172] sm:%s3170] %v3168
    %s3174 = scalar_lea.vmem [#allocation0], 600
    %v3175 = vld [vmem:[%s3174] sm:%s2651]
    %s3176 = sshll.u32 1, 4
    %s3177 = ssub.s32 %s3176, 1
    %s3178 = smul.addr 4, 75
    %s3179 = scalar_lea.vmem %s1, %s3178
    %3180 = vst [vmem:[%s3179] sm:%s3177] %v3175
    %s3181 = scalar_lea.vmem [#allocation0], 608
    %v3182 = vld [vmem:[%s3181] sm:%s2651]
    %s3183 = sshll.u32 1, 4
    %s3184 = ssub.s32 %s3183, 1
    %s3185 = smul.addr 4, 76
    %s3186 = scalar_lea.vmem %s1, %s3185
    %3187 = vst [vmem:[%s3186] sm:%s3184] %v3182
    %s3188 = scalar_lea.vmem [#allocation0], 616
    %v3189 = vld [vmem:[%s3188] sm:%s2651]
    %s3190 = sshll.u32 1, 4
    %s3191 = ssub.s32 %s3190, 1
    %s3192 = smul.addr 4, 77
    %s3193 = scalar_lea.vmem %s1, %s3192
    %3194 = vst [vmem:[%s3193] sm:%s3191] %v3189
    %s3195 = scalar_lea.vmem [#allocation0], 624
    %v3196 = vld [vmem:[%s3195] sm:%s2651]
    %s3197 = sshll.u32 1, 4
    %s3198 = ssub.s32 %s3197, 1
    %s3199 = smul.addr 4, 78
    %s3200 = scalar_lea.vmem %s1, %s3199
    %3201 = vst [vmem:[%s3200] sm:%s3198] %v3196
    %s3202 = scalar_lea.vmem [#allocation0], 632
    %v3203 = vld [vmem:[%s3202] sm:%s2651]
    %s3204 = sshll.u32 1, 4
    %s3205 = ssub.s32 %s3204, 1
    %s3206 = smul.addr 4, 79
    %s3207 = scalar_lea.vmem %s1, %s3206
    %3208 = vst [vmem:[%s3207] sm:%s3205] %v3203
    %s3209 = scalar_lea.vmem [#allocation0], 640
    %v3210 = vld [vmem:[%s3209] sm:%s2651]
    %s3211 = sshll.u32 1, 4
    %s3212 = ssub.s32 %s3211, 1
    %s3213 = smul.addr 4, 80
    %s3214 = scalar_lea.vmem %s1, %s3213
    %3215 = vst [vmem:[%s3214] sm:%s3212] %v3210
    %s3216 = scalar_lea.vmem [#allocation0], 648
    %v3217 = vld [vmem:[%s3216] sm:%s2651]
    %s3218 = sshll.u32 1, 4
    %s3219 = ssub.s32 %s3218, 1
    %s3220 = smul.addr 4, 81
    %s3221 = scalar_lea.vmem %s1, %s3220
    %3222 = vst [vmem:[%s3221] sm:%s3219] %v3217
    %s3223 = scalar_lea.vmem [#allocation0], 656
    %v3224 = vld [vmem:[%s3223] sm:%s2651]
    %s3225 = sshll.u32 1, 4
    %s3226 = ssub.s32 %s3225, 1
    %s3227 = smul.addr 4, 82
    %s3228 = scalar_lea.vmem %s1, %s3227
    %3229 = vst [vmem:[%s3228] sm:%s3226] %v3224
    %s3230 = scalar_lea.vmem [#allocation0], 664
    %v3231 = vld [vmem:[%s3230] sm:%s2651]
    %s3232 = sshll.u32 1, 4
    %s3233 = ssub.s32 %s3232, 1
    %s3234 = smul.addr 4, 83
    %s3235 = scalar_lea.vmem %s1, %s3234
    %3236 = vst [vmem:[%s3235] sm:%s3233] %v3231
    %s3237 = scalar_lea.vmem [#allocation0], 672
    %v3238 = vld [vmem:[%s3237] sm:%s2651]
    %s3239 = sshll.u32 1, 4
    %s3240 = ssub.s32 %s3239, 1
    %s3241 = smul.addr 4, 84
    %s3242 = scalar_lea.vmem %s1, %s3241
    %3243 = vst [vmem:[%s3242] sm:%s3240] %v3238
    %s3244 = scalar_lea.vmem [#allocation0], 680
    %v3245 = vld [vmem:[%s3244] sm:%s2651]
    %s3246 = sshll.u32 1, 4
    %s3247 = ssub.s32 %s3246, 1
    %s3248 = smul.addr 4, 85
    %s3249 = scalar_lea.vmem %s1, %s3248
    %3250 = vst [vmem:[%s3249] sm:%s3247] %v3245
    %s3251 = scalar_lea.vmem [#allocation0], 688
    %v3252 = vld [vmem:[%s3251] sm:%s2651]
    %s3253 = sshll.u32 1, 4
    %s3254 = ssub.s32 %s3253, 1
    %s3255 = smul.addr 4, 86
    %s3256 = scalar_lea.vmem %s1, %s3255
    %3257 = vst [vmem:[%s3256] sm:%s3254] %v3252
    %s3258 = scalar_lea.vmem [#allocation0], 696
    %v3259 = vld [vmem:[%s3258] sm:%s2651]
    %s3260 = sshll.u32 1, 4
    %s3261 = ssub.s32 %s3260, 1
    %s3262 = smul.addr 4, 87
    %s3263 = scalar_lea.vmem %s1, %s3262
    %3264 = vst [vmem:[%s3263] sm:%s3261] %v3259
    %s3265 = scalar_lea.vmem [#allocation0], 704
    %v3266 = vld [vmem:[%s3265] sm:%s2651]
    %s3267 = sshll.u32 1, 4
    %s3268 = ssub.s32 %s3267, 1
    %s3269 = smul.addr 4, 88
    %s3270 = scalar_lea.vmem %s1, %s3269
    %3271 = vst [vmem:[%s3270] sm:%s3268] %v3266
    %s3272 = scalar_lea.vmem [#allocation0], 712
    %v3273 = vld [vmem:[%s3272] sm:%s2651]
    %s3274 = sshll.u32 1, 4
    %s3275 = ssub.s32 %s3274, 1
    %s3276 = smul.addr 4, 89
    %s3277 = scalar_lea.vmem %s1, %s3276
    %3278 = vst [vmem:[%s3277] sm:%s3275] %v3273
    %s3279 = scalar_lea.vmem [#allocation0], 720
    %v3280 = vld [vmem:[%s3279] sm:%s2651]
    %s3281 = sshll.u32 1, 4
    %s3282 = ssub.s32 %s3281, 1
    %s3283 = smul.addr 4, 90
    %s3284 = scalar_lea.vmem %s1, %s3283
    %3285 = vst [vmem:[%s3284] sm:%s3282] %v3280
    %s3286 = scalar_lea.vmem [#allocation0], 728
    %v3287 = vld [vmem:[%s3286] sm:%s2651]
    %s3288 = sshll.u32 1, 4
    %s3289 = ssub.s32 %s3288, 1
    %s3290 = smul.addr 4, 91
    %s3291 = scalar_lea.vmem %s1, %s3290
    %3292 = vst [vmem:[%s3291] sm:%s3289] %v3287
    %s3293 = scalar_lea.vmem [#allocation0], 736
    %v3294 = vld [vmem:[%s3293] sm:%s2651]
    %s3295 = sshll.u32 1, 4
    %s3296 = ssub.s32 %s3295, 1
    %s3297 = smul.addr 4, 92
    %s3298 = scalar_lea.vmem %s1, %s3297
    %3299 = vst [vmem:[%s3298] sm:%s3296] %v3294
    %s3300 = scalar_lea.vmem [#allocation0], 744
    %v3301 = vld [vmem:[%s3300] sm:%s2651]
    %s3302 = sshll.u32 1, 4
    %s3303 = ssub.s32 %s3302, 1
    %s3304 = smul.addr 4, 93
    %s3305 = scalar_lea.vmem %s1, %s3304
    %3306 = vst [vmem:[%s3305] sm:%s3303] %v3301
    %s3307 = scalar_lea.vmem [#allocation0], 752
    %v3308 = vld [vmem:[%s3307] sm:%s2651]
    %s3309 = sshll.u32 1, 4
    %s3310 = ssub.s32 %s3309, 1
    %s3311 = smul.addr 4, 94
    %s3312 = scalar_lea.vmem %s1, %s3311
    %3313 = vst [vmem:[%s3312] sm:%s3310] %v3308
    %s3314 = scalar_lea.vmem [#allocation0], 760
    %v3315 = vld [vmem:[%s3314] sm:%s2651]
    %s3316 = sshll.u32 1, 4
    %s3317 = ssub.s32 %s3316, 1
    %s3318 = smul.addr 4, 95
    %s3319 = scalar_lea.vmem %s1, %s3318
    %3320 = vst [vmem:[%s3319] sm:%s3317] %v3315
    %s3321 = scalar_lea.vmem [#allocation0], 768
    %v3322 = vld [vmem:[%s3321] sm:%s2651]
    %s3323 = sshll.u32 1, 4
    %s3324 = ssub.s32 %s3323, 1
    %s3325 = smul.addr 4, 96
    %s3326 = scalar_lea.vmem %s1, %s3325
    %3327 = vst [vmem:[%s3326] sm:%s3324] %v3322
    %s3328 = scalar_lea.vmem [#allocation0], 776
    %v3329 = vld [vmem:[%s3328] sm:%s2651]
    %s3330 = sshll.u32 1, 4
    %s3331 = ssub.s32 %s3330, 1
    %s3332 = smul.addr 4, 97
    %s3333 = scalar_lea.vmem %s1, %s3332
    %3334 = vst [vmem:[%s3333] sm:%s3331] %v3329
    %s3335 = scalar_lea.vmem [#allocation0], 784
    %v3336 = vld [vmem:[%s3335] sm:%s2651]
    %s3337 = sshll.u32 1, 4
    %s3338 = ssub.s32 %s3337, 1
    %s3339 = smul.addr 4, 98
    %s3340 = scalar_lea.vmem %s1, %s3339
    %3341 = vst [vmem:[%s3340] sm:%s3338] %v3336
    %s3342 = scalar_lea.vmem [#allocation0], 792
    %v3343 = vld [vmem:[%s3342] sm:%s2651]
    %s3344 = sshll.u32 1, 4
    %s3345 = ssub.s32 %s3344, 1
    %s3346 = smul.addr 4, 99
    %s3347 = scalar_lea.vmem %s1, %s3346
    %3348 = vst [vmem:[%s3347] sm:%s3345] %v3343
    %s3349 = scalar_lea.vmem [#allocation0], 800
    %v3350 = vld [vmem:[%s3349] sm:%s2651]
    %s3351 = sshll.u32 1, 4
    %s3352 = ssub.s32 %s3351, 1
    %s3353 = smul.addr 4, 100
    %s3354 = scalar_lea.vmem %s1, %s3353
    %3355 = vst [vmem:[%s3354] sm:%s3352] %v3350
    %s3356 = scalar_lea.vmem [#allocation0], 808
    %v3357 = vld [vmem:[%s3356] sm:%s2651]
    %s3358 = sshll.u32 1, 4
    %s3359 = ssub.s32 %s3358, 1
    %s3360 = smul.addr 4, 101
    %s3361 = scalar_lea.vmem %s1, %s3360
    %3362 = vst [vmem:[%s3361] sm:%s3359] %v3357
    %s3363 = scalar_lea.vmem [#allocation0], 816
    %v3364 = vld [vmem:[%s3363] sm:%s2651]
    %s3365 = sshll.u32 1, 4
    %s3366 = ssub.s32 %s3365, 1
    %s3367 = smul.addr 4, 102
    %s3368 = scalar_lea.vmem %s1, %s3367
    %3369 = vst [vmem:[%s3368] sm:%s3366] %v3364
    %s3370 = scalar_lea.vmem [#allocation0], 824
    %v3371 = vld [vmem:[%s3370] sm:%s2651]
    %s3372 = sshll.u32 1, 4
    %s3373 = ssub.s32 %s3372, 1
    %s3374 = smul.addr 4, 103
    %s3375 = scalar_lea.vmem %s1, %s3374
    %3376 = vst [vmem:[%s3375] sm:%s3373] %v3371
    %s3377 = scalar_lea.vmem [#allocation0], 832
    %v3378 = vld [vmem:[%s3377] sm:%s2651]
    %s3379 = sshll.u32 1, 4
    %s3380 = ssub.s32 %s3379, 1
    %s3381 = smul.addr 4, 104
    %s3382 = scalar_lea.vmem %s1, %s3381
    %3383 = vst [vmem:[%s3382] sm:%s3380] %v3378
    %s3384 = scalar_lea.vmem [#allocation0], 840
    %v3385 = vld [vmem:[%s3384] sm:%s2651]
    %s3386 = sshll.u32 1, 4
    %s3387 = ssub.s32 %s3386, 1
    %s3388 = smul.addr 4, 105
    %s3389 = scalar_lea.vmem %s1, %s3388
    %3390 = vst [vmem:[%s3389] sm:%s3387] %v3385
    %s3391 = scalar_lea.vmem [#allocation0], 848
    %v3392 = vld [vmem:[%s3391] sm:%s2651]
    %s3393 = sshll.u32 1, 4
    %s3394 = ssub.s32 %s3393, 1
    %s3395 = smul.addr 4, 106
    %s3396 = scalar_lea.vmem %s1, %s3395
    %3397 = vst [vmem:[%s3396] sm:%s3394] %v3392
    %s3398 = scalar_lea.vmem [#allocation0], 856
    %v3399 = vld [vmem:[%s3398] sm:%s2651]
    %s3400 = sshll.u32 1, 4
    %s3401 = ssub.s32 %s3400, 1
    %s3402 = smul.addr 4, 107
    %s3403 = scalar_lea.vmem %s1, %s3402
    %3404 = vst [vmem:[%s3403] sm:%s3401] %v3399
    %s3405 = scalar_lea.vmem [#allocation0], 864
    %v3406 = vld [vmem:[%s3405] sm:%s2651]
    %s3407 = sshll.u32 1, 4
    %s3408 = ssub.s32 %s3407, 1
    %s3409 = smul.addr 4, 108
    %s3410 = scalar_lea.vmem %s1, %s3409
    %3411 = vst [vmem:[%s3410] sm:%s3408] %v3406
    %s3412 = scalar_lea.vmem [#allocation0], 872
    %v3413 = vld [vmem:[%s3412] sm:%s2651]
    %s3414 = sshll.u32 1, 4
    %s3415 = ssub.s32 %s3414, 1
    %s3416 = smul.addr 4, 109
    %s3417 = scalar_lea.vmem %s1, %s3416
    %3418 = vst [vmem:[%s3417] sm:%s3415] %v3413
    %s3419 = scalar_lea.vmem [#allocation0], 880
    %v3420 = vld [vmem:[%s3419] sm:%s2651]
    %s3421 = sshll.u32 1, 4
    %s3422 = ssub.s32 %s3421, 1
    %s3423 = smul.addr 4, 110
    %s3424 = scalar_lea.vmem %s1, %s3423
    %3425 = vst [vmem:[%s3424] sm:%s3422] %v3420
    %s3426 = scalar_lea.vmem [#allocation0], 888
    %v3427 = vld [vmem:[%s3426] sm:%s2651]
    %s3428 = sshll.u32 1, 4
    %s3429 = ssub.s32 %s3428, 1
    %s3430 = smul.addr 4, 111
    %s3431 = scalar_lea.vmem %s1, %s3430
    %3432 = vst [vmem:[%s3431] sm:%s3429] %v3427
    %s3433 = scalar_lea.vmem [#allocation0], 896
    %v3434 = vld [vmem:[%s3433] sm:%s2651]
    %s3435 = sshll.u32 1, 4
    %s3436 = ssub.s32 %s3435, 1
    %s3437 = smul.addr 4, 112
    %s3438 = scalar_lea.vmem %s1, %s3437
    %3439 = vst [vmem:[%s3438] sm:%s3436] %v3434
    %s3440 = scalar_lea.vmem [#allocation0], 904
    %v3441 = vld [vmem:[%s3440] sm:%s2651]
    %s3442 = sshll.u32 1, 4
    %s3443 = ssub.s32 %s3442, 1
    %s3444 = smul.addr 4, 113
    %s3445 = scalar_lea.vmem %s1, %s3444
    %3446 = vst [vmem:[%s3445] sm:%s3443] %v3441
    %s3447 = scalar_lea.vmem [#allocation0], 912
    %v3448 = vld [vmem:[%s3447] sm:%s2651]
    %s3449 = sshll.u32 1, 4
    %s3450 = ssub.s32 %s3449, 1
    %s3451 = smul.addr 4, 114
    %s3452 = scalar_lea.vmem %s1, %s3451
    %3453 = vst [vmem:[%s3452] sm:%s3450] %v3448
    %s3454 = scalar_lea.vmem [#allocation0], 920
    %v3455 = vld [vmem:[%s3454] sm:%s2651]
    %s3456 = sshll.u32 1, 4
    %s3457 = ssub.s32 %s3456, 1
    %s3458 = smul.addr 4, 115
    %s3459 = scalar_lea.vmem %s1, %s3458
    %3460 = vst [vmem:[%s3459] sm:%s3457] %v3455
    %s3461 = scalar_lea.vmem [#allocation0], 928
    %v3462 = vld [vmem:[%s3461] sm:%s2651]
    %s3463 = sshll.u32 1, 4
    %s3464 = ssub.s32 %s3463, 1
    %s3465 = smul.addr 4, 116
    %s3466 = scalar_lea.vmem %s1, %s3465
    %3467 = vst [vmem:[%s3466] sm:%s3464] %v3462
    %s3468 = scalar_lea.vmem [#allocation0], 936
    %v3469 = vld [vmem:[%s3468] sm:%s2651]
    %s3470 = sshll.u32 1, 4
    %s3471 = ssub.s32 %s3470, 1
    %s3472 = smul.addr 4, 117
    %s3473 = scalar_lea.vmem %s1, %s3472
    %3474 = vst [vmem:[%s3473] sm:%s3471] %v3469
    %s3475 = scalar_lea.vmem [#allocation0], 944
    %v3476 = vld [vmem:[%s3475] sm:%s2651]
    %s3477 = sshll.u32 1, 4
    %s3478 = ssub.s32 %s3477, 1
    %s3479 = smul.addr 4, 118
    %s3480 = scalar_lea.vmem %s1, %s3479
    %3481 = vst [vmem:[%s3480] sm:%s3478] %v3476
    %s3482 = scalar_lea.vmem [#allocation0], 952
    %v3483 = vld [vmem:[%s3482] sm:%s2651]
    %s3484 = sshll.u32 1, 4
    %s3485 = ssub.s32 %s3484, 1
    %s3486 = smul.addr 4, 119
    %s3487 = scalar_lea.vmem %s1, %s3486
    %3488 = vst [vmem:[%s3487] sm:%s3485] %v3483
    %s3489 = scalar_lea.vmem [#allocation0], 960
    %v3490 = vld [vmem:[%s3489] sm:%s2651]
    %s3491 = sshll.u32 1, 4
    %s3492 = ssub.s32 %s3491, 1
    %s3493 = smul.addr 4, 120
    %s3494 = scalar_lea.vmem %s1, %s3493
    %3495 = vst [vmem:[%s3494] sm:%s3492] %v3490
    %s3496 = scalar_lea.vmem [#allocation0], 968
    %v3497 = vld [vmem:[%s3496] sm:%s2651]
    %s3498 = sshll.u32 1, 4
    %s3499 = ssub.s32 %s3498, 1
    %s3500 = smul.addr 4, 121
    %s3501 = scalar_lea.vmem %s1, %s3500
    %3502 = vst [vmem:[%s3501] sm:%s3499] %v3497
    %s3503 = scalar_lea.vmem [#allocation0], 976
    %v3504 = vld [vmem:[%s3503] sm:%s2651]
    %s3505 = sshll.u32 1, 4
    %s3506 = ssub.s32 %s3505, 1
    %s3507 = smul.addr 4, 122
    %s3508 = scalar_lea.vmem %s1, %s3507
    %3509 = vst [vmem:[%s3508] sm:%s3506] %v3504
    %s3510 = scalar_lea.vmem [#allocation0], 984
    %v3511 = vld [vmem:[%s3510] sm:%s2651]
    %s3512 = sshll.u32 1, 4
    %s3513 = ssub.s32 %s3512, 1
    %s3514 = smul.addr 4, 123
    %s3515 = scalar_lea.vmem %s1, %s3514
    %3516 = vst [vmem:[%s3515] sm:%s3513] %v3511
    %s3517 = scalar_lea.vmem [#allocation0], 992
    %v3518 = vld [vmem:[%s3517] sm:%s2651]
    %s3519 = sshll.u32 1, 4
    %s3520 = ssub.s32 %s3519, 1
    %s3521 = smul.addr 4, 124
    %s3522 = scalar_lea.vmem %s1, %s3521
    %3523 = vst [vmem:[%s3522] sm:%s3520] %v3518
    %s3524 = scalar_lea.vmem [#allocation0], 1000
    %v3525 = vld [vmem:[%s3524] sm:%s2651]
    %s3526 = sshll.u32 1, 4
    %s3527 = ssub.s32 %s3526, 1
    %s3528 = smul.addr 4, 125
    %s3529 = scalar_lea.vmem %s1, %s3528
    %3530 = vst [vmem:[%s3529] sm:%s3527] %v3525
    %s3531 = scalar_lea.vmem [#allocation0], 1008
    %v3532 = vld [vmem:[%s3531] sm:%s2651]
    %s3533 = sshll.u32 1, 4
    %s3534 = ssub.s32 %s3533, 1
    %s3535 = smul.addr 4, 126
    %s3536 = scalar_lea.vmem %s1, %s3535
    %3537 = vst [vmem:[%s3536] sm:%s3534] %v3532
    %s3538 = scalar_lea.vmem [#allocation0], 1016
    %v3539 = vld [vmem:[%s3538] sm:%s2651]
    %s3540 = sshll.u32 1, 4
    %s3541 = ssub.s32 %s3540, 1
    %s3542 = smul.addr 4, 127
    %s3543 = scalar_lea.vmem %s1, %s3542
    %3544 = vst [vmem:[%s3543] sm:%s3541] %v3539
    %s3545 = scalar_lea.vmem [#allocation0], 1024
    %v3546 = vld [vmem:[%s3545] sm:%s2651]
    %s3547 = sshll.u32 1, 4
    %s3548 = ssub.s32 %s3547, 1
    %s3549 = smul.addr 4, 128
    %s3550 = scalar_lea.vmem %s1, %s3549
    %3551 = vst [vmem:[%s3550] sm:%s3548] %v3546
    %s3552 = scalar_lea.vmem [#allocation0], 1032
    %v3553 = vld [vmem:[%s3552] sm:%s2651]
    %s3554 = sshll.u32 1, 4
    %s3555 = ssub.s32 %s3554, 1
    %s3556 = smul.addr 4, 129
    %s3557 = scalar_lea.vmem %s1, %s3556
    %3558 = vst [vmem:[%s3557] sm:%s3555] %v3553
    %s3559 = scalar_lea.vmem [#allocation0], 1040
    %v3560 = vld [vmem:[%s3559] sm:%s2651]
    %s3561 = sshll.u32 1, 4
    %s3562 = ssub.s32 %s3561, 1
    %s3563 = smul.addr 4, 130
    %s3564 = scalar_lea.vmem %s1, %s3563
    %3565 = vst [vmem:[%s3564] sm:%s3562] %v3560
    %s3566 = scalar_lea.vmem [#allocation0], 1048
    %v3567 = vld [vmem:[%s3566] sm:%s2651]
    %s3568 = sshll.u32 1, 4
    %s3569 = ssub.s32 %s3568, 1
    %s3570 = smul.addr 4, 131
    %s3571 = scalar_lea.vmem %s1, %s3570
    %3572 = vst [vmem:[%s3571] sm:%s3569] %v3567
    %s3573 = scalar_lea.vmem [#allocation0], 1056
    %v3574 = vld [vmem:[%s3573] sm:%s2651]
    %s3575 = sshll.u32 1, 4
    %s3576 = ssub.s32 %s3575, 1
    %s3577 = smul.addr 4, 132
    %s3578 = scalar_lea.vmem %s1, %s3577
    %3579 = vst [vmem:[%s3578] sm:%s3576] %v3574
    %s3580 = scalar_lea.vmem [#allocation0], 1064
    %v3581 = vld [vmem:[%s3580] sm:%s2651]
    %s3582 = sshll.u32 1, 4
    %s3583 = ssub.s32 %s3582, 1
    %s3584 = smul.addr 4, 133
    %s3585 = scalar_lea.vmem %s1, %s3584
    %3586 = vst [vmem:[%s3585] sm:%s3583] %v3581
    %s3587 = scalar_lea.vmem [#allocation0], 1072
    %v3588 = vld [vmem:[%s3587] sm:%s2651]
    %s3589 = sshll.u32 1, 4
    %s3590 = ssub.s32 %s3589, 1
    %s3591 = smul.addr 4, 134
    %s3592 = scalar_lea.vmem %s1, %s3591
    %3593 = vst [vmem:[%s3592] sm:%s3590] %v3588
    %s3594 = scalar_lea.vmem [#allocation0], 1080
    %v3595 = vld [vmem:[%s3594] sm:%s2651]
    %s3596 = sshll.u32 1, 4
    %s3597 = ssub.s32 %s3596, 1
    %s3598 = smul.addr 4, 135
    %s3599 = scalar_lea.vmem %s1, %s3598
    %3600 = vst [vmem:[%s3599] sm:%s3597] %v3595
    %s3601 = scalar_lea.vmem [#allocation0], 1088
    %v3602 = vld [vmem:[%s3601] sm:%s2651]
    %s3603 = sshll.u32 1, 4
    %s3604 = ssub.s32 %s3603, 1
    %s3605 = smul.addr 4, 136
    %s3606 = scalar_lea.vmem %s1, %s3605
    %3607 = vst [vmem:[%s3606] sm:%s3604] %v3602
    %s3608 = scalar_lea.vmem [#allocation0], 1096
    %v3609 = vld [vmem:[%s3608] sm:%s2651]
    %s3610 = sshll.u32 1, 4
    %s3611 = ssub.s32 %s3610, 1
    %s3612 = smul.addr 4, 137
    %s3613 = scalar_lea.vmem %s1, %s3612
    %3614 = vst [vmem:[%s3613] sm:%s3611] %v3609
    %s3615 = scalar_lea.vmem [#allocation0], 1104
    %v3616 = vld [vmem:[%s3615] sm:%s2651]
    %s3617 = sshll.u32 1, 4
    %s3618 = ssub.s32 %s3617, 1
    %s3619 = smul.addr 4, 138
    %s3620 = scalar_lea.vmem %s1, %s3619
    %3621 = vst [vmem:[%s3620] sm:%s3618] %v3616
    %s3622 = scalar_lea.vmem [#allocation0], 1112
    %v3623 = vld [vmem:[%s3622] sm:%s2651]
    %s3624 = sshll.u32 1, 4
    %s3625 = ssub.s32 %s3624, 1
    %s3626 = smul.addr 4, 139
    %s3627 = scalar_lea.vmem %s1, %s3626
    %3628 = vst [vmem:[%s3627] sm:%s3625] %v3623
    %s3629 = scalar_lea.vmem [#allocation0], 1120
    %v3630 = vld [vmem:[%s3629] sm:%s2651]
    %s3631 = sshll.u32 1, 4
    %s3632 = ssub.s32 %s3631, 1
    %s3633 = smul.addr 4, 140
    %s3634 = scalar_lea.vmem %s1, %s3633
    %3635 = vst [vmem:[%s3634] sm:%s3632] %v3630
    %s3636 = scalar_lea.vmem [#allocation0], 1128
    %v3637 = vld [vmem:[%s3636] sm:%s2651]
    %s3638 = sshll.u32 1, 4
    %s3639 = ssub.s32 %s3638, 1
    %s3640 = smul.addr 4, 141
    %s3641 = scalar_lea.vmem %s1, %s3640
    %3642 = vst [vmem:[%s3641] sm:%s3639] %v3637
    %s3643 = scalar_lea.vmem [#allocation0], 1136
    %v3644 = vld [vmem:[%s3643] sm:%s2651]
    %s3645 = sshll.u32 1, 4
    %s3646 = ssub.s32 %s3645, 1
    %s3647 = smul.addr 4, 142
    %s3648 = scalar_lea.vmem %s1, %s3647
    %3649 = vst [vmem:[%s3648] sm:%s3646] %v3644
    %s3650 = scalar_lea.vmem [#allocation0], 1144
    %v3651 = vld [vmem:[%s3650] sm:%s2651]
    %s3652 = sshll.u32 1, 4
    %s3653 = ssub.s32 %s3652, 1
    %s3654 = smul.addr 4, 143
    %s3655 = scalar_lea.vmem %s1, %s3654
    %3656 = vst [vmem:[%s3655] sm:%s3653] %v3651
    %s3657 = scalar_lea.vmem [#allocation0], 1152
    %v3658 = vld [vmem:[%s3657] sm:%s2651]
    %s3659 = sshll.u32 1, 4
    %s3660 = ssub.s32 %s3659, 1
    %s3661 = smul.addr 4, 144
    %s3662 = scalar_lea.vmem %s1, %s3661
    %3663 = vst [vmem:[%s3662] sm:%s3660] %v3658
    %s3664 = scalar_lea.vmem [#allocation0], 1160
    %v3665 = vld [vmem:[%s3664] sm:%s2651]
    %s3666 = sshll.u32 1, 4
    %s3667 = ssub.s32 %s3666, 1
    %s3668 = smul.addr 4, 145
    %s3669 = scalar_lea.vmem %s1, %s3668
    %3670 = vst [vmem:[%s3669] sm:%s3667] %v3665
    %s3671 = scalar_lea.vmem [#allocation0], 1168
    %v3672 = vld [vmem:[%s3671] sm:%s2651]
    %s3673 = sshll.u32 1, 4
    %s3674 = ssub.s32 %s3673, 1
    %s3675 = smul.addr 4, 146
    %s3676 = scalar_lea.vmem %s1, %s3675
    %3677 = vst [vmem:[%s3676] sm:%s3674] %v3672
    %s3678 = scalar_lea.vmem [#allocation0], 1176
    %v3679 = vld [vmem:[%s3678] sm:%s2651]
    %s3680 = sshll.u32 1, 4
    %s3681 = ssub.s32 %s3680, 1
    %s3682 = smul.addr 4, 147
    %s3683 = scalar_lea.vmem %s1, %s3682
    %3684 = vst [vmem:[%s3683] sm:%s3681] %v3679
    %s3685 = scalar_lea.vmem [#allocation0], 1184
    %v3686 = vld [vmem:[%s3685] sm:%s2651]
    %s3687 = sshll.u32 1, 4
    %s3688 = ssub.s32 %s3687, 1
    %s3689 = smul.addr 4, 148
    %s3690 = scalar_lea.vmem %s1, %s3689
    %3691 = vst [vmem:[%s3690] sm:%s3688] %v3686
    %s3692 = scalar_lea.vmem [#allocation0], 1192
    %v3693 = vld [vmem:[%s3692] sm:%s2651]
    %s3694 = sshll.u32 1, 4
    %s3695 = ssub.s32 %s3694, 1
    %s3696 = smul.addr 4, 149
    %s3697 = scalar_lea.vmem %s1, %s3696
    %3698 = vst [vmem:[%s3697] sm:%s3695] %v3693
    %s3699 = scalar_lea.vmem [#allocation0], 1200
    %v3700 = vld [vmem:[%s3699] sm:%s2651]
    %s3701 = sshll.u32 1, 4
    %s3702 = ssub.s32 %s3701, 1
    %s3703 = smul.addr 4, 150
    %s3704 = scalar_lea.vmem %s1, %s3703
    %3705 = vst [vmem:[%s3704] sm:%s3702] %v3700
    %s3706 = scalar_lea.vmem [#allocation0], 1208
    %v3707 = vld [vmem:[%s3706] sm:%s2651]
    %s3708 = sshll.u32 1, 4
    %s3709 = ssub.s32 %s3708, 1
    %s3710 = smul.addr 4, 151
    %s3711 = scalar_lea.vmem %s1, %s3710
    %3712 = vst [vmem:[%s3711] sm:%s3709] %v3707
    %s3713 = scalar_lea.vmem [#allocation0], 1216
    %v3714 = vld [vmem:[%s3713] sm:%s2651]
    %s3715 = sshll.u32 1, 4
    %s3716 = ssub.s32 %s3715, 1
    %s3717 = smul.addr 4, 152
    %s3718 = scalar_lea.vmem %s1, %s3717
    %3719 = vst [vmem:[%s3718] sm:%s3716] %v3714
    %s3720 = scalar_lea.vmem [#allocation0], 1224
    %v3721 = vld [vmem:[%s3720] sm:%s2651]
    %s3722 = sshll.u32 1, 4
    %s3723 = ssub.s32 %s3722, 1
    %s3724 = smul.addr 4, 153
    %s3725 = scalar_lea.vmem %s1, %s3724
    %3726 = vst [vmem:[%s3725] sm:%s3723] %v3721
    %s3727 = scalar_lea.vmem [#allocation0], 1232
    %v3728 = vld [vmem:[%s3727] sm:%s2651]
    %s3729 = sshll.u32 1, 4
    %s3730 = ssub.s32 %s3729, 1
    %s3731 = smul.addr 4, 154
    %s3732 = scalar_lea.vmem %s1, %s3731
    %3733 = vst [vmem:[%s3732] sm:%s3730] %v3728
    %s3734 = scalar_lea.vmem [#allocation0], 1240
    %v3735 = vld [vmem:[%s3734] sm:%s2651]
    %s3736 = sshll.u32 1, 4
    %s3737 = ssub.s32 %s3736, 1
    %s3738 = smul.addr 4, 155
    %s3739 = scalar_lea.vmem %s1, %s3738
    %3740 = vst [vmem:[%s3739] sm:%s3737] %v3735
    %s3741 = scalar_lea.vmem [#allocation0], 1248
    %v3742 = vld [vmem:[%s3741] sm:%s2651]
    %s3743 = sshll.u32 1, 4
    %s3744 = ssub.s32 %s3743, 1
    %s3745 = smul.addr 4, 156
    %s3746 = scalar_lea.vmem %s1, %s3745
    %3747 = vst [vmem:[%s3746] sm:%s3744] %v3742
    %s3748 = scalar_lea.vmem [#allocation0], 1256
    %v3749 = vld [vmem:[%s3748] sm:%s2651]
    %s3750 = sshll.u32 1, 4
    %s3751 = ssub.s32 %s3750, 1
    %s3752 = smul.addr 4, 157
    %s3753 = scalar_lea.vmem %s1, %s3752
    %3754 = vst [vmem:[%s3753] sm:%s3751] %v3749
    %s3755 = scalar_lea.vmem [#allocation0], 1264
    %v3756 = vld [vmem:[%s3755] sm:%s2651]
    %s3757 = sshll.u32 1, 4
    %s3758 = ssub.s32 %s3757, 1
    %s3759 = smul.addr 4, 158
    %s3760 = scalar_lea.vmem %s1, %s3759
    %3761 = vst [vmem:[%s3760] sm:%s3758] %v3756
    %s3762 = scalar_lea.vmem [#allocation0], 1272
    %v3763 = vld [vmem:[%s3762] sm:%s2651]
    %s3764 = sshll.u32 1, 4
    %s3765 = ssub.s32 %s3764, 1
    %s3766 = smul.addr 4, 159
    %s3767 = scalar_lea.vmem %s1, %s3766
    %3768 = vst [vmem:[%s3767] sm:%s3765] %v3763
    %s3769 = scalar_lea.vmem [#allocation0], 1280
    %v3770 = vld [vmem:[%s3769] sm:%s2651]
    %s3771 = sshll.u32 1, 4
    %s3772 = ssub.s32 %s3771, 1
    %s3773 = smul.addr 4, 160
    %s3774 = scalar_lea.vmem %s1, %s3773
    %3775 = vst [vmem:[%s3774] sm:%s3772] %v3770
    %s3776 = scalar_lea.vmem [#allocation0], 1288
    %v3777 = vld [vmem:[%s3776] sm:%s2651]
    %s3778 = sshll.u32 1, 4
    %s3779 = ssub.s32 %s3778, 1
    %s3780 = smul.addr 4, 161
    %s3781 = scalar_lea.vmem %s1, %s3780
    %3782 = vst [vmem:[%s3781] sm:%s3779] %v3777
    %s3783 = scalar_lea.vmem [#allocation0], 1296
    %v3784 = vld [vmem:[%s3783] sm:%s2651]
    %s3785 = sshll.u32 1, 4
    %s3786 = ssub.s32 %s3785, 1
    %s3787 = smul.addr 4, 162
    %s3788 = scalar_lea.vmem %s1, %s3787
    %3789 = vst [vmem:[%s3788] sm:%s3786] %v3784
    %s3790 = scalar_lea.vmem [#allocation0], 1304
    %v3791 = vld [vmem:[%s3790] sm:%s2651]
    %s3792 = sshll.u32 1, 4
    %s3793 = ssub.s32 %s3792, 1
    %s3794 = smul.addr 4, 163
    %s3795 = scalar_lea.vmem %s1, %s3794
    %3796 = vst [vmem:[%s3795] sm:%s3793] %v3791
    %s3797 = scalar_lea.vmem [#allocation0], 1312
    %v3798 = vld [vmem:[%s3797] sm:%s2651]
    %s3799 = sshll.u32 1, 4
    %s3800 = ssub.s32 %s3799, 1
    %s3801 = smul.addr 4, 164
    %s3802 = scalar_lea.vmem %s1, %s3801
    %3803 = vst [vmem:[%s3802] sm:%s3800] %v3798
    %s3804 = scalar_lea.vmem [#allocation0], 1320
    %v3805 = vld [vmem:[%s3804] sm:%s2651]
    %s3806 = sshll.u32 1, 4
    %s3807 = ssub.s32 %s3806, 1
    %s3808 = smul.addr 4, 165
    %s3809 = scalar_lea.vmem %s1, %s3808
    %3810 = vst [vmem:[%s3809] sm:%s3807] %v3805
    %s3811 = scalar_lea.vmem [#allocation0], 1328
    %v3812 = vld [vmem:[%s3811] sm:%s2651]
    %s3813 = sshll.u32 1, 4
    %s3814 = ssub.s32 %s3813, 1
    %s3815 = smul.addr 4, 166
    %s3816 = scalar_lea.vmem %s1, %s3815
    %3817 = vst [vmem:[%s3816] sm:%s3814] %v3812
    %s3818 = scalar_lea.vmem [#allocation0], 1336
    %v3819 = vld [vmem:[%s3818] sm:%s2651]
    %s3820 = sshll.u32 1, 4
    %s3821 = ssub.s32 %s3820, 1
    %s3822 = smul.addr 4, 167
    %s3823 = scalar_lea.vmem %s1, %s3822
    %3824 = vst [vmem:[%s3823] sm:%s3821] %v3819
    %s3825 = scalar_lea.vmem [#allocation0], 1344
    %v3826 = vld [vmem:[%s3825] sm:%s2651]
    %s3827 = sshll.u32 1, 4
    %s3828 = ssub.s32 %s3827, 1
    %s3829 = smul.addr 4, 168
    %s3830 = scalar_lea.vmem %s1, %s3829
    %3831 = vst [vmem:[%s3830] sm:%s3828] %v3826
    %s3832 = scalar_lea.vmem [#allocation0], 1352
    %v3833 = vld [vmem:[%s3832] sm:%s2651]
    %s3834 = sshll.u32 1, 4
    %s3835 = ssub.s32 %s3834, 1
    %s3836 = smul.addr 4, 169
    %s3837 = scalar_lea.vmem %s1, %s3836
    %3838 = vst [vmem:[%s3837] sm:%s3835] %v3833
    %s3839 = scalar_lea.vmem [#allocation0], 1360
    %v3840 = vld [vmem:[%s3839] sm:%s2651]
    %s3841 = sshll.u32 1, 4
    %s3842 = ssub.s32 %s3841, 1
    %s3843 = smul.addr 4, 170
    %s3844 = scalar_lea.vmem %s1, %s3843
    %3845 = vst [vmem:[%s3844] sm:%s3842] %v3840
    %s3846 = scalar_lea.vmem [#allocation0], 1368
    %v3847 = vld [vmem:[%s3846] sm:%s2651]
    %s3848 = sshll.u32 1, 4
    %s3849 = ssub.s32 %s3848, 1
    %s3850 = smul.addr 4, 171
    %s3851 = scalar_lea.vmem %s1, %s3850
    %3852 = vst [vmem:[%s3851] sm:%s3849] %v3847
    %s3853 = scalar_lea.vmem [#allocation0], 1376
    %v3854 = vld [vmem:[%s3853] sm:%s2651]
    %s3855 = sshll.u32 1, 4
    %s3856 = ssub.s32 %s3855, 1
    %s3857 = smul.addr 4, 172
    %s3858 = scalar_lea.vmem %s1, %s3857
    %3859 = vst [vmem:[%s3858] sm:%s3856] %v3854
    %s3860 = scalar_lea.vmem [#allocation0], 1384
    %v3861 = vld [vmem:[%s3860] sm:%s2651]
    %s3862 = sshll.u32 1, 4
    %s3863 = ssub.s32 %s3862, 1
    %s3864 = smul.addr 4, 173
    %s3865 = scalar_lea.vmem %s1, %s3864
    %3866 = vst [vmem:[%s3865] sm:%s3863] %v3861
    %s3867 = scalar_lea.vmem [#allocation0], 1392
    %v3868 = vld [vmem:[%s3867] sm:%s2651]
    %s3869 = sshll.u32 1, 4
    %s3870 = ssub.s32 %s3869, 1
    %s3871 = smul.addr 4, 174
    %s3872 = scalar_lea.vmem %s1, %s3871
    %3873 = vst [vmem:[%s3872] sm:%s3870] %v3868
    %s3874 = scalar_lea.vmem [#allocation0], 1400
    %v3875 = vld [vmem:[%s3874] sm:%s2651]
    %s3876 = sshll.u32 1, 4
    %s3877 = ssub.s32 %s3876, 1
    %s3878 = smul.addr 4, 175
    %s3879 = scalar_lea.vmem %s1, %s3878
    %3880 = vst [vmem:[%s3879] sm:%s3877] %v3875
    %s3881 = scalar_lea.vmem [#allocation0], 1408
    %v3882 = vld [vmem:[%s3881] sm:%s2651]
    %s3883 = sshll.u32 1, 4
    %s3884 = ssub.s32 %s3883, 1
    %s3885 = smul.addr 4, 176
    %s3886 = scalar_lea.vmem %s1, %s3885
    %3887 = vst [vmem:[%s3886] sm:%s3884] %v3882
    %s3888 = scalar_lea.vmem [#allocation0], 1416
    %v3889 = vld [vmem:[%s3888] sm:%s2651]
    %s3890 = sshll.u32 1, 4
    %s3891 = ssub.s32 %s3890, 1
    %s3892 = smul.addr 4, 177
    %s3893 = scalar_lea.vmem %s1, %s3892
    %3894 = vst [vmem:[%s3893] sm:%s3891] %v3889
    %s3895 = scalar_lea.vmem [#allocation0], 1424
    %v3896 = vld [vmem:[%s3895] sm:%s2651]
    %s3897 = sshll.u32 1, 4
    %s3898 = ssub.s32 %s3897, 1
    %s3899 = smul.addr 4, 178
    %s3900 = scalar_lea.vmem %s1, %s3899
    %3901 = vst [vmem:[%s3900] sm:%s3898] %v3896
    %s3902 = scalar_lea.vmem [#allocation0], 1432
    %v3903 = vld [vmem:[%s3902] sm:%s2651]
    %s3904 = sshll.u32 1, 4
    %s3905 = ssub.s32 %s3904, 1
    %s3906 = smul.addr 4, 179
    %s3907 = scalar_lea.vmem %s1, %s3906
    %3908 = vst [vmem:[%s3907] sm:%s3905] %v3903
    %s3909 = scalar_lea.vmem [#allocation0], 1440
    %v3910 = vld [vmem:[%s3909] sm:%s2651]
    %s3911 = sshll.u32 1, 4
    %s3912 = ssub.s32 %s3911, 1
    %s3913 = smul.addr 4, 180
    %s3914 = scalar_lea.vmem %s1, %s3913
    %3915 = vst [vmem:[%s3914] sm:%s3912] %v3910
    %s3916 = scalar_lea.vmem [#allocation0], 1448
    %v3917 = vld [vmem:[%s3916] sm:%s2651]
    %s3918 = sshll.u32 1, 4
    %s3919 = ssub.s32 %s3918, 1
    %s3920 = smul.addr 4, 181
    %s3921 = scalar_lea.vmem %s1, %s3920
    %3922 = vst [vmem:[%s3921] sm:%s3919] %v3917
    %s3923 = scalar_lea.vmem [#allocation0], 1456
    %v3924 = vld [vmem:[%s3923] sm:%s2651]
    %s3925 = sshll.u32 1, 4
    %s3926 = ssub.s32 %s3925, 1
    %s3927 = smul.addr 4, 182
    %s3928 = scalar_lea.vmem %s1, %s3927
    %3929 = vst [vmem:[%s3928] sm:%s3926] %v3924
    %s3930 = scalar_lea.vmem [#allocation0], 1464
    %v3931 = vld [vmem:[%s3930] sm:%s2651]
    %s3932 = sshll.u32 1, 4
    %s3933 = ssub.s32 %s3932, 1
    %s3934 = smul.addr 4, 183
    %s3935 = scalar_lea.vmem %s1, %s3934
    %3936 = vst [vmem:[%s3935] sm:%s3933] %v3931
    %s3937 = scalar_lea.vmem [#allocation0], 1472
    %v3938 = vld [vmem:[%s3937] sm:%s2651]
    %s3939 = sshll.u32 1, 4
    %s3940 = ssub.s32 %s3939, 1
    %s3941 = smul.addr 4, 184
    %s3942 = scalar_lea.vmem %s1, %s3941
    %3943 = vst [vmem:[%s3942] sm:%s3940] %v3938
    %s3944 = scalar_lea.vmem [#allocation0], 1480
    %v3945 = vld [vmem:[%s3944] sm:%s2651]
    %s3946 = sshll.u32 1, 4
    %s3947 = ssub.s32 %s3946, 1
    %s3948 = smul.addr 4, 185
    %s3949 = scalar_lea.vmem %s1, %s3948
    %3950 = vst [vmem:[%s3949] sm:%s3947] %v3945
    %s3951 = scalar_lea.vmem [#allocation0], 1488
    %v3952 = vld [vmem:[%s3951] sm:%s2651]
    %s3953 = sshll.u32 1, 4
    %s3954 = ssub.s32 %s3953, 1
    %s3955 = smul.addr 4, 186
    %s3956 = scalar_lea.vmem %s1, %s3955
    %3957 = vst [vmem:[%s3956] sm:%s3954] %v3952
    %s3958 = scalar_lea.vmem [#allocation0], 1496
    %v3959 = vld [vmem:[%s3958] sm:%s2651]
    %s3960 = sshll.u32 1, 4
    %s3961 = ssub.s32 %s3960, 1
    %s3962 = smul.addr 4, 187
    %s3963 = scalar_lea.vmem %s1, %s3962
    %3964 = vst [vmem:[%s3963] sm:%s3961] %v3959
    %s3965 = scalar_lea.vmem [#allocation0], 1504
    %v3966 = vld [vmem:[%s3965] sm:%s2651]
    %s3967 = sshll.u32 1, 4
    %s3968 = ssub.s32 %s3967, 1
    %s3969 = smul.addr 4, 188
    %s3970 = scalar_lea.vmem %s1, %s3969
    %3971 = vst [vmem:[%s3970] sm:%s3968] %v3966
    %s3972 = scalar_lea.vmem [#allocation0], 1512
    %v3973 = vld [vmem:[%s3972] sm:%s2651]
    %s3974 = sshll.u32 1, 4
    %s3975 = ssub.s32 %s3974, 1
    %s3976 = smul.addr 4, 189
    %s3977 = scalar_lea.vmem %s1, %s3976
    %3978 = vst [vmem:[%s3977] sm:%s3975] %v3973
    %s3979 = scalar_lea.vmem [#allocation0], 1520
    %v3980 = vld [vmem:[%s3979] sm:%s2651]
    %s3981 = sshll.u32 1, 4
    %s3982 = ssub.s32 %s3981, 1
    %s3983 = smul.addr 4, 190
    %s3984 = scalar_lea.vmem %s1, %s3983
    %3985 = vst [vmem:[%s3984] sm:%s3982] %v3980
    %s3986 = scalar_lea.vmem [#allocation0], 1528
    %v3987 = vld [vmem:[%s3986] sm:%s2651]
    %s3988 = sshll.u32 1, 4
    %s3989 = ssub.s32 %s3988, 1
    %s3990 = smul.addr 4, 191
    %s3991 = scalar_lea.vmem %s1, %s3990
    %3992 = vst [vmem:[%s3991] sm:%s3989] %v3987
    %s3993 = scalar_lea.vmem [#allocation0], 1536
    %v3994 = vld [vmem:[%s3993] sm:%s2651]
    %s3995 = sshll.u32 1, 4
    %s3996 = ssub.s32 %s3995, 1
    %s3997 = smul.addr 4, 192
    %s3998 = scalar_lea.vmem %s1, %s3997
    %3999 = vst [vmem:[%s3998] sm:%s3996] %v3994
    %s4000 = scalar_lea.vmem [#allocation0], 1544
    %v4001 = vld [vmem:[%s4000] sm:%s2651]
    %s4002 = sshll.u32 1, 4
    %s4003 = ssub.s32 %s4002, 1
    %s4004 = smul.addr 4, 193
    %s4005 = scalar_lea.vmem %s1, %s4004
    %4006 = vst [vmem:[%s4005] sm:%s4003] %v4001
    %s4007 = scalar_lea.vmem [#allocation0], 1552
    %v4008 = vld [vmem:[%s4007] sm:%s2651]
    %s4009 = sshll.u32 1, 4
    %s4010 = ssub.s32 %s4009, 1
    %s4011 = smul.addr 4, 194
    %s4012 = scalar_lea.vmem %s1, %s4011
    %4013 = vst [vmem:[%s4012] sm:%s4010] %v4008
    %s4014 = scalar_lea.vmem [#allocation0], 1560
    %v4015 = vld [vmem:[%s4014] sm:%s2651]
    %s4016 = sshll.u32 1, 4
    %s4017 = ssub.s32 %s4016, 1
    %s4018 = smul.addr 4, 195
    %s4019 = scalar_lea.vmem %s1, %s4018
    %4020 = vst [vmem:[%s4019] sm:%s4017] %v4015
    %s4021 = scalar_lea.vmem [#allocation0], 1568
    %v4022 = vld [vmem:[%s4021] sm:%s2651]
    %s4023 = sshll.u32 1, 4
    %s4024 = ssub.s32 %s4023, 1
    %s4025 = smul.addr 4, 196
    %s4026 = scalar_lea.vmem %s1, %s4025
    %4027 = vst [vmem:[%s4026] sm:%s4024] %v4022
    %s4028 = scalar_lea.vmem [#allocation0], 1576
    %v4029 = vld [vmem:[%s4028] sm:%s2651]
    %s4030 = sshll.u32 1, 4
    %s4031 = ssub.s32 %s4030, 1
    %s4032 = smul.addr 4, 197
    %s4033 = scalar_lea.vmem %s1, %s4032
    %4034 = vst [vmem:[%s4033] sm:%s4031] %v4029
    %s4035 = scalar_lea.vmem [#allocation0], 1584
    %v4036 = vld [vmem:[%s4035] sm:%s2651]
    %s4037 = sshll.u32 1, 4
    %s4038 = ssub.s32 %s4037, 1
    %s4039 = smul.addr 4, 198
    %s4040 = scalar_lea.vmem %s1, %s4039
    %4041 = vst [vmem:[%s4040] sm:%s4038] %v4036
    %s4042 = scalar_lea.vmem [#allocation0], 1592
    %v4043 = vld [vmem:[%s4042] sm:%s2651]
    %s4044 = sshll.u32 1, 4
    %s4045 = ssub.s32 %s4044, 1
    %s4046 = smul.addr 4, 199
    %s4047 = scalar_lea.vmem %s1, %s4046
    %4048 = vst [vmem:[%s4047] sm:%s4045] %v4043
    %s4049 = scalar_lea.vmem [#allocation0], 1600
    %v4050 = vld [vmem:[%s4049] sm:%s2651]
    %s4051 = sshll.u32 1, 4
    %s4052 = ssub.s32 %s4051, 1
    %s4053 = smul.addr 4, 200
    %s4054 = scalar_lea.vmem %s1, %s4053
    %4055 = vst [vmem:[%s4054] sm:%s4052] %v4050
    %s4056 = scalar_lea.vmem [#allocation0], 1608
    %v4057 = vld [vmem:[%s4056] sm:%s2651]
    %s4058 = sshll.u32 1, 4
    %s4059 = ssub.s32 %s4058, 1
    %s4060 = smul.addr 4, 201
    %s4061 = scalar_lea.vmem %s1, %s4060
    %4062 = vst [vmem:[%s4061] sm:%s4059] %v4057
    %s4063 = scalar_lea.vmem [#allocation0], 1616
    %v4064 = vld [vmem:[%s4063] sm:%s2651]
    %s4065 = sshll.u32 1, 4
    %s4066 = ssub.s32 %s4065, 1
    %s4067 = smul.addr 4, 202
    %s4068 = scalar_lea.vmem %s1, %s4067
    %4069 = vst [vmem:[%s4068] sm:%s4066] %v4064
    %s4070 = scalar_lea.vmem [#allocation0], 1624
    %v4071 = vld [vmem:[%s4070] sm:%s2651]
    %s4072 = sshll.u32 1, 4
    %s4073 = ssub.s32 %s4072, 1
    %s4074 = smul.addr 4, 203
    %s4075 = scalar_lea.vmem %s1, %s4074
    %4076 = vst [vmem:[%s4075] sm:%s4073] %v4071
    %s4077 = scalar_lea.vmem [#allocation0], 1632
    %v4078 = vld [vmem:[%s4077] sm:%s2651]
    %s4079 = sshll.u32 1, 4
    %s4080 = ssub.s32 %s4079, 1
    %s4081 = smul.addr 4, 204
    %s4082 = scalar_lea.vmem %s1, %s4081
    %4083 = vst [vmem:[%s4082] sm:%s4080] %v4078
    %s4084 = scalar_lea.vmem [#allocation0], 1640
    %v4085 = vld [vmem:[%s4084] sm:%s2651]
    %s4086 = sshll.u32 1, 4
    %s4087 = ssub.s32 %s4086, 1
    %s4088 = smul.addr 4, 205
    %s4089 = scalar_lea.vmem %s1, %s4088
    %4090 = vst [vmem:[%s4089] sm:%s4087] %v4085
    %s4091 = scalar_lea.vmem [#allocation0], 1648
    %v4092 = vld [vmem:[%s4091] sm:%s2651]
    %s4093 = sshll.u32 1, 4
    %s4094 = ssub.s32 %s4093, 1
    %s4095 = smul.addr 4, 206
    %s4096 = scalar_lea.vmem %s1, %s4095
    %4097 = vst [vmem:[%s4096] sm:%s4094] %v4092
    %s4098 = scalar_lea.vmem [#allocation0], 1656
    %v4099 = vld [vmem:[%s4098] sm:%s2651]
    %s4100 = sshll.u32 1, 4
    %s4101 = ssub.s32 %s4100, 1
    %s4102 = smul.addr 4, 207
    %s4103 = scalar_lea.vmem %s1, %s4102
    %4104 = vst [vmem:[%s4103] sm:%s4101] %v4099
    %s4105 = scalar_lea.vmem [#allocation0], 1664
    %v4106 = vld [vmem:[%s4105] sm:%s2651]
    %s4107 = sshll.u32 1, 4
    %s4108 = ssub.s32 %s4107, 1
    %s4109 = smul.addr 4, 208
    %s4110 = scalar_lea.vmem %s1, %s4109
    %4111 = vst [vmem:[%s4110] sm:%s4108] %v4106
    %s4112 = scalar_lea.vmem [#allocation0], 1672
    %v4113 = vld [vmem:[%s4112] sm:%s2651]
    %s4114 = sshll.u32 1, 4
    %s4115 = ssub.s32 %s4114, 1
    %s4116 = smul.addr 4, 209
    %s4117 = scalar_lea.vmem %s1, %s4116
    %4118 = vst [vmem:[%s4117] sm:%s4115] %v4113
    %s4119 = scalar_lea.vmem [#allocation0], 1680
    %v4120 = vld [vmem:[%s4119] sm:%s2651]
    %s4121 = sshll.u32 1, 4
    %s4122 = ssub.s32 %s4121, 1
    %s4123 = smul.addr 4, 210
    %s4124 = scalar_lea.vmem %s1, %s4123
    %4125 = vst [vmem:[%s4124] sm:%s4122] %v4120
    %s4126 = scalar_lea.vmem [#allocation0], 1688
    %v4127 = vld [vmem:[%s4126] sm:%s2651]
    %s4128 = sshll.u32 1, 4
    %s4129 = ssub.s32 %s4128, 1
    %s4130 = smul.addr 4, 211
    %s4131 = scalar_lea.vmem %s1, %s4130
    %4132 = vst [vmem:[%s4131] sm:%s4129] %v4127
    %s4133 = scalar_lea.vmem [#allocation0], 1696
    %v4134 = vld [vmem:[%s4133] sm:%s2651]
    %s4135 = sshll.u32 1, 4
    %s4136 = ssub.s32 %s4135, 1
    %s4137 = smul.addr 4, 212
    %s4138 = scalar_lea.vmem %s1, %s4137
    %4139 = vst [vmem:[%s4138] sm:%s4136] %v4134
    %s4140 = scalar_lea.vmem [#allocation0], 1704
    %v4141 = vld [vmem:[%s4140] sm:%s2651]
    %s4142 = sshll.u32 1, 4
    %s4143 = ssub.s32 %s4142, 1
    %s4144 = smul.addr 4, 213
    %s4145 = scalar_lea.vmem %s1, %s4144
    %4146 = vst [vmem:[%s4145] sm:%s4143] %v4141
    %s4147 = scalar_lea.vmem [#allocation0], 1712
    %v4148 = vld [vmem:[%s4147] sm:%s2651]
    %s4149 = sshll.u32 1, 4
    %s4150 = ssub.s32 %s4149, 1
    %s4151 = smul.addr 4, 214
    %s4152 = scalar_lea.vmem %s1, %s4151
    %4153 = vst [vmem:[%s4152] sm:%s4150] %v4148
    %s4154 = scalar_lea.vmem [#allocation0], 1720
    %v4155 = vld [vmem:[%s4154] sm:%s2651]
    %s4156 = sshll.u32 1, 4
    %s4157 = ssub.s32 %s4156, 1
    %s4158 = smul.addr 4, 215
    %s4159 = scalar_lea.vmem %s1, %s4158
    %4160 = vst [vmem:[%s4159] sm:%s4157] %v4155
    %s4161 = scalar_lea.vmem [#allocation0], 1728
    %v4162 = vld [vmem:[%s4161] sm:%s2651]
    %s4163 = sshll.u32 1, 4
    %s4164 = ssub.s32 %s4163, 1
    %s4165 = smul.addr 4, 216
    %s4166 = scalar_lea.vmem %s1, %s4165
    %4167 = vst [vmem:[%s4166] sm:%s4164] %v4162
    %s4168 = scalar_lea.vmem [#allocation0], 1736
    %v4169 = vld [vmem:[%s4168] sm:%s2651]
    %s4170 = sshll.u32 1, 4
    %s4171 = ssub.s32 %s4170, 1
    %s4172 = smul.addr 4, 217
    %s4173 = scalar_lea.vmem %s1, %s4172
    %4174 = vst [vmem:[%s4173] sm:%s4171] %v4169
    %s4175 = scalar_lea.vmem [#allocation0], 1744
    %v4176 = vld [vmem:[%s4175] sm:%s2651]
    %s4177 = sshll.u32 1, 4
    %s4178 = ssub.s32 %s4177, 1
    %s4179 = smul.addr 4, 218
    %s4180 = scalar_lea.vmem %s1, %s4179
    %4181 = vst [vmem:[%s4180] sm:%s4178] %v4176
    %s4182 = scalar_lea.vmem [#allocation0], 1752
    %v4183 = vld [vmem:[%s4182] sm:%s2651]
    %s4184 = sshll.u32 1, 4
    %s4185 = ssub.s32 %s4184, 1
    %s4186 = smul.addr 4, 219
    %s4187 = scalar_lea.vmem %s1, %s4186
    %4188 = vst [vmem:[%s4187] sm:%s4185] %v4183
    %s4189 = scalar_lea.vmem [#allocation0], 1760
    %v4190 = vld [vmem:[%s4189] sm:%s2651]
    %s4191 = sshll.u32 1, 4
    %s4192 = ssub.s32 %s4191, 1
    %s4193 = smul.addr 4, 220
    %s4194 = scalar_lea.vmem %s1, %s4193
    %4195 = vst [vmem:[%s4194] sm:%s4192] %v4190
    %s4196 = scalar_lea.vmem [#allocation0], 1768
    %v4197 = vld [vmem:[%s4196] sm:%s2651]
    %s4198 = sshll.u32 1, 4
    %s4199 = ssub.s32 %s4198, 1
    %s4200 = smul.addr 4, 221
    %s4201 = scalar_lea.vmem %s1, %s4200
    %4202 = vst [vmem:[%s4201] sm:%s4199] %v4197
    %s4203 = scalar_lea.vmem [#allocation0], 1776
    %v4204 = vld [vmem:[%s4203] sm:%s2651]
    %s4205 = sshll.u32 1, 4
    %s4206 = ssub.s32 %s4205, 1
    %s4207 = smul.addr 4, 222
    %s4208 = scalar_lea.vmem %s1, %s4207
    %4209 = vst [vmem:[%s4208] sm:%s4206] %v4204
    %s4210 = scalar_lea.vmem [#allocation0], 1784
    %v4211 = vld [vmem:[%s4210] sm:%s2651]
    %s4212 = sshll.u32 1, 4
    %s4213 = ssub.s32 %s4212, 1
    %s4214 = smul.addr 4, 223
    %s4215 = scalar_lea.vmem %s1, %s4214
    %4216 = vst [vmem:[%s4215] sm:%s4213] %v4211
    %s4217 = scalar_lea.vmem [#allocation0], 1792
    %v4218 = vld [vmem:[%s4217] sm:%s2651]
    %s4219 = sshll.u32 1, 4
    %s4220 = ssub.s32 %s4219, 1
    %s4221 = smul.addr 4, 224
    %s4222 = scalar_lea.vmem %s1, %s4221
    %4223 = vst [vmem:[%s4222] sm:%s4220] %v4218
    %s4224 = scalar_lea.vmem [#allocation0], 1800
    %v4225 = vld [vmem:[%s4224] sm:%s2651]
    %s4226 = sshll.u32 1, 4
    %s4227 = ssub.s32 %s4226, 1
    %s4228 = smul.addr 4, 225
    %s4229 = scalar_lea.vmem %s1, %s4228
    %4230 = vst [vmem:[%s4229] sm:%s4227] %v4225
    %s4231 = scalar_lea.vmem [#allocation0], 1808
    %v4232 = vld [vmem:[%s4231] sm:%s2651]
    %s4233 = sshll.u32 1, 4
    %s4234 = ssub.s32 %s4233, 1
    %s4235 = smul.addr 4, 226
    %s4236 = scalar_lea.vmem %s1, %s4235
    %4237 = vst [vmem:[%s4236] sm:%s4234] %v4232
    %s4238 = scalar_lea.vmem [#allocation0], 1816
    %v4239 = vld [vmem:[%s4238] sm:%s2651]
    %s4240 = sshll.u32 1, 4
    %s4241 = ssub.s32 %s4240, 1
    %s4242 = smul.addr 4, 227
    %s4243 = scalar_lea.vmem %s1, %s4242
    %4244 = vst [vmem:[%s4243] sm:%s4241] %v4239
    %s4245 = scalar_lea.vmem [#allocation0], 1824
    %v4246 = vld [vmem:[%s4245] sm:%s2651]
    %s4247 = sshll.u32 1, 4
    %s4248 = ssub.s32 %s4247, 1
    %s4249 = smul.addr 4, 228
    %s4250 = scalar_lea.vmem %s1, %s4249
    %4251 = vst [vmem:[%s4250] sm:%s4248] %v4246
    %s4252 = scalar_lea.vmem [#allocation0], 1832
    %v4253 = vld [vmem:[%s4252] sm:%s2651]
    %s4254 = sshll.u32 1, 4
    %s4255 = ssub.s32 %s4254, 1
    %s4256 = smul.addr 4, 229
    %s4257 = scalar_lea.vmem %s1, %s4256
    %4258 = vst [vmem:[%s4257] sm:%s4255] %v4253
    %s4259 = scalar_lea.vmem [#allocation0], 1840
    %v4260 = vld [vmem:[%s4259] sm:%s2651]
    %s4261 = sshll.u32 1, 4
    %s4262 = ssub.s32 %s4261, 1
    %s4263 = smul.addr 4, 230
    %s4264 = scalar_lea.vmem %s1, %s4263
    %4265 = vst [vmem:[%s4264] sm:%s4262] %v4260
    %s4266 = scalar_lea.vmem [#allocation0], 1848
    %v4267 = vld [vmem:[%s4266] sm:%s2651]
    %s4268 = sshll.u32 1, 4
    %s4269 = ssub.s32 %s4268, 1
    %s4270 = smul.addr 4, 231
    %s4271 = scalar_lea.vmem %s1, %s4270
    %4272 = vst [vmem:[%s4271] sm:%s4269] %v4267
    %s4273 = scalar_lea.vmem [#allocation0], 1856
    %v4274 = vld [vmem:[%s4273] sm:%s2651]
    %s4275 = sshll.u32 1, 4
    %s4276 = ssub.s32 %s4275, 1
    %s4277 = smul.addr 4, 232
    %s4278 = scalar_lea.vmem %s1, %s4277
    %4279 = vst [vmem:[%s4278] sm:%s4276] %v4274
    %s4280 = scalar_lea.vmem [#allocation0], 1864
    %v4281 = vld [vmem:[%s4280] sm:%s2651]
    %s4282 = sshll.u32 1, 4
    %s4283 = ssub.s32 %s4282, 1
    %s4284 = smul.addr 4, 233
    %s4285 = scalar_lea.vmem %s1, %s4284
    %4286 = vst [vmem:[%s4285] sm:%s4283] %v4281
    %s4287 = scalar_lea.vmem [#allocation0], 1872
    %v4288 = vld [vmem:[%s4287] sm:%s2651]
    %s4289 = sshll.u32 1, 4
    %s4290 = ssub.s32 %s4289, 1
    %s4291 = smul.addr 4, 234
    %s4292 = scalar_lea.vmem %s1, %s4291
    %4293 = vst [vmem:[%s4292] sm:%s4290] %v4288
    %s4294 = scalar_lea.vmem [#allocation0], 1880
    %v4295 = vld [vmem:[%s4294] sm:%s2651]
    %s4296 = sshll.u32 1, 4
    %s4297 = ssub.s32 %s4296, 1
    %s4298 = smul.addr 4, 235
    %s4299 = scalar_lea.vmem %s1, %s4298
    %4300 = vst [vmem:[%s4299] sm:%s4297] %v4295
    %s4301 = scalar_lea.vmem [#allocation0], 1888
    %v4302 = vld [vmem:[%s4301] sm:%s2651]
    %s4303 = sshll.u32 1, 4
    %s4304 = ssub.s32 %s4303, 1
    %s4305 = smul.addr 4, 236
    %s4306 = scalar_lea.vmem %s1, %s4305
    %4307 = vst [vmem:[%s4306] sm:%s4304] %v4302
    %s4308 = scalar_lea.vmem [#allocation0], 1896
    %v4309 = vld [vmem:[%s4308] sm:%s2651]
    %s4310 = sshll.u32 1, 4
    %s4311 = ssub.s32 %s4310, 1
    %s4312 = smul.addr 4, 237
    %s4313 = scalar_lea.vmem %s1, %s4312
    %4314 = vst [vmem:[%s4313] sm:%s4311] %v4309
    %s4315 = scalar_lea.vmem [#allocation0], 1904
    %v4316 = vld [vmem:[%s4315] sm:%s2651]
    %s4317 = sshll.u32 1, 4
    %s4318 = ssub.s32 %s4317, 1
    %s4319 = smul.addr 4, 238
    %s4320 = scalar_lea.vmem %s1, %s4319
    %4321 = vst [vmem:[%s4320] sm:%s4318] %v4316
    %s4322 = scalar_lea.vmem [#allocation0], 1912
    %v4323 = vld [vmem:[%s4322] sm:%s2651]
    %s4324 = sshll.u32 1, 4
    %s4325 = ssub.s32 %s4324, 1
    %s4326 = smul.addr 4, 239
    %s4327 = scalar_lea.vmem %s1, %s4326
    %4328 = vst [vmem:[%s4327] sm:%s4325] %v4323
    %s4329 = scalar_lea.vmem [#allocation0], 1920
    %v4330 = vld [vmem:[%s4329] sm:%s2651]
    %s4331 = sshll.u32 1, 4
    %s4332 = ssub.s32 %s4331, 1
    %s4333 = smul.addr 4, 240
    %s4334 = scalar_lea.vmem %s1, %s4333
    %4335 = vst [vmem:[%s4334] sm:%s4332] %v4330
    %s4336 = scalar_lea.vmem [#allocation0], 1928
    %v4337 = vld [vmem:[%s4336] sm:%s2651]
    %s4338 = sshll.u32 1, 4
    %s4339 = ssub.s32 %s4338, 1
    %s4340 = smul.addr 4, 241
    %s4341 = scalar_lea.vmem %s1, %s4340
    %4342 = vst [vmem:[%s4341] sm:%s4339] %v4337
    %s4343 = scalar_lea.vmem [#allocation0], 1936
    %v4344 = vld [vmem:[%s4343] sm:%s2651]
    %s4345 = sshll.u32 1, 4
    %s4346 = ssub.s32 %s4345, 1
    %s4347 = smul.addr 4, 242
    %s4348 = scalar_lea.vmem %s1, %s4347
    %4349 = vst [vmem:[%s4348] sm:%s4346] %v4344
    %s4350 = scalar_lea.vmem [#allocation0], 1944
    %v4351 = vld [vmem:[%s4350] sm:%s2651]
    %s4352 = sshll.u32 1, 4
    %s4353 = ssub.s32 %s4352, 1
    %s4354 = smul.addr 4, 243
    %s4355 = scalar_lea.vmem %s1, %s4354
    %4356 = vst [vmem:[%s4355] sm:%s4353] %v4351
    %s4357 = scalar_lea.vmem [#allocation0], 1952
    %v4358 = vld [vmem:[%s4357] sm:%s2651]
    %s4359 = sshll.u32 1, 4
    %s4360 = ssub.s32 %s4359, 1
    %s4361 = smul.addr 4, 244
    %s4362 = scalar_lea.vmem %s1, %s4361
    %4363 = vst [vmem:[%s4362] sm:%s4360] %v4358
    %s4364 = scalar_lea.vmem [#allocation0], 1960
    %v4365 = vld [vmem:[%s4364] sm:%s2651]
    %s4366 = sshll.u32 1, 4
    %s4367 = ssub.s32 %s4366, 1
    %s4368 = smul.addr 4, 245
    %s4369 = scalar_lea.vmem %s1, %s4368
    %4370 = vst [vmem:[%s4369] sm:%s4367] %v4365
    %s4371 = scalar_lea.vmem [#allocation0], 1968
    %v4372 = vld [vmem:[%s4371] sm:%s2651]
    %s4373 = sshll.u32 1, 4
    %s4374 = ssub.s32 %s4373, 1
    %s4375 = smul.addr 4, 246
    %s4376 = scalar_lea.vmem %s1, %s4375
    %4377 = vst [vmem:[%s4376] sm:%s4374] %v4372
    %s4378 = scalar_lea.vmem [#allocation0], 1976
    %v4379 = vld [vmem:[%s4378] sm:%s2651]
    %s4380 = sshll.u32 1, 4
    %s4381 = ssub.s32 %s4380, 1
    %s4382 = smul.addr 4, 247
    %s4383 = scalar_lea.vmem %s1, %s4382
    %4384 = vst [vmem:[%s4383] sm:%s4381] %v4379
    %s4385 = scalar_lea.vmem [#allocation0], 1984
    %v4386 = vld [vmem:[%s4385] sm:%s2651]
    %s4387 = sshll.u32 1, 4
    %s4388 = ssub.s32 %s4387, 1
    %s4389 = smul.addr 4, 248
    %s4390 = scalar_lea.vmem %s1, %s4389
    %4391 = vst [vmem:[%s4390] sm:%s4388] %v4386
    %s4392 = scalar_lea.vmem [#allocation0], 1992
    %v4393 = vld [vmem:[%s4392] sm:%s2651]
    %s4394 = sshll.u32 1, 4
    %s4395 = ssub.s32 %s4394, 1
    %s4396 = smul.addr 4, 249
    %s4397 = scalar_lea.vmem %s1, %s4396
    %4398 = vst [vmem:[%s4397] sm:%s4395] %v4393
    %s4399 = scalar_lea.vmem [#allocation0], 2000
    %v4400 = vld [vmem:[%s4399] sm:%s2651]
    %s4401 = sshll.u32 1, 4
    %s4402 = ssub.s32 %s4401, 1
    %s4403 = smul.addr 4, 250
    %s4404 = scalar_lea.vmem %s1, %s4403
    %4405 = vst [vmem:[%s4404] sm:%s4402] %v4400
    %s4406 = scalar_lea.vmem [#allocation0], 2008
    %v4407 = vld [vmem:[%s4406] sm:%s2651]
    %s4408 = sshll.u32 1, 4
    %s4409 = ssub.s32 %s4408, 1
    %s4410 = smul.addr 4, 251
    %s4411 = scalar_lea.vmem %s1, %s4410
    %4412 = vst [vmem:[%s4411] sm:%s4409] %v4407
    %s4413 = scalar_lea.vmem [#allocation0], 2016
    %v4414 = vld [vmem:[%s4413] sm:%s2651]
    %s4415 = sshll.u32 1, 4
    %s4416 = ssub.s32 %s4415, 1
    %s4417 = smul.addr 4, 252
    %s4418 = scalar_lea.vmem %s1, %s4417
    %4419 = vst [vmem:[%s4418] sm:%s4416] %v4414
    %s4420 = scalar_lea.vmem [#allocation0], 2024
    %v4421 = vld [vmem:[%s4420] sm:%s2651]
    %s4422 = sshll.u32 1, 4
    %s4423 = ssub.s32 %s4422, 1
    %s4424 = smul.addr 4, 253
    %s4425 = scalar_lea.vmem %s1, %s4424
    %4426 = vst [vmem:[%s4425] sm:%s4423] %v4421
    %s4427 = scalar_lea.vmem [#allocation0], 2032
    %v4428 = vld [vmem:[%s4427] sm:%s2651]
    %s4429 = sshll.u32 1, 4
    %s4430 = ssub.s32 %s4429, 1
    %s4431 = smul.addr 4, 254
    %s4432 = scalar_lea.vmem %s1, %s4431
    %4433 = vst [vmem:[%s4432] sm:%s4430] %v4428
    %s4434 = scalar_lea.vmem [#allocation0], 2040
    %v4435 = vld [vmem:[%s4434] sm:%s2651]
    %s4436 = sshll.u32 1, 4
    %s4437 = ssub.s32 %s4436, 1
    %s4438 = smul.addr 4, 255
    %s4439 = scalar_lea.vmem %s1, %s4438
    %4440 = vst [vmem:[%s4439] sm:%s4437] %v4435

// kernel: conv4d_forward.1
$region0: #{conv4d_forward.1}
  #allocation0 [shape = 'u32[]', space=smem, size = 0x4, offset = 0x4, fixed_abs, tag = 'smem constant byte address 0x4 - core index']
  #allocation1 [shape = 'u32[144,128]{1,0:T(1,128)}', space=vmem, size = 0x12000, scoped, tag = 'internal scratch']
  %s0 = inlined_call_operand.vmem [shape: bf16[2,32,128], index: 0, kind: input, shape index: {}]
  %s1 = inlined_call_operand.vmem [shape: bf16[2,128,256], index: 1, kind: input, shape index: {}]
  %s2 = inlined_call_operand.vmem [shape: f32[2,1,256], index: 2, kind: input, shape index: {}]
  %s3 = inlined_call_operand.vmem [shape: bf16[2,256,256], index: 3, kind: input, shape index: {}]
  %s4 = inlined_call_operand.vmem [shape: f32[2,1,256], index: 4, kind: input, shape index: {}]
  %s5 = inlined_call_operand.vmem [shape: bf16[2,256,128], index: 5, kind: input, shape index: {}]
  %s6 = inlined_call_operand.vmem [shape: f32[2,1,128], index: 6, kind: input, shape index: {}]
  %s7 = inlined_call_operand.vmem [shape: f32[2,32,128], index: 7, kind: output, shape index: {}]
  %s8 = sld [smem:[#allocation0]]
  $region61: #{conv4d_forward.1} parent=0
    _
  %s10 = ssub.s32 1, %s8
  %s11 = scalar_select 0, %s10, %s8
  loop: start=0, step=1, limit=4
  $region2: #{conv4d_forward.1} parent=0 // loop_pre_header
    _
  $region3: #{conv4d_forward.1} parent=0 // loop_header
    %s13 = sphi 0, %s17
    %p14 = scmp.ge.s32.totalorder %s13, 4
    %s23 = sphi 0, %s25
    %s26 = sphi 0, %s23
    %s27 = sphi 0, %s26
    %s43 = sphi 0, %s27
    %s49 = sphi 0, %s51
    %s52 = sphi 0, %s49
    %s53 = sphi 0, %s52
    %s69 = sphi 0, %s53
    %s75 = sphi 0, %s77
    %s78 = sphi 0, %s75
    %s79 = sphi 0, %s78
    %s95 = sphi 0, %s79
    %s101 = sphi 0, %s103
    %s104 = sphi 0, %s101
    %s105 = sphi 0, %s104
    %s121 = sphi 0, %s105
    %s127 = sphi 0, %s129
    %s130 = sphi 0, %s127
    %s131 = sphi 0, %s130
    %s147 = sphi 0, %s131
    %s153 = sphi 0, %s155
    %s156 = sphi 0, %s153
    %s157 = sphi 0, %s156
    %s173 = sphi 0, %s157
    %s179 = sphi 0, %s181
    %s182 = sphi 0, %s179
    %s183 = sphi 0, %s182
    %s199 = sphi 0, %s183
    %s205 = sphi 0, %s207
    %s208 = sphi 0, %s205
    %s209 = sphi 0, %s208
    %s225 = sphi 0, %s209
  $region4: #{conv4d_forward.1} parent=0 // loop_header_branch
    %16 = sbr.rel (%p14) target = $region8
  $region5: #{conv4d_forward.1} parent=0 // loop_body
    %s18 = ssub.s32 %s13, 1
    %s19 = ssub.s32 %s13, 2
    %s20 = sadd.s32 %s13, 1
    %s21 = ssub.s32 %s13, %s20
    %p22 = scmp.eq.s32.totalorder %s21, 0
    %s24 = sadd.s32 %s23, 1
    %s25 = scalar_select %p22, %s23, %s24
    %p28 = pneg %p22
    %p29 = scmp.eq.s32.totalorder %s13, 1
    %p30 = por %p28, %p29
    %p31 = scmp.ne.s32.totalorder %s23, %s26
    %p32 = scmp.eq.s32.totalorder %s13, 0
    %p33 = por %p31, %p32
    %p34 = scmp.ne.s32.totalorder %s23, %s26
    %p35 = scmp.eq.s32.totalorder %s18, 1
    %p36 = por %p34, %p35
    %p37 = scmp.ne.s32.totalorder %s26, %s27
    %p38 = scmp.eq.s32.totalorder %s18, 0
    %p39 = por %p37, %p38
    %p40 = scmp.ne.s32.totalorder %s26, %s27
    %p41 = scmp.eq.s32.totalorder %s19, 1
    %p42 = por %p40, %p41
    %p44 = scmp.ne.s32.totalorder %s27, %s43
    %p45 = scmp.eq.s32.totalorder %s19, 0
    %p46 = por %p44, %p45
    %s47 = ssub.s32 %s13, %s20
    %p48 = scmp.eq.s32.totalorder %s47, 0
    %s50 = sadd.s32 %s49, 1
    %s51 = scalar_select %p48, %s49, %s50
    %p54 = pneg %p48
    %p55 = scmp.eq.s32.totalorder %s13, 1
    %p56 = por %p54, %p55
    %p57 = scmp.ne.s32.totalorder %s49, %s52
    %p58 = scmp.eq.s32.totalorder %s13, 0
    %p59 = por %p57, %p58
    %p60 = scmp.ne.s32.totalorder %s49, %s52
    %p61 = scmp.eq.s32.totalorder %s18, 1
    %p62 = por %p60, %p61
    %p63 = scmp.ne.s32.totalorder %s52, %s53
    %p64 = scmp.eq.s32.totalorder %s18, 0
    %p65 = por %p63, %p64
    %p66 = scmp.ne.s32.totalorder %s52, %s53
    %p67 = scmp.eq.s32.totalorder %s19, 1
    %p68 = por %p66, %p67
    %p70 = scmp.ne.s32.totalorder %s53, %s69
    %p71 = scmp.eq.s32.totalorder %s19, 0
    %p72 = por %p70, %p71
    %s73 = ssub.s32 %s13, %s20
    %p74 = scmp.eq.s32.totalorder %s73, 0
    %s76 = sadd.s32 %s75, 1
    %s77 = scalar_select %p74, %s75, %s76
    %p80 = pneg %p74
    %p81 = scmp.eq.s32.totalorder %s13, 1
    %p82 = por %p80, %p81
    %p83 = scmp.ne.s32.totalorder %s75, %s78
    %p84 = scmp.eq.s32.totalorder %s13, 0
    %p85 = por %p83, %p84
    %p86 = scmp.ne.s32.totalorder %s75, %s78
    %p87 = scmp.eq.s32.totalorder %s18, 1
    %p88 = por %p86, %p87
    %p89 = scmp.ne.s32.totalorder %s78, %s79
    %p90 = scmp.eq.s32.totalorder %s18, 0
    %p91 = por %p89, %p90
    %p92 = scmp.ne.s32.totalorder %s78, %s79
    %p93 = scmp.eq.s32.totalorder %s19, 1
    %p94 = por %p92, %p93
    %p96 = scmp.ne.s32.totalorder %s79, %s95
    %p97 = scmp.eq.s32.totalorder %s19, 0
    %p98 = por %p96, %p97
    %s99 = ssub.s32 %s13, %s20
    %p100 = scmp.eq.s32.totalorder %s99, 0
    %s102 = sadd.s32 %s101, 1
    %s103 = scalar_select %p100, %s101, %s102
    %p106 = pneg %p100
    %p107 = scmp.eq.s32.totalorder %s13, 1
    %p108 = por %p106, %p107
    %p109 = scmp.ne.s32.totalorder %s101, %s104
    %p110 = scmp.eq.s32.totalorder %s13, 0
    %p111 = por %p109, %p110
    %p112 = scmp.ne.s32.totalorder %s101, %s104
    %p113 = scmp.eq.s32.totalorder %s18, 1
    %p114 = por %p112, %p113
    %p115 = scmp.ne.s32.totalorder %s104, %s105
    %p116 = scmp.eq.s32.totalorder %s18, 0
    %p117 = por %p115, %p116
    %p118 = scmp.ne.s32.totalorder %s104, %s105
    %p119 = scmp.eq.s32.totalorder %s19, 1
    %p120 = por %p118, %p119
    %p122 = scmp.ne.s32.totalorder %s105, %s121
    %p123 = scmp.eq.s32.totalorder %s19, 0
    %p124 = por %p122, %p123
    %s125 = ssub.s32 %s13, %s20
    %p126 = scmp.eq.s32.totalorder %s125, 0
    %s128 = sadd.s32 %s127, 1
    %s129 = scalar_select %p126, %s127, %s128
    %p132 = pneg %p126
    %p133 = scmp.eq.s32.totalorder %s13, 1
    %p134 = por %p132, %p133
    %p135 = scmp.ne.s32.totalorder %s127, %s130
    %p136 = scmp.eq.s32.totalorder %s13, 0
    %p137 = por %p135, %p136
    %p138 = scmp.ne.s32.totalorder %s127, %s130
    %p139 = scmp.eq.s32.totalorder %s18, 1
    %p140 = por %p138, %p139
    %p141 = scmp.ne.s32.totalorder %s130, %s131
    %p142 = scmp.eq.s32.totalorder %s18, 0
    %p143 = por %p141, %p142
    %p144 = scmp.ne.s32.totalorder %s130, %s131
    %p145 = scmp.eq.s32.totalorder %s19, 1
    %p146 = por %p144, %p145
    %p148 = scmp.ne.s32.totalorder %s131, %s147
    %p149 = scmp.eq.s32.totalorder %s19, 0
    %p150 = por %p148, %p149
    %s151 = ssub.s32 %s13, %s20
    %p152 = scmp.eq.s32.totalorder %s151, 0
    %s154 = sadd.s32 %s153, 1
    %s155 = scalar_select %p152, %s153, %s154
    %p158 = pneg %p152
    %p159 = scmp.eq.s32.totalorder %s13, 1
    %p160 = por %p158, %p159
    %p161 = scmp.ne.s32.totalorder %s153, %s156
    %p162 = scmp.eq.s32.totalorder %s13, 0
    %p163 = por %p161, %p162
    %p164 = scmp.ne.s32.totalorder %s153, %s156
    %p165 = scmp.eq.s32.totalorder %s18, 1
    %p166 = por %p164, %p165
    %p167 = scmp.ne.s32.totalorder %s156, %s157
    %p168 = scmp.eq.s32.totalorder %s18, 0
    %p169 = por %p167, %p168
    %p170 = scmp.ne.s32.totalorder %s156, %s157
    %p171 = scmp.eq.s32.totalorder %s19, 1
    %p172 = por %p170, %p171
    %p174 = scmp.ne.s32.totalorder %s157, %s173
    %p175 = scmp.eq.s32.totalorder %s19, 0
    %p176 = por %p174, %p175
    %s177 = ssub.s32 %s13, %s20
    %p178 = scmp.eq.s32.totalorder %s177, 0
    %s180 = sadd.s32 %s179, 1
    %s181 = scalar_select %p178, %s179, %s180
    %p184 = pneg %p178
    %p185 = scmp.eq.s32.totalorder %s13, 1
    %p186 = por %p184, %p185
    %p187 = scmp.ne.s32.totalorder %s179, %s182
    %p188 = scmp.eq.s32.totalorder %s13, 0
    %p189 = por %p187, %p188
    %p190 = scmp.ne.s32.totalorder %s179, %s182
    %p191 = scmp.eq.s32.totalorder %s18, 1
    %p192 = por %p190, %p191
    %p193 = scmp.ne.s32.totalorder %s182, %s183
    %p194 = scmp.eq.s32.totalorder %s18, 0
    %p195 = por %p193, %p194
    %p196 = scmp.ne.s32.totalorder %s182, %s183
    %p197 = scmp.eq.s32.totalorder %s19, 1
    %p198 = por %p196, %p197
    %p200 = scmp.ne.s32.totalorder %s183, %s199
    %p201 = scmp.eq.s32.totalorder %s19, 0
    %p202 = por %p200, %p201
    %s203 = ssub.s32 %s13, %s20
    %p204 = scmp.eq.s32.totalorder %s203, 0
    %s206 = sadd.s32 %s205, 1
    %s207 = scalar_select %p204, %s205, %s206
    %p210 = pneg %p204
    %p211 = scmp.eq.s32.totalorder %s13, 1
    %p212 = por %p210, %p211
    %p213 = scmp.ne.s32.totalorder %s205, %s208
    %p214 = scmp.eq.s32.totalorder %s13, 0
    %p215 = por %p213, %p214
    %p216 = scmp.ne.s32.totalorder %s205, %s208
    %p217 = scmp.eq.s32.totalorder %s18, 1
    %p218 = por %p216, %p217
    %p219 = scmp.ne.s32.totalorder %s208, %s209
    %p220 = scmp.eq.s32.totalorder %s18, 0
    %p221 = por %p219, %p220
    %p222 = scmp.ne.s32.totalorder %s208, %s209
    %p223 = scmp.eq.s32.totalorder %s19, 1
    %p224 = por %p222, %p223
    %p226 = scmp.ne.s32.totalorder %s209, %s225
    %p227 = scmp.eq.s32.totalorder %s19, 0
    %p228 = por %p226, %p227
    %p229 = scmp.le.s32.totalorder 1, %s13
    %p230 = scmp.lt.s32.totalorder %s13, 3
    %p231 = pnand %p229, %p230
    %p232 = pneg %p231
    // Predicated region
    $region9: #{conv4d_forward.1} parent=5 // pred_check
      _
    $region10: #{conv4d_forward.1} parent=5 // pred_check_branch
      %234 = sbr.rel (%p231) target = $region12
    $region11: #{conv4d_forward.1} parent=5 // pred_region
      %s235 = ssub.s32 %s13, 1
    $region12: #{conv4d_forward.1} parent=5 // pred_fallthru
      _
    %p236 = scmp.lt.s32.totalorder %s13, 2
    // Predicated region
    $region13: #{conv4d_forward.1} parent=5 // pred_check
      %p237 = pneg %p236
    $region14: #{conv4d_forward.1} parent=5 // pred_check_branch
      %239 = sbr.rel (%p237) target = $region16
    $region15: #{conv4d_forward.1} parent=5 // pred_region
      // Predicated region
      $region17: #{conv4d_forward.1} parent=15 // pred_check
        %p240 = pneg %p33
      $region18: #{conv4d_forward.1} parent=15 // pred_check_branch
        %242 = sbr.rel (%p240) target = $region20
      $region19: #{conv4d_forward.1} parent=15 // pred_region
        %p243 = scmp.lt.s32.totalorder %s13, 1
        %s244 = scalar_select %p243, %s13, 1
        %s245 = smul.addr %s244, 4
        %s246 = smul.addr %s245, 4
        %s247 = scalar_lea.vmem %s0, %s246
      $region20: #{conv4d_forward.1} parent=15 // pred_fallthru
        _
      // Predicated region
      $region21: #{conv4d_forward.1} parent=15 // pred_check
        %p248 = pneg %p59
      $region22: #{conv4d_forward.1} parent=15 // pred_check_branch
        %250 = sbr.rel (%p248) target = $region24
      $region23: #{conv4d_forward.1} parent=15 // pred_region
        %p251 = scmp.lt.s32.totalorder %s13, 1
        %s252 = scalar_select %p251, %s13, 1
        %s253 = smul.addr %s252, 32
        %s254 = smul.addr %s253, 4
        %s255 = scalar_lea.vmem %s1, %s254
      $region24: #{conv4d_forward.1} parent=15 // pred_fallthru
        _
      // Predicated region
      $region25: #{conv4d_forward.1} parent=15 // pred_check
        %p256 = pneg %p85
      $region26: #{conv4d_forward.1} parent=15 // pred_check_branch
        %258 = sbr.rel (%p256) target = $region28
      $region27: #{conv4d_forward.1} parent=15 // pred_region
        %p259 = scmp.lt.s32.totalorder %s13, 1
        %s260 = scalar_select %p259, %s13, 1
        %s261 = smul.addr %s260, 2
        %s262 = scalar_lea.vmem %s2, %s261
      $region28: #{conv4d_forward.1} parent=15 // pred_fallthru
        _
      // Predicated region
      $region29: #{conv4d_forward.1} parent=15 // pred_check
        %p263 = pneg %p111
      $region30: #{conv4d_forward.1} parent=15 // pred_check_branch
        %265 = sbr.rel (%p263) target = $region32
      $region31: #{conv4d_forward.1} parent=15 // pred_region
        %p266 = scmp.lt.s32.totalorder %s13, 1
        %s267 = scalar_select %p266, %s13, 1
        %s268 = smul.addr %s267, 64
        %s269 = smul.addr %s268, 4
        %s270 = scalar_lea.vmem %s3, %s269
      $region32: #{conv4d_forward.1} parent=15 // pred_fallthru
        _
      // Predicated region
      $region33: #{conv4d_forward.1} parent=15 // pred_check
        %p271 = pneg %p137
      $region34: #{conv4d_forward.1} parent=15 // pred_check_branch
        %273 = sbr.rel (%p271) target = $region36
      $region35: #{conv4d_forward.1} parent=15 // pred_region
        %p274 = scmp.lt.s32.totalorder %s13, 1
        %s275 = scalar_select %p274, %s13, 1
        %s276 = smul.addr %s275, 2
        %s277 = scalar_lea.vmem %s4, %s276
      $region36: #{conv4d_forward.1} parent=15 // pred_fallthru
        _
      // Predicated region
      $region37: #{conv4d_forward.1} parent=15 // pred_check
        %p278 = pneg %p163
      $region38: #{conv4d_forward.1} parent=15 // pred_check_branch
        %280 = sbr.rel (%p278) target = $region40
      $region39: #{conv4d_forward.1} parent=15 // pred_region
        %p281 = scmp.lt.s32.totalorder %s13, 1
        %s282 = scalar_select %p281, %s13, 1
        %s283 = smul.addr %s282, 32
        %s284 = smul.addr %s283, 4
        %s285 = scalar_lea.vmem %s5, %s284
      $region40: #{conv4d_forward.1} parent=15 // pred_fallthru
        _
      // Predicated region
      $region41: #{conv4d_forward.1} parent=15 // pred_check
        %p286 = pneg %p189
      $region42: #{conv4d_forward.1} parent=15 // pred_check_branch
        %288 = sbr.rel (%p286) target = $region44
      $region43: #{conv4d_forward.1} parent=15 // pred_region
        %p289 = scmp.lt.s32.totalorder %s13, 1
        %s290 = scalar_select %p289, %s13, 1
        %s291 = scalar_lea.vmem %s6, %s290
      $region44: #{conv4d_forward.1} parent=15 // pred_fallthru
        _
    $region16: #{conv4d_forward.1} parent=5 // pred_fallthru
      _
    %p292 = scmp.le.s32.totalorder 1, %s13
    %p293 = scmp.lt.s32.totalorder %s13, 3
    %p294 = pnand %p292, %p293
    %p295 = pneg %p294
    // Predicated region
    $region45: #{conv4d_forward.1} parent=5 // pred_check
      _
    $region46: #{conv4d_forward.1} parent=5 // pred_check_branch
      %297 = sbr.rel (%p294) target = $region48
    $region47: #{conv4d_forward.1} parent=5 // pred_region
      %s298 = ssub.s32 %s13, 1
      %p299 = scmp.lt.s32.totalorder %s18, 1
      %s300 = scalar_select %p299, %s18, 1
      %s301 = smul.addr %s300, 4
      %s302 = smul.addr %s301, 4
      %s303 = scalar_lea.vmem %s0, %s302
      %p304 = pneg %p39
      %p305 = pneg %p36
      %p306 = scmp.lt.s32.totalorder %s18, 1
      %s307 = scalar_select %p306, %s18, 1
      %s308 = smul.addr %s307, 32
      %s309 = smul.addr %s308, 4
      %s310 = scalar_lea.vmem %s1, %s309
      %p311 = pneg %p65
      %p312 = pneg %p62
      %p313 = scmp.lt.s32.totalorder %s18, 1
      %s314 = scalar_select %p313, %s18, 1
      %s315 = smul.addr %s314, 2
      %s316 = scalar_lea.vmem %s2, %s315
      %p317 = pneg %p91
      %p318 = pneg %p88
      %p319 = scmp.lt.s32.totalorder %s18, 1
      %s320 = scalar_select %p319, %s18, 1
      %s321 = smul.addr %s320, 64
      %s322 = smul.addr %s321, 4
      %s323 = scalar_lea.vmem %s3, %s322
      %p324 = pneg %p117
      %p325 = pneg %p114
      %p326 = scmp.lt.s32.totalorder %s18, 1
      %s327 = scalar_select %p326, %s18, 1
      %s328 = smul.addr %s327, 2
      %s329 = scalar_lea.vmem %s4, %s328
      %p330 = pneg %p143
      %p331 = pneg %p140
      %p332 = scmp.lt.s32.totalorder %s18, 1
      %s333 = scalar_select %p332, %s18, 1
      %s334 = smul.addr %s333, 32
      %s335 = smul.addr %s334, 4
      %s336 = scalar_lea.vmem %s5, %s335
      %p337 = pneg %p169
      %p338 = pneg %p166
      %p339 = scmp.lt.s32.totalorder %s18, 1
      %s340 = scalar_select %p339, %s18, 1
      %s341 = scalar_lea.vmem %s6, %s340
      %p342 = pneg %p195
      %p343 = pneg %p192
      %p344 = pneg %p221
      %p345 = pneg %p218
      %p346 = scmp.lt.s32.totalorder %s18, 1
      %s347 = scalar_select %p346, %s18, 1
      %s348 = smul.addr %s347, 4
      %s349 = smul.addr %s348, 8
      %s350 = scalar_lea.vmem %s7, %s349
      %p351 = scmp.lt.s32.totalorder %s18, 1
      %s352 = scalar_select %p351, %s18, 1
      %s353 = smul.addr %s352, 4
      %s354 = smul.addr %s353, 4
      %s355 = scalar_lea.vmem %s0, %s354
      %p356 = scmp.lt.s32.totalorder %s18, 1
      %s357 = scalar_select %p356, %s18, 1
      %s358 = smul.addr %s357, 32
      %s359 = smul.addr %s358, 4
      %s360 = scalar_lea.vmem %s1, %s359
      %p361 = scmp.lt.s32.totalorder %s18, 1
      %s362 = scalar_select %p361, %s18, 1
      %s363 = smul.addr %s362, 2
      %s364 = scalar_lea.vmem %s2, %s363
      %p365 = scmp.lt.s32.totalorder %s18, 1
      %s366 = scalar_select %p365, %s18, 1
      %s367 = smul.addr %s366, 64
      %s368 = smul.addr %s367, 4
      %s369 = scalar_lea.vmem %s3, %s368
      %p370 = scmp.lt.s32.totalorder %s18, 1
      %s371 = scalar_select %p370, %s18, 1
      %s372 = smul.addr %s371, 2
      %s373 = scalar_lea.vmem %s4, %s372
      %p374 = scmp.lt.s32.totalorder %s18, 1
      %s375 = scalar_select %p374, %s18, 1
      %s376 = smul.addr %s375, 32
      %s377 = smul.addr %s376, 4
      %s378 = scalar_lea.vmem %s5, %s377
      %p379 = scmp.lt.s32.totalorder %s18, 1
      %s380 = scalar_select %p379, %s18, 1
      %s381 = scalar_lea.vmem %s6, %s380
      %p382 = scmp.lt.s32.totalorder %s18, 1
      %s383 = scalar_select %p382, %s18, 1
      %s384 = smul.addr %s383, 4
      %s385 = smul.addr %s384, 8
      %s386 = scalar_lea.vmem %s7, %s385
      %v388 = vld [vmem:[%s355] sm:$0xf]
      %v389 = vld [vmem:[%s355 + $0x4] sm:$0xf]
      %v390 = vld [vmem:[%s355 + $0x8] sm:$0xf]
      %v391 = vld [vmem:[%s355 + $0xc] sm:$0xf]
      %v392 = vld [vmem:[%s360] sm:$0xff]
      %v393 = vld [vmem:[%s360 + $0x8] sm:$0xff]
      %v394 = vld [vmem:[%s360 + $0x10] sm:$0xff]
      %v395 = vld [vmem:[%s360 + $0x18] sm:$0xff]
      %v396 = vld [vmem:[%s360 + $0x20] sm:$0xff]
      %v397 = vld [vmem:[%s360 + $0x28] sm:$0xff]
      %v398 = vld [vmem:[%s360 + $0x30] sm:$0xff]
      %v399 = vld [vmem:[%s360 + $0x38] sm:$0xff]
      %v400 = vld [vmem:[%s360 + $0x40] sm:$0xff]
      %v401 = vld [vmem:[%s360 + $0x48] sm:$0xff]
      %v402 = vld [vmem:[%s360 + $0x50] sm:$0xff]
      %v403 = vld [vmem:[%s360 + $0x58] sm:$0xff]
      %v404 = vld [vmem:[%s360 + $0x60] sm:$0xff]
      %v405 = vld [vmem:[%s360 + $0x68] sm:$0xff]
      %v406 = vld [vmem:[%s360 + $0x70] sm:$0xff]
      %v407 = vld [vmem:[%s360 + $0x78] sm:$0xff]
      %v408 = vld [vmem:[%s364] sm:$0x3]
      %v410 = vlaneseq
      %v411 = vshrl.u32 %v410, 7
      %v412 = vsub.s32 0, %v411
      %v413 = vrot.slane %v408, %v412
      %v414 = vlaneseq
      %v415 = vshrl.u32 %v414, 7
      %v416 = vsub.s32 1, %v415
      %v417 = vrot.slane %v408, %v416
      %v424 = vunpack.c.l.b16 %v388
      %v425 = vunpack.c.l.b16 %v389
      %v426 = vunpack.c.l.b16 %v390
      %v427 = vunpack.c.l.b16 %v391
      %v428 = vpack.c.b16 %v425, %v424
      %v429 = vpack.c.b16 %v427, %v426
      %v448 = vunpack.c.l.b16 %v392
      %v449 = vunpack.c.h.b16 %v392
      %v450 = vunpack.c.l.b16 %v393
      %v451 = vunpack.c.h.b16 %v393
      %v452 = vunpack.c.l.b16 %v394
      %v453 = vunpack.c.h.b16 %v394
      %v454 = vunpack.c.l.b16 %v395
      %v455 = vunpack.c.h.b16 %v395
      %v456 = vunpack.c.l.b16 %v396
      %v457 = vunpack.c.h.b16 %v396
      %v458 = vunpack.c.l.b16 %v397
      %v459 = vunpack.c.h.b16 %v397
      %v460 = vunpack.c.l.b16 %v398
      %v461 = vunpack.c.h.b16 %v398
      %v462 = vunpack.c.l.b16 %v399
      %v463 = vunpack.c.h.b16 %v399
      %v464 = vunpack.c.l.b16 %v400
      %v465 = vunpack.c.h.b16 %v400
      %v466 = vunpack.c.l.b16 %v401
      %v467 = vunpack.c.h.b16 %v401
      %v468 = vunpack.c.l.b16 %v402
      %v469 = vunpack.c.h.b16 %v402
      %v470 = vunpack.c.l.b16 %v403
      %v471 = vunpack.c.h.b16 %v403
      %v472 = vunpack.c.l.b16 %v404
      %v473 = vunpack.c.h.b16 %v404
      %v474 = vunpack.c.l.b16 %v405
      %v475 = vunpack.c.h.b16 %v405
      %v476 = vunpack.c.l.b16 %v406
      %v477 = vunpack.c.h.b16 %v406
      %v478 = vunpack.c.l.b16 %v407
      %v479 = vunpack.c.h.b16 %v407
      %v480 = vpack.c.b16 %v450, %v448
      %v481 = vpack.c.b16 %v451, %v449
      %v482 = vpack.c.b16 %v454, %v452
      %v483 = vpack.c.b16 %v455, %v453
      %v484 = vpack.c.b16 %v458, %v456
      %v485 = vpack.c.b16 %v459, %v457
      %v486 = vpack.c.b16 %v462, %v460
      %v487 = vpack.c.b16 %v463, %v461
      %v488 = vpack.c.b16 %v466, %v464
      %v489 = vpack.c.b16 %v467, %v465
      %v490 = vpack.c.b16 %v470, %v468
      %v491 = vpack.c.b16 %v471, %v469
      %v492 = vpack.c.b16 %v474, %v472
      %v493 = vpack.c.b16 %v475, %v473
      %v494 = vpack.c.b16 %v478, %v476
      %v495 = vpack.c.b16 %v479, %v477
      %512 = vmatprep.subr.bf16.mxu0 %v495
      %513 = vmatpush1.bf16.msra.mxu0 %v494
      %514 = vmatprep.subr.bf16.mxu0 %v493
      %515 = vmatpush1.bf16.msra.mxu0 %v492
      %516 = vmatprep.subr.bf16.mxu0 %v491
      %517 = vmatpush1.bf16.msra.mxu0 %v490
      %518 = vmatprep.subr.bf16.mxu0 %v489
      %519 = vmatpush1.bf16.msra.mxu0 %v488
      %520 = vmatprep.subr.bf16.mxu0 %v487
      %521 = vmatpush1.bf16.msra.mxu0 %v486
      %522 = vmatprep.subr.bf16.mxu0 %v485
      %523 = vmatpush1.bf16.msra.mxu0 %v484
      %524 = vmatprep.subr.bf16.mxu0 %v483
      %525 = vmatpush1.bf16.msra.mxu0 %v482
      %526 = vmatprep.subr.bf16.mxu0 %v481
      %527 = vmatpush1.bf16.msra.mxu0 %v480
      %528 = vmatprep.subr.bf16.mxu0 0
      %529 = vmatpush2.bf16.msra.mxu0 0
      %530 = vmatprep.subr.bf16.mxu0 0
      %531 = vmatpush2.bf16.msra.mxu0 0
      %532 = vmatprep.subr.bf16.mxu0 0
      %533 = vmatpush2.bf16.msra.mxu0 0
      %534 = vmatprep.subr.bf16.mxu0 0
      %535 = vmatpush2.bf16.msra.mxu0 0
      %536 = vmatprep.subr.bf16.mxu0 0
      %537 = vmatpush2.bf16.msra.mxu0 0
      %538 = vmatprep.subr.bf16.mxu0 0
      %539 = vmatpush2.bf16.msra.mxu0 0
      %540 = vmatprep.subr.bf16.mxu0 0
      %541 = vmatpush2.bf16.msra.mxu0 0
      %542 = vmatprep.subr.bf16.mxu0 0
      %543 = vmatpush2.bf16.msra.mxu0 0
      %544 = vmatprep.mubr.bf16.mxu0 0
      %545 = vmatmul.mubr.bf16.gmra.mxu0 %v428
      %v546 = vpop.f32.mrf.mxu0
      %v547 = vadd.f32 %v413, %v546
      %v548 = vpop.f32.mrf.mxu0
      %v549 = vadd.f32 %v417, %v548
      %v550 = vpop.f32.mrf.mxu0
      %v551 = vadd.f32 %v413, %v550
      %v552 = vpop.f32.mrf.mxu0
      %v553 = vadd.f32 %v417, %v552
      %554 = vmatprep.mubr.bf16.mxu0 0
      %555 = vmatmul.mubr.bf16.gmra.mxu0 %v429
      %v556 = vpop.f32.mrf.mxu0
      %v557 = vadd.f32 %v413, %v556
      %v558 = vpop.f32.mrf.mxu0
      %v559 = vadd.f32 %v417, %v558
      %v560 = vpop.f32.mrf.mxu0
      %v561 = vadd.f32 %v413, %v560
      %v562 = vpop.f32.mrf.mxu0
      %v563 = vadd.f32 %v417, %v562
      %564 = vdwg.mxu0
      %v565 = vpack.c.bf16 %v551, %v547
      %v566 = vpack.c.bf16 %v553, %v549
      %v567 = vpack.c.bf16 %v561, %v557
      %v568 = vpack.c.bf16 %v563, %v559
      %v569 = vld [vmem:[%s369] sm:$0xff]
      %v570 = vld [vmem:[%s369 + $0x8] sm:$0xff]
      %v571 = vld [vmem:[%s369 + $0x10] sm:$0xff]
      %v572 = vld [vmem:[%s369 + $0x18] sm:$0xff]
      %v573 = vld [vmem:[%s369 + $0x20] sm:$0xff]
      %v574 = vld [vmem:[%s369 + $0x28] sm:$0xff]
      %v575 = vld [vmem:[%s369 + $0x30] sm:$0xff]
      %v576 = vld [vmem:[%s369 + $0x38] sm:$0xff]
      %v577 = vld [vmem:[%s369 + $0x40] sm:$0xff]
      %v578 = vld [vmem:[%s369 + $0x48] sm:$0xff]
      %v579 = vld [vmem:[%s369 + $0x50] sm:$0xff]
      %v580 = vld [vmem:[%s369 + $0x58] sm:$0xff]
      %v581 = vld [vmem:[%s369 + $0x60] sm:$0xff]
      %v582 = vld [vmem:[%s369 + $0x68] sm:$0xff]
      %v583 = vld [vmem:[%s369 + $0x70] sm:$0xff]
      %v584 = vld [vmem:[%s369 + $0x78] sm:$0xff]
      %v585 = vld [vmem:[%s369 + $0x80] sm:$0xff]
      %v586 = vld [vmem:[%s369 + $0x88] sm:$0xff]
      %v587 = vld [vmem:[%s369 + $0x90] sm:$0xff]
      %v588 = vld [vmem:[%s369 + $0x98] sm:$0xff]
      %v589 = vld [vmem:[%s369 + $0xa0] sm:$0xff]
      %v590 = vld [vmem:[%s369 + $0xa8] sm:$0xff]
      %v591 = vld [vmem:[%s369 + $0xb0] sm:$0xff]
      %v592 = vld [vmem:[%s369 + $0xb8] sm:$0xff]
      %v593 = vld [vmem:[%s369 + $0xc0] sm:$0xff]
      %v594 = vld [vmem:[%s369 + $0xc8] sm:$0xff]
      %v595 = vld [vmem:[%s369 + $0xd0] sm:$0xff]
      %v596 = vld [vmem:[%s369 + $0xd8] sm:$0xff]
      %v597 = vld [vmem:[%s369 + $0xe0] sm:$0xff]
      %v598 = vld [vmem:[%s369 + $0xe8] sm:$0xff]
      %v599 = vld [vmem:[%s369 + $0xf0] sm:$0xff]
      %v600 = vld [vmem:[%s369 + $0xf8] sm:$0xff]
      %v601 = vld [vmem:[%s373] sm:$0x3]
      %v603 = vlaneseq
      %v604 = vshrl.u32 %v603, 7
      %v605 = vsub.s32 0, %v604
      %v606 = vrot.slane %v601, %v605
      %v607 = vlaneseq
      %v608 = vshrl.u32 %v607, 7
      %v609 = vsub.s32 1, %v608
      %v610 = vrot.slane %v601, %v609
      %v645 = vunpack.c.l.b16 %v569
      %v646 = vunpack.c.h.b16 %v569
      %v647 = vunpack.c.l.b16 %v570
      %v648 = vunpack.c.h.b16 %v570
      %v649 = vunpack.c.l.b16 %v571
      %v650 = vunpack.c.h.b16 %v571
      %v651 = vunpack.c.l.b16 %v572
      %v652 = vunpack.c.h.b16 %v572
      %v653 = vunpack.c.l.b16 %v573
      %v654 = vunpack.c.h.b16 %v573
      %v655 = vunpack.c.l.b16 %v574
      %v656 = vunpack.c.h.b16 %v574
      %v657 = vunpack.c.l.b16 %v575
      %v658 = vunpack.c.h.b16 %v575
      %v659 = vunpack.c.l.b16 %v576
      %v660 = vunpack.c.h.b16 %v576
      %v661 = vunpack.c.l.b16 %v577
      %v662 = vunpack.c.h.b16 %v577
      %v663 = vunpack.c.l.b16 %v578
      %v664 = vunpack.c.h.b16 %v578
      %v665 = vunpack.c.l.b16 %v579
      %v666 = vunpack.c.h.b16 %v579
      %v667 = vunpack.c.l.b16 %v580
      %v668 = vunpack.c.h.b16 %v580
      %v669 = vunpack.c.l.b16 %v581
      %v670 = vunpack.c.h.b16 %v581
      %v671 = vunpack.c.l.b16 %v582
      %v672 = vunpack.c.h.b16 %v582
      %v673 = vunpack.c.l.b16 %v583
      %v674 = vunpack.c.h.b16 %v583
      %v675 = vunpack.c.l.b16 %v584
      %v676 = vunpack.c.h.b16 %v584
      %v677 = vunpack.c.l.b16 %v585
      %v678 = vunpack.c.h.b16 %v585
      %v679 = vunpack.c.l.b16 %v586
      %v680 = vunpack.c.h.b16 %v586
      %v681 = vunpack.c.l.b16 %v587
      %v682 = vunpack.c.h.b16 %v587
      %v683 = vunpack.c.l.b16 %v588
      %v684 = vunpack.c.h.b16 %v588
      %v685 = vunpack.c.l.b16 %v589
      %v686 = vunpack.c.h.b16 %v589
      %v687 = vunpack.c.l.b16 %v590
      %v688 = vunpack.c.h.b16 %v590
      %v689 = vunpack.c.l.b16 %v591
      %v690 = vunpack.c.h.b16 %v591
      %v691 = vunpack.c.l.b16 %v592
      %v692 = vunpack.c.h.b16 %v592
      %v693 = vunpack.c.l.b16 %v593
      %v694 = vunpack.c.h.b16 %v593
      %v695 = vunpack.c.l.b16 %v594
      %v696 = vunpack.c.h.b16 %v594
      %v697 = vunpack.c.l.b16 %v595
      %v698 = vunpack.c.h.b16 %v595
      %v699 = vunpack.c.l.b16 %v596
      %v700 = vunpack.c.h.b16 %v596
      %v701 = vunpack.c.l.b16 %v597
      %v702 = vunpack.c.h.b16 %v597
      %v703 = vunpack.c.l.b16 %v598
      %v704 = vunpack.c.h.b16 %v598
      %v705 = vunpack.c.l.b16 %v599
      %v706 = vunpack.c.h.b16 %v599
      %v707 = vunpack.c.l.b16 %v600
      %v708 = vunpack.c.h.b16 %v600
      %v709 = vpack.c.b16 %v647, %v645
      %v710 = vpack.c.b16 %v648, %v646
      %v711 = vpack.c.b16 %v651, %v649
      %v712 = vpack.c.b16 %v652, %v650
      %v713 = vpack.c.b16 %v655, %v653
      %v714 = vpack.c.b16 %v656, %v654
      %v715 = vpack.c.b16 %v659, %v657
      %v716 = vpack.c.b16 %v660, %v658
      %v717 = vpack.c.b16 %v663, %v661
      %v718 = vpack.c.b16 %v664, %v662
      %v719 = vpack.c.b16 %v667, %v665
      %v720 = vpack.c.b16 %v668, %v666
      %v721 = vpack.c.b16 %v671, %v669
      %v722 = vpack.c.b16 %v672, %v670
      %v723 = vpack.c.b16 %v675, %v673
      %v724 = vpack.c.b16 %v676, %v674
      %v725 = vpack.c.b16 %v679, %v677
      %v726 = vpack.c.b16 %v680, %v678
      %v727 = vpack.c.b16 %v683, %v681
      %v728 = vpack.c.b16 %v684, %v682
      %v729 = vpack.c.b16 %v687, %v685
      %v730 = vpack.c.b16 %v688, %v686
      %v731 = vpack.c.b16 %v691, %v689
      %v732 = vpack.c.b16 %v692, %v690
      %v733 = vpack.c.b16 %v695, %v693
      %v734 = vpack.c.b16 %v696, %v694
      %v735 = vpack.c.b16 %v699, %v697
      %v736 = vpack.c.b16 %v700, %v698
      %v737 = vpack.c.b16 %v703, %v701
      %v738 = vpack.c.b16 %v704, %v702
      %v739 = vpack.c.b16 %v707, %v705
      %v740 = vpack.c.b16 %v708, %v706
      %773 = vmatprep.subr.bf16.mxu0 %v724
      %774 = vmatpush1.bf16.msra.mxu0 %v723
      %775 = vmatprep.subr.bf16.mxu0 %v722
      %776 = vmatpush1.bf16.msra.mxu0 %v721
      %777 = vmatprep.subr.bf16.mxu0 %v720
      %778 = vmatpush1.bf16.msra.mxu0 %v719
      %779 = vmatprep.subr.bf16.mxu0 %v718
      %780 = vmatpush1.bf16.msra.mxu0 %v717
      %781 = vmatprep.subr.bf16.mxu0 %v716
      %782 = vmatpush1.bf16.msra.mxu0 %v715
      %783 = vmatprep.subr.bf16.mxu0 %v714
      %784 = vmatpush1.bf16.msra.mxu0 %v713
      %785 = vmatprep.subr.bf16.mxu0 %v712
      %786 = vmatpush1.bf16.msra.mxu0 %v711
      %787 = vmatprep.subr.bf16.mxu0 %v710
      %788 = vmatpush1.bf16.msra.mxu0 %v709
      %789 = vmatprep.subr.bf16.mxu0 %v740
      %790 = vmatpush2.bf16.msra.mxu0 %v739
      %791 = vmatprep.subr.bf16.mxu0 %v738
      %792 = vmatpush2.bf16.msra.mxu0 %v737
      %793 = vmatprep.subr.bf16.mxu0 %v736
      %794 = vmatpush2.bf16.msra.mxu0 %v735
      %795 = vmatprep.subr.bf16.mxu0 %v734
      %796 = vmatpush2.bf16.msra.mxu0 %v733
      %797 = vmatprep.subr.bf16.mxu0 %v732
      %798 = vmatpush2.bf16.msra.mxu0 %v731
      %799 = vmatprep.subr.bf16.mxu0 %v730
      %800 = vmatpush2.bf16.msra.mxu0 %v729
      %801 = vmatprep.subr.bf16.mxu0 %v728
      %802 = vmatpush2.bf16.msra.mxu0 %v727
      %803 = vmatprep.subr.bf16.mxu0 %v726
      %804 = vmatpush2.bf16.msra.mxu0 %v725
      %805 = vmatprep.mubr.bf16.mxu0 %v566
      %806 = vmatmul.mubr.bf16.gmra.mxu0 %v565
      %v807 = vpop.f32.mrf.mxu0
      %v808 = vadd.f32 %v606, %v807
      %v809 = vpop.f32.mrf.mxu0
      %v810 = vadd.f32 %v610, %v809
      %v811 = vpop.f32.mrf.mxu0
      %v812 = vadd.f32 %v606, %v811
      %v813 = vpop.f32.mrf.mxu0
      %v814 = vadd.f32 %v610, %v813
      %815 = vmatprep.mubr.bf16.mxu0 %v568
      %816 = vmatmul.mubr.bf16.gmra.mxu0 %v567
      %v817 = vpop.f32.mrf.mxu0
      %v818 = vadd.f32 %v606, %v817
      %v819 = vpop.f32.mrf.mxu0
      %v820 = vadd.f32 %v610, %v819
      %v821 = vpop.f32.mrf.mxu0
      %v822 = vadd.f32 %v606, %v821
      %v823 = vpop.f32.mrf.mxu0
      %v824 = vadd.f32 %v610, %v823
      %825 = vdwg.mxu0
      %v826 = vpack.c.bf16 %v812, %v808
      %v827 = vpack.c.bf16 %v814, %v810
      %v828 = vpack.c.bf16 %v822, %v818
      %v829 = vpack.c.bf16 %v824, %v820
      %v830 = vld [vmem:[%s378] sm:$0xf]
      %v831 = vld [vmem:[%s378 + $0x4] sm:$0xf]
      %v832 = vld [vmem:[%s378 + $0x8] sm:$0xf]
      %v833 = vld [vmem:[%s378 + $0xc] sm:$0xf]
      %v834 = vld [vmem:[%s378 + $0x10] sm:$0xf]
      %v835 = vld [vmem:[%s378 + $0x14] sm:$0xf]
      %v836 = vld [vmem:[%s378 + $0x18] sm:$0xf]
      %v837 = vld [vmem:[%s378 + $0x1c] sm:$0xf]
      %v838 = vld [vmem:[%s378 + $0x20] sm:$0xf]
      %v839 = vld [vmem:[%s378 + $0x24] sm:$0xf]
      %v840 = vld [vmem:[%s378 + $0x28] sm:$0xf]
      %v841 = vld [vmem:[%s378 + $0x2c] sm:$0xf]
      %v842 = vld [vmem:[%s378 + $0x30] sm:$0xf]
      %v843 = vld [vmem:[%s378 + $0x34] sm:$0xf]
      %v844 = vld [vmem:[%s378 + $0x38] sm:$0xf]
      %v845 = vld [vmem:[%s378 + $0x3c] sm:$0xf]
      %v846 = vld [vmem:[%s378 + $0x40] sm:$0xf]
      %v847 = vld [vmem:[%s378 + $0x44] sm:$0xf]
      %v848 = vld [vmem:[%s378 + $0x48] sm:$0xf]
      %v849 = vld [vmem:[%s378 + $0x4c] sm:$0xf]
      %v850 = vld [vmem:[%s378 + $0x50] sm:$0xf]
      %v851 = vld [vmem:[%s378 + $0x54] sm:$0xf]
      %v852 = vld [vmem:[%s378 + $0x58] sm:$0xf]
      %v853 = vld [vmem:[%s378 + $0x5c] sm:$0xf]
      %v854 = vld [vmem:[%s378 + $0x60] sm:$0xf]
      %v855 = vld [vmem:[%s378 + $0x64] sm:$0xf]
      %v856 = vld [vmem:[%s378 + $0x68] sm:$0xf]
      %v857 = vld [vmem:[%s378 + $0x6c] sm:$0xf]
      %v858 = vld [vmem:[%s378 + $0x70] sm:$0xf]
      %v859 = vld [vmem:[%s378 + $0x74] sm:$0xf]
      %v860 = vld [vmem:[%s378 + $0x78] sm:$0xf]
      %v861 = vld [vmem:[%s378 + $0x7c] sm:$0xf]
      %v862 = vld [vmem:[%s381] sm:$0x1]
      %v864 = vlaneseq
      %v865 = vshrl.u32 %v864, 7
      %v866 = vsub.s32 0, %v865
      %v867 = vrot.slane %v862, %v866
      %v901 = vunpack.c.l.b16 %v830
      %v902 = vunpack.c.l.b16 %v831
      %v903 = vunpack.c.l.b16 %v832
      %v904 = vunpack.c.l.b16 %v833
      %v905 = vunpack.c.l.b16 %v834
      %v906 = vunpack.c.l.b16 %v835
      %v907 = vunpack.c.l.b16 %v836
      %v908 = vunpack.c.l.b16 %v837
      %v909 = vunpack.c.l.b16 %v838
      %v910 = vunpack.c.l.b16 %v839
      %v911 = vunpack.c.l.b16 %v840
      %v912 = vunpack.c.l.b16 %v841
      %v913 = vunpack.c.l.b16 %v842
      %v914 = vunpack.c.l.b16 %v843
      %v915 = vunpack.c.l.b16 %v844
      %v916 = vunpack.c.l.b16 %v845
      %v917 = vunpack.c.l.b16 %v846
      %v918 = vunpack.c.l.b16 %v847
      %v919 = vunpack.c.l.b16 %v848
      %v920 = vunpack.c.l.b16 %v849
      %v921 = vunpack.c.l.b16 %v850
      %v922 = vunpack.c.l.b16 %v851
      %v923 = vunpack.c.l.b16 %v852
      %v924 = vunpack.c.l.b16 %v853
      %v925 = vunpack.c.l.b16 %v854
      %v926 = vunpack.c.l.b16 %v855
      %v927 = vunpack.c.l.b16 %v856
      %v928 = vunpack.c.l.b16 %v857
      %v929 = vunpack.c.l.b16 %v858
      %v930 = vunpack.c.l.b16 %v859
      %v931 = vunpack.c.l.b16 %v860
      %v932 = vunpack.c.l.b16 %v861
      %v933 = vpack.c.b16 %v902, %v901
      %v934 = vpack.c.b16 %v904, %v903
      %v935 = vpack.c.b16 %v906, %v905
      %v936 = vpack.c.b16 %v908, %v907
      %v937 = vpack.c.b16 %v910, %v909
      %v938 = vpack.c.b16 %v912, %v911
      %v939 = vpack.c.b16 %v914, %v913
      %v940 = vpack.c.b16 %v916, %v915
      %v941 = vpack.c.b16 %v918, %v917
      %v942 = vpack.c.b16 %v920, %v919
      %v943 = vpack.c.b16 %v922, %v921
      %v944 = vpack.c.b16 %v924, %v923
      %v945 = vpack.c.b16 %v926, %v925
      %v946 = vpack.c.b16 %v928, %v927
      %v947 = vpack.c.b16 %v930, %v929
      %v948 = vpack.c.b16 %v932, %v931
      %965 = vmatprep.subr.bf16.mxu0 0
      %966 = vmatpush1.bf16.msra.mxu0 %v940
      %967 = vmatprep.subr.bf16.mxu0 0
      %968 = vmatpush1.bf16.msra.mxu0 %v939
      %969 = vmatprep.subr.bf16.mxu0 0
      %970 = vmatpush1.bf16.msra.mxu0 %v938
      %971 = vmatprep.subr.bf16.mxu0 0
      %972 = vmatpush1.bf16.msra.mxu0 %v937
      %973 = vmatprep.subr.bf16.mxu0 0
      %974 = vmatpush1.bf16.msra.mxu0 %v936
      %975 = vmatprep.subr.bf16.mxu0 0
      %976 = vmatpush1.bf16.msra.mxu0 %v935
      %977 = vmatprep.subr.bf16.mxu0 0
      %978 = vmatpush1.bf16.msra.mxu0 %v934
      %979 = vmatprep.subr.bf16.mxu0 0
      %980 = vmatpush1.bf16.msra.mxu0 %v933
      %981 = vmatprep.subr.bf16.mxu0 0
      %982 = vmatpush2.bf16.msra.mxu0 %v948
      %983 = vmatprep.subr.bf16.mxu0 0
      %984 = vmatpush2.bf16.msra.mxu0 %v947
      %985 = vmatprep.subr.bf16.mxu0 0
      %986 = vmatpush2.bf16.msra.mxu0 %v946
      %987 = vmatprep.subr.bf16.mxu0 0
      %988 = vmatpush2.bf16.msra.mxu0 %v945
      %989 = vmatprep.subr.bf16.mxu0 0
      %990 = vmatpush2.bf16.msra.mxu0 %v944
      %991 = vmatprep.subr.bf16.mxu0 0
      %992 = vmatpush2.bf16.msra.mxu0 %v943
      %993 = vmatprep.subr.bf16.mxu0 0
      %994 = vmatpush2.bf16.msra.mxu0 %v942
      %995 = vmatprep.subr.bf16.mxu0 0
      %996 = vmatpush2.bf16.msra.mxu0 %v941
      %997 = vmatprep.mubr.bf16.mxu0 %v827
      %998 = vmatmul.mubr.bf16.gmra.mxu0 %v826
      %v999 = vpop.f32.mrf.mxu0
      %v1000 = vadd.f32 %v867, %v999
      %v1001 = vpop.f32.mrf.mxu0
      %v1002 = vpop.f32.mrf.mxu0
      %v1003 = vadd.f32 %v867, %v1002
      %v1004 = vpop.f32.mrf.mxu0
      %1005 = vmatprep.mubr.bf16.mxu0 %v829
      %1006 = vmatmul.mubr.bf16.gmra.mxu0 %v828
      %v1007 = vpop.f32.mrf.mxu0
      %v1008 = vadd.f32 %v867, %v1007
      %v1009 = vpop.f32.mrf.mxu0
      %v1010 = vpop.f32.mrf.mxu0
      %v1011 = vadd.f32 %v867, %v1010
      %v1012 = vpop.f32.mrf.mxu0
      %1013 = vdwg.mxu0
      %1014 = vst [vmem:[%s386] sm:$0xff] %v1000
      %1015 = vst [vmem:[%s386 + $0x8] sm:$0xff] %v1003
      %1016 = vst [vmem:[%s386 + $0x10] sm:$0xff] %v1008
      %1017 = vst [vmem:[%s386 + $0x18] sm:$0xff] %v1011
      %p1018 = scmp.lt.s32.totalorder %s18, 1
      %s1019 = scalar_select %p1018, %s18, 1
      %s1020 = smul.addr %s1019, 4
      %s1021 = smul.addr %s1020, 8
      %s1022 = scalar_lea.vmem %s7, %s1021
      // Predicated region
      $region49: #{conv4d_forward.1} parent=47 // pred_check
        %p1023 = pneg %p218
      $region50: #{conv4d_forward.1} parent=47 // pred_check_branch
        %1025 = sbr.rel (%p1023) target = $region52
      $region51: #{conv4d_forward.1} parent=47 // pred_region
        _
      $region52: #{conv4d_forward.1} parent=47 // pred_fallthru
        _
    $region48: #{conv4d_forward.1} parent=5 // pred_fallthru
      _
    %p1026 = scmp.le.s32.totalorder 2, %s13
    // Predicated region
    $region53: #{conv4d_forward.1} parent=5 // pred_check
      %p1027 = pneg %p1026
    $region54: #{conv4d_forward.1} parent=5 // pred_check_branch
      %1029 = sbr.rel (%p1027) target = $region56
    $region55: #{conv4d_forward.1} parent=5 // pred_region
      %s1030 = ssub.s32 %s13, 2
      // Predicated region
      $region57: #{conv4d_forward.1} parent=55 // pred_check
        %p1031 = pneg %p224
      $region58: #{conv4d_forward.1} parent=55 // pred_check_branch
        %1033 = sbr.rel (%p1031) target = $region60
      $region59: #{conv4d_forward.1} parent=55 // pred_region
        %p1034 = scmp.lt.s32.totalorder %s19, 1
        %s1035 = scalar_select %p1034, %s19, 1
        %s1036 = smul.addr %s1035, 4
        %s1037 = smul.addr %s1036, 8
        %s1038 = scalar_lea.vmem %s7, %s1037
      $region60: #{conv4d_forward.1} parent=55 // pred_fallthru
        _
    $region56: #{conv4d_forward.1} parent=5 // pred_fallthru
      _
  $region6: #{conv4d_forward.1} parent=0 // loop_footer
    %s17 = sadd.s32 1, %s13
  $region7: #{conv4d_forward.1} parent=0 // loop_footer_branch
    %12 = sbr.rel target = $region3
  $region8: #{conv4d_forward.1} parent=0 // loop_exit
    _

</llo_original>
